<compile_context>
chip_gen: v7x
topology: tpu7x:2x2x1
jax: 0.10.0
libtpu: 0.0.40
codegen_flags: <defaults>
</compile_context>

<pallas_src>
import functools

import jax
import jax.numpy as jnp
from jax.experimental import pallas as pl
from jax.experimental.pallas import tpu as pltpu

_BN_EPS = 1e-5
_LANE = 128   # lane width: channels are padded to a multiple of this


# ------------------------------ Pallas kernel --------------------------------

def _resblock_kernel(*refs, stride, Ho, Wo, has_proj):
    """Fully fused residual block for one image (one grid step)."""
    if has_proj:
        (xph_ref, w1_ref, w2_ref, ws_ref,
         s1_ref, b1_ref, s2_ref, b2_ref, ss_ref, bs_ref,
         o_ref, y1pad_ref) = refs
        x_id_ref = None
    else:
        (xph_ref, x_id_ref, w1_ref, w2_ref,
         s1_ref, b1_ref, s2_ref, b2_ref,
         o_ref, y1pad_ref) = refs

    s = stride
    cin_p = xph_ref.shape[-1]     # lane-padded in channels
    cout_p = o_ref.shape[-1]      # lane-padded out channels
    M = Ho * Wo

    # ---- conv1: gather 9 shifted taps (contiguous slices thanks to the
    #      polyphase layout), fuse them along K and do ONE MXU matmul --------
    taps = []
    for kh in range(3):
        for kw in range(3):
            a = xph_ref[0, kh % s, kw % s,
                        kh // s:kh // s + Ho,
                        kw // s:kw // s + Wo, :]
            taps.append(a.reshape(M, cin_p))          # (M, cin_p) bf16
    a1 = jnp.concatenate(taps, axis=1)                # (M, 9*cin_p) bf16
    acc1 = jnp.dot(a1, w1_ref[...], preferred_element_type=jnp.float32)
    # BN1 (folded scale/bias) + ReLU -- single accumulator pass, stays in vregs
    y1 = jnp.maximum(acc1 * s1_ref[...] + b1_ref[...], 0.0)

    # ---- shortcut: 1x1(stride) conv + BN (reuses the centre tap slab), or
    #      the exact f32 identity input -------------------------------------
    if has_proj:
        sc = jnp.dot(taps[4], ws_ref[...], preferred_element_type=jnp.float32)
        sc = sc * ss_ref[...] + bs_ref[...]
    else:
        sc = x_id_ref[0].reshape(M, cout_p)           # already f32

    # ---- stage y1 (bf16) with a 1-px zero halo; only the halo strips are
    #      zeroed, the interior is fully overwritten every step --------------
    zrow = jnp.zeros((1, Wo + 2, cout_p), y1pad_ref.dtype)
    zcol = jnp.zeros((Ho, 1, cout_p), y1pad_ref.dtype)
    y1pad_ref[0:1, :, :] = zrow
    y1pad_ref[Ho + 1:Ho + 2, :, :] = zrow
    y1pad_ref[1:Ho + 1, 0:1, :] = zcol
    y1pad_ref[1:Ho + 1, Wo + 1:Wo + 2, :] = zcol
    y1pad_ref[1:Ho + 1, 1:Wo + 1, :] = (
        y1.reshape(Ho, Wo, cout_p).astype(y1pad_ref.dtype))

    # ---- conv2: 3x3 / stride 1 as one K-fused matmul + BN2 ------------------
    taps2 = [y1pad_ref[kh:kh + Ho, kw:kw + Wo, :].reshape(M, cout_p)
             for kh in range(3) for kw in range(3)]
    a2 = jnp.concatenate(taps2, axis=1)               # (M, 9*cout_p) bf16
    acc2 = jnp.dot(a2, w2_ref[...], preferred_element_type=jnp.float32)
    left = acc2 * s2_ref[...] + b2_ref[...]

    # ---- residual add + final ReLU; lane-dense unmasked store --------------
    out = jnp.maximum(left + sc, 0.0)
    o_ref[0] = out.reshape(Ho, Wo, cout_p).astype(o_ref.dtype)


# ------------------------------- JAX wrapper ----------------------------------

def _round_up(v, m):
    return -(-v // m) * m


def _bn_fold_pad(bn, cout_p):
    s = bn["gamma"] / jnp.sqrt(bn["var"] + _BN_EPS)
    b = bn["beta"] - bn["mean"] * s
    pad = cout_p - s.shape[0]
    s = jnp.pad(s, (0, pad)).reshape(1, cout_p).astype(jnp.float32)
    b = jnp.pad(b, (0, pad)).reshape(1, cout_p).astype(jnp.float32)
    return s, b


def _fuse_conv3x3_w(w, cin_p, cout_p):
    """PyTorch Conv2d weight (Cout, Cin, 3, 3) -> K-fused (9*cin_p, cout_p) bf16.

    Row ordering is (kh, kw, cin) to match the in-kernel tap concatenation.
    """
    cout, cin = w.shape[0], w.shape[1]
    w = jnp.transpose(w, (2, 3, 1, 0))                         # (3, 3, cin, cout)
    w = jnp.pad(w, ((0, 0), (0, 0), (0, cin_p - cin), (0, cout_p - cout)))
    return w.reshape(9 * cin_p, cout_p).astype(jnp.bfloat16)


def residual_block_forward(params, x_nchw, out_dtype=jnp.bfloat16):
    stride = params["stride"]
    cin, cout = params["inchannel"], params["outchannel"]
    N, _, H, W = x_nchw.shape
    s = stride
    Ho = (H + 2 - 3) // s + 1
    Wo = (W + 2 - 3) // s + 1
    has_proj = (s != 1) or (cin != cout)

    # Lane-dense channels: pad cin/cout to a multiple of 128.
    cin_p = _round_up(cin, _LANE)
    cout_p = _round_up(cout, _LANE)

    # NCHW -> NHWC, channel pad.
    x = jnp.transpose(x_nchw, (0, 2, 3, 1))
    x_cp = jnp.pad(x, ((0, 0), (0, 0), (0, 0), (0, cin_p - cin)))

    # bf16 matmul operands.  Spatial pad (conv pad=1) + extra bottom/right zeros
    # so (H+2, W+2) divide the stride, then a one-time polyphase split:
    #   xph[n, ph, pw, qh, qw, c] = xpad[n, qh*s + ph, qw*s + pw, c]
    # so every strided conv tap is a contiguous static slice in the kernel.
    # (For s == 1 this is a no-op reshape.)
    xb = x_cp.astype(jnp.bfloat16)
    pad_h = (-(H + 2)) % s
    pad_w = (-(W + 2)) % s
    xp = jnp.pad(xb, ((0, 0), (1, 1 + pad_h), (1, 1 + pad_w), (0, 0)))
    Hq = (H + 2 + pad_h) // s
    Wq = (W + 2 + pad_w) // s
    xph = xp.reshape(N, Hq, s, Wq, s, cin_p).transpose(0, 2, 4, 1, 3, 5)

    w1 = _fuse_conv3x3_w(params["w1"], cin_p, cout_p)     # (9*cin_p,  cout_p)
    w2 = _fuse_conv3x3_w(params["w2"], cout_p, cout_p)    # (9*cout_p, cout_p)
    s1, b1 = _bn_fold_pad(params["bn1"], cout_p)
    s2, b2 = _bn_fold_pad(params["bn2"], cout_p)

    vec_spec = pl.BlockSpec((1, cout_p), lambda n: (0, 0))
    xph_spec = pl.BlockSpec((1, s, s, Hq, Wq, cin_p), lambda n: (n, 0, 0, 0, 0, 0))
    w1_spec = pl.BlockSpec((9 * cin_p, cout_p), lambda n: (0, 0))
    w2_spec = pl.BlockSpec((9 * cout_p, cout_p), lambda n: (0, 0))

    if has_proj:
        ws = jnp.transpose(params["ws"], (2, 3, 1, 0)).reshape(cin, cout)
        ws = jnp.pad(ws, ((0, cin_p - cin), (0, cout_p - cout))).astype(jnp.bfloat16)
        ss, bs = _bn_fold_pad(params["bns"], cout_p)
        args = [xph, w1, w2, ws, s1, b1, s2, b2, ss, bs]
        in_specs = [xph_spec, w1_spec, w2_spec,
                    pl.BlockSpec((cin_p, cout_p), lambda n: (0, 0)),
                    vec_spec, vec_spec, vec_spec, vec_spec, vec_spec, vec_spec]
    else:
        # Exact f32 copy of the input for the identity residual add.
        x_id = x_cp.astype(jnp.float32)
        args = [xph, x_id, w1, w2, s1, b1, s2, b2]
        in_specs = [xph_spec,
                    pl.BlockSpec((1, H, W, cout_p), lambda n: (n, 0, 0, 0)),
                    w1_spec, w2_spec,
                    vec_spec, vec_spec, vec_spec, vec_spec]

    # TODO(synk): grid=(N,) gives few pipeline steps for tiny batches; add a spatial
    # row-tile "parallel" axis (with halo recompute) for deeper pipelining / megacore.
    kernel = functools.partial(_resblock_kernel, stride=s, Ho=Ho, Wo=Wo,
                               has_proj=has_proj)
    out_p = pl.pallas_call(
        kernel,
        out_shape=jax.ShapeDtypeStruct((N, Ho, Wo, cout_p), out_dtype),
        grid=(N,),
        in_specs=in_specs,
        out_specs=pl.BlockSpec((1, Ho, Wo, cout_p), lambda n: (n, 0, 0, 0)),
        scratch_shapes=[pltpu.VMEM((Ho + 2, Wo + 2, cout_p), jnp.bfloat16)],
        compiler_params=pltpu.CompilerParams(
            dimension_semantics=("parallel",),
            # > default 32 MiB (v5e/v6e benefit from larger tiles); still inside
            # v7x's 64 MiB per-TC VMEM with headroom.
            vmem_limit_bytes=48 * 1024 * 1024),
    )(*args)

    out = out_p[..., :cout]                       # drop lane padding
    return jnp.transpose(out, (0, 3, 1, 2))       # NHWC -> NCHW


# ------------------------------ params helpers --------------------------------

def init_residual_block_params(key, inchannel, outchannel, stride):
    ks = jax.random.split(key, 6)

    def bn_params(k, c):
        k1, k2, k3, k4 = jax.random.split(k, 4)
        return dict(
            gamma=jax.random.uniform(k1, (c,), jnp.float32, 0.5, 1.5),
            beta=jax.random.normal(k2, (c,), jnp.float32) * 0.1,
            mean=jax.random.normal(k3, (c,), jnp.float32) * 0.1,
            var=jax.random.uniform(k4, (c,), jnp.float32, 0.5, 1.5),
        )

    p = dict(stride=stride, inchannel=inchannel, outchannel=outchannel)
    p["w1"] = jax.random.normal(ks[0], (outchannel, inchannel, 3, 3), jnp.float32) * 0.1
    p["bn1"] = bn_params(ks[1], outchannel)
    p["w2"] = jax.random.normal(ks[2], (outchannel, outchannel, 3, 3), jnp.float32) * 0.1
    p["bn2"] = bn_params(ks[3], outchannel)
    if stride != 1 or inchannel != outchannel:
        p["ws"] = jax.random.normal(ks[4], (outchannel, inchannel, 1, 1), jnp.float32) * 0.1
        p["bns"] = bn_params(ks[5], outchannel)
    return p


# ---------------------------- pure-JAX reference ------------------------------

def _ref_conv(x, w, stride, padding):
    return jax.lax.conv_general_dilated(
        x, w, (stride, stride), ((padding, padding), (padding, padding)),
        dimension_numbers=("NCHW", "OIHW", "NCHW"))


def _ref_bn(x, bn):
    s = bn["gamma"] / jnp.sqrt(bn["var"] + _BN_EPS)
    b = bn["beta"] - bn["mean"] * s
    return x * s[None, :, None, None] + b[None, :, None, None]


def residual_block_reference(params, x):
    stride = params["stride"]
    out = _ref_conv(x, params["w1"], stride, 1)
    out = jnp.maximum(_ref_bn(out, params["bn1"]), 0.0)
    out = _ref_conv(out, params["w2"], 1, 1)
    out = _ref_bn(out, params["bn2"])
    if stride != 1 or params["inchannel"] != params["outchannel"]:
        sc = _ref_bn(_ref_conv(x, params["ws"], stride, 0), params["bns"])
    else:
        sc = x
    return jnp.maximum(out + sc, 0.0)


# ----------------------------------- main --------------------------------------

if __name__ == "__main__":
    key = jax.random.PRNGKey(0)
    kx, k1, k2 = jax.random.split(key, 3)
    x = jax.random.normal(kx, (2, 4, 16, 16), jnp.float32)   # NCHW

    # Tolerances are loosened vs. the f32 reference because matmul operands and
    # the kernel output are bf16 (accumulation stays f32); errors compound
    # across the chained blocks.
    ATOL = RTOL = 1e-1

    # Block 1: projection shortcut path (stride=2, 4 -> 8 channels)
    p1 = init_residual_block_params(k1, 4, 8, stride=2)
    y1 = residual_block_forward(p1, x)
    jax.block_until_ready(y1)
    r1 = residual_block_reference(p1, x)
    assert y1.shape == (2, 8, 8, 8)
    assert jnp.allclose(y1, r1, atol=ATOL, rtol=RTOL), float(jnp.max(jnp.abs(y1 - r1)))

    # Block 2: identity shortcut path (stride=1, 8 -> 8 channels)
    p2 = init_residual_block_params(k2, 8, 8, stride=1)
    y2 = residual_block_forward(p2, y1)
    jax.block_until_ready(y2)
    r2 = residual_block_reference(p2, r1)
    assert y2.shape == (2, 8, 8, 8)
    assert jnp.allclose(y2, r2, atol=ATOL, rtol=RTOL), float(jnp.max(jnp.abs(y2 - r2)))

    print("KERNEL_OK")
</pallas_src>

<mosaic_0001>
module attributes {stable_mosaic.version = 11 : i64} {
  func.func @_resblock_kernel(%arg0: i32, %arg1: memref<1x2x2x9x9x128xbf16, #tpu.memory_space<vmem>>, %arg2: memref<1152x128xbf16, #tpu.memory_space<vmem>>, %arg3: memref<1152x128xbf16, #tpu.memory_space<vmem>>, %arg4: memref<128x128xbf16, #tpu.memory_space<vmem>>, %arg5: memref<1x128xf32, #tpu.memory_space<vmem>>, %arg6: memref<1x128xf32, #tpu.memory_space<vmem>>, %arg7: memref<1x128xf32, #tpu.memory_space<vmem>>, %arg8: memref<1x128xf32, #tpu.memory_space<vmem>>, %arg9: memref<1x128xf32, #tpu.memory_space<vmem>>, %arg10: memref<1x128xf32, #tpu.memory_space<vmem>>, %arg11: memref<1x8x8x128xbf16, #tpu.memory_space<vmem>>, %arg12: memref<10x10x128xbf16, #tpu.memory_space<vmem>>) attributes {dimension_semantics = [#tpu.dimension_semantics<parallel>], iteration_bounds = array<i64: 2>, scalar_prefetch = 0 : i64, scratch_operands = 1 : i64, tpu.core_type = #tpu.core_type<tc>, window_params = [{transform_indices = @transform_0, window_bounds = array<i64: 1, 2, 2, 9, 9, 128>}, {pipeline_mode = #tpu.pipeline_mode<synchronous>, transform_indices = @transform_1, window_bounds = array<i64: 1152, 128>}, {pipeline_mode = #tpu.pipeline_mode<synchronous>, transform_indices = @transform_2, window_bounds = array<i64: 1152, 128>}, {pipeline_mode = #tpu.pipeline_mode<synchronous>, transform_indices = @transform_3, window_bounds = array<i64: 128, 128>}, {pipeline_mode = #tpu.pipeline_mode<synchronous>, transform_indices = @transform_4, window_bounds = array<i64: 1, 128>}, {pipeline_mode = #tpu.pipeline_mode<synchronous>, transform_indices = @transform_5, window_bounds = array<i64: 1, 128>}, {pipeline_mode = #tpu.pipeline_mode<synchronous>, transform_indices = @transform_6, window_bounds = array<i64: 1, 128>}, {pipeline_mode = #tpu.pipeline_mode<synchronous>, transform_indices = @transform_7, window_bounds = array<i64: 1, 128>}, {pipeline_mode = #tpu.pipeline_mode<synchronous>, transform_indices = @transform_8, window_bounds = array<i64: 1, 128>}, {pipeline_mode = #tpu.pipeline_mode<synchronous>, transform_indices = @transform_9, window_bounds = array<i64: 1, 128>}, {transform_indices = @transform_10, window_bounds = array<i64: 1, 8, 8, 128>}]} {
    %c0 = arith.constant 0 : index
    %c0_0 = arith.constant 0 : index
    %c0_1 = arith.constant 0 : index
    %c0_2 = arith.constant 0 : index
    %c0_3 = arith.constant 0 : index
    %c0_4 = arith.constant 0 : index
    %0 = vector.load %arg1[%c0, %c0_0, %c0_1, %c0_2, %c0_3, %c0_4] : memref<1x2x2x9x9x128xbf16, #tpu.memory_space<vmem>>, vector<1x1x1x8x8x128xbf16>
    %1 = vector.shape_cast %0 : vector<1x1x1x8x8x128xbf16> to vector<8x8x128xbf16>
    %2 = vector.shape_cast %1 : vector<8x8x128xbf16> to vector<64x128xbf16>
    %c0_5 = arith.constant 0 : index
    %c0_6 = arith.constant 0 : index
    %c1 = arith.constant 1 : index
    %c0_7 = arith.constant 0 : index
    %c0_8 = arith.constant 0 : index
    %c0_9 = arith.constant 0 : index
    %3 = vector.load %arg1[%c0_5, %c0_6, %c1, %c0_7, %c0_8, %c0_9] : memref<1x2x2x9x9x128xbf16, #tpu.memory_space<vmem>>, vector<1x1x1x8x8x128xbf16>
    %4 = vector.shape_cast %3 : vector<1x1x1x8x8x128xbf16> to vector<8x8x128xbf16>
    %5 = vector.shape_cast %4 : vector<8x8x128xbf16> to vector<64x128xbf16>
    %c0_10 = arith.constant 0 : index
    %c0_11 = arith.constant 0 : index
    %c0_12 = arith.constant 0 : index
    %c0_13 = arith.constant 0 : index
    %c1_14 = arith.constant 1 : index
    %c0_15 = arith.constant 0 : index
    %6 = vector.load %arg1[%c0_10, %c0_11, %c0_12, %c0_13, %c1_14, %c0_15] : memref<1x2x2x9x9x128xbf16, #tpu.memory_space<vmem>>, vector<1x1x1x8x8x128xbf16>
    %7 = vector.shape_cast %6 : vector<1x1x1x8x8x128xbf16> to vector<8x8x128xbf16>
    %8 = vector.shape_cast %7 : vector<8x8x128xbf16> to vector<64x128xbf16>
    %c0_16 = arith.constant 0 : index
    %c1_17 = arith.constant 1 : index
    %c0_18 = arith.constant 0 : index
    %c0_19 = arith.constant 0 : index
    %c0_20 = arith.constant 0 : index
    %c0_21 = arith.constant 0 : index
    %9 = vector.load %arg1[%c0_16, %c1_17, %c0_18, %c0_19, %c0_20, %c0_21] : memref<1x2x2x9x9x128xbf16, #tpu.memory_space<vmem>>, vector<1x1x1x8x8x128xbf16>
    %10 = vector.shape_cast %9 : vector<1x1x1x8x8x128xbf16> to vector<8x8x128xbf16>
    %11 = vector.shape_cast %10 : vector<8x8x128xbf16> to vector<64x128xbf16>
    %c0_22 = arith.constant 0 : index
    %c1_23 = arith.constant 1 : index
    %c1_24 = arith.constant 1 : index
    %c0_25 = arith.constant 0 : index
    %c0_26 = arith.constant 0 : index
    %c0_27 = arith.constant 0 : index
    %12 = vector.load %arg1[%c0_22, %c1_23, %c1_24, %c0_25, %c0_26, %c0_27] : memref<1x2x2x9x9x128xbf16, #tpu.memory_space<vmem>>, vector<1x1x1x8x8x128xbf16>
    %13 = vector.shape_cast %12 : vector<1x1x1x8x8x128xbf16> to vector<8x8x128xbf16>
    %14 = vector.shape_cast %13 : vector<8x8x128xbf16> to vector<64x128xbf16>
    %c0_28 = arith.constant 0 : index
    %c1_29 = arith.constant 1 : index
    %c0_30 = arith.constant 0 : index
    %c0_31 = arith.constant 0 : index
    %c1_32 = arith.constant 1 : index
    %c0_33 = arith.constant 0 : index
    %15 = vector.load %arg1[%c0_28, %c1_29, %c0_30, %c0_31, %c1_32, %c0_33] : memref<1x2x2x9x9x128xbf16, #tpu.memory_space<vmem>>, vector<1x1x1x8x8x128xbf16>
    %16 = vector.shape_cast %15 : vector<1x1x1x8x8x128xbf16> to vector<8x8x128xbf16>
    %17 = vector.shape_cast %16 : vector<8x8x128xbf16> to vector<64x128xbf16>
    %c0_34 = arith.constant 0 : index
    %c0_35 = arith.constant 0 : index
    %c0_36 = arith.constant 0 : index
    %c1_37 = arith.constant 1 : index
    %c0_38 = arith.constant 0 : index
    %c0_39 = arith.constant 0 : index
    %18 = vector.load %arg1[%c0_34, %c0_35, %c0_36, %c1_37, %c0_38, %c0_39] : memref<1x2x2x9x9x128xbf16, #tpu.memory_space<vmem>>, vector<1x1x1x8x8x128xbf16>
    %19 = vector.shape_cast %18 : vector<1x1x1x8x8x128xbf16> to vector<8x8x128xbf16>
    %20 = vector.shape_cast %19 : vector<8x8x128xbf16> to vector<64x128xbf16>
    %c0_40 = arith.constant 0 : index
    %c0_41 = arith.constant 0 : index
    %c1_42 = arith.constant 1 : index
    %c1_43 = arith.constant 1 : index
    %c0_44 = arith.constant 0 : index
    %c0_45 = arith.constant 0 : index
    %21 = vector.load %arg1[%c0_40, %c0_41, %c1_42, %c1_43, %c0_44, %c0_45] : memref<1x2x2x9x9x128xbf16, #tpu.memory_space<vmem>>, vector<1x1x1x8x8x128xbf16>
    %22 = vector.shape_cast %21 : vector<1x1x1x8x8x128xbf16> to vector<8x8x128xbf16>
    %23 = vector.shape_cast %22 : vector<8x8x128xbf16> to vector<64x128xbf16>
    %c0_46 = arith.constant 0 : index
    %c0_47 = arith.constant 0 : index
    %c0_48 = arith.constant 0 : index
    %c1_49 = arith.constant 1 : index
    %c1_50 = arith.constant 1 : index
    %c0_51 = arith.constant 0 : index
    %24 = vector.load %arg1[%c0_46, %c0_47, %c0_48, %c1_49, %c1_50, %c0_51] : memref<1x2x2x9x9x128xbf16, #tpu.memory_space<vmem>>, vector<1x1x1x8x8x128xbf16>
    %25 = vector.shape_cast %24 : vector<1x1x1x8x8x128xbf16> to vector<8x8x128xbf16>
    %26 = vector.shape_cast %25 : vector<8x8x128xbf16> to vector<64x128xbf16>
    %27 = tpu.concatenate %2, %5, %8, %11, %14, %17, %20, %23, %26 in 1 : vector<64x128xbf16>, vector<64x128xbf16>, vector<64x128xbf16>, vector<64x128xbf16>, vector<64x128xbf16>, vector<64x128xbf16>, vector<64x128xbf16>, vector<64x128xbf16>, vector<64x128xbf16> -> vector<64x1152xbf16>
    %c0_52 = arith.constant 0 : index
    %c0_53 = arith.constant 0 : index
    %28 = vector.load %arg2[%c0_52, %c0_53] : memref<1152x128xbf16, #tpu.memory_space<vmem>>, vector<1152x128xbf16>
    %cst = arith.constant dense<0.000000e+00> : vector<64x128xf32>
    %29 = tpu.matmul %27, %28, %cst {dimension_numbers = #tpu.dot_dimension_numbers<[1], [0], [0], [1], [0, 0, 1, 1], [], []>} : vector<64x1152xbf16>, vector<1152x128xbf16>, vector<64x128xf32> -> vector<64x128xf32>
    %c0_54 = arith.constant 0 : index
    %c0_55 = arith.constant 0 : index
    %30 = vector.load %arg5[%c0_54, %c0_55] : memref<1x128xf32, #tpu.memory_space<vmem>>, vector<1x128xf32>
    %31 = vector.broadcast %30 : vector<1x128xf32> to vector<64x128xf32>
    %32 = arith.mulf %29, %31 : vector<64x128xf32>
    %c0_56 = arith.constant 0 : index
    %c0_57 = arith.constant 0 : index
    %33 = vector.load %arg6[%c0_56, %c0_57] : memref<1x128xf32, #tpu.memory_space<vmem>>, vector<1x128xf32>
    %34 = vector.broadcast %33 : vector<1x128xf32> to vector<64x128xf32>
    %35 = arith.addf %32, %34 : vector<64x128xf32>
    %cst_58 = arith.constant 0.000000e+00 : f32
    %36 = vector.broadcast %cst_58 : f32 to vector<64x128xf32>
    %37 = arith.maximumf %35, %36 : vector<64x128xf32>
    %c0_59 = arith.constant 0 : index
    %c0_60 = arith.constant 0 : index
    %38 = vector.load %arg4[%c0_59, %c0_60] : memref<128x128xbf16, #tpu.memory_space<vmem>>, vector<128x128xbf16>
    %cst_61 = arith.constant dense<0.000000e+00> : vector<64x128xf32>
    %39 = tpu.matmul %14, %38, %cst_61 {dimension_numbers = #tpu.dot_dimension_numbers<[1], [0], [0], [1], [0, 0, 1, 1], [], []>} : vector<64x128xbf16>, vector<128x128xbf16>, vector<64x128xf32> -> vector<64x128xf32>
    %c0_62 = arith.constant 0 : index
    %c0_63 = arith.constant 0 : index
    %40 = vector.load %arg9[%c0_62, %c0_63] : memref<1x128xf32, #tpu.memory_space<vmem>>, vector<1x128xf32>
    %41 = vector.broadcast %40 : vector<1x128xf32> to vector<64x128xf32>
    %42 = arith.mulf %39, %41 : vector<64x128xf32>
    %c0_64 = arith.constant 0 : index
    %c0_65 = arith.constant 0 : index
    %43 = vector.load %arg10[%c0_64, %c0_65] : memref<1x128xf32, #tpu.memory_space<vmem>>, vector<1x128xf32>
    %44 = vector.broadcast %43 : vector<1x128xf32> to vector<64x128xf32>
    %45 = arith.addf %42, %44 : vector<64x128xf32>
    %cst_66 = arith.constant 0.000000e+00 : bf16
    %46 = vector.broadcast %cst_66 : bf16 to vector<1x10x128xbf16>
    %cst_67 = arith.constant 0.000000e+00 : bf16
    %47 = vector.broadcast %cst_67 : bf16 to vector<8x1x128xbf16>
    %c0_68 = arith.constant 0 : index
    %c0_69 = arith.constant 0 : index
    %c0_70 = arith.constant 0 : index
    %48 = vector.load %arg12[%c0_68, %c0_69, %c0_70] : memref<10x10x128xbf16, #tpu.memory_space<vmem>>, vector<1x10x128xbf16>
    tpu.vector_store %arg12[%c0_68, %c0_69, %c0_70], %46 {strides = array<i32>} : memref<10x10x128xbf16, #tpu.memory_space<vmem>>, vector<1x10x128xbf16>,
    %c9 = arith.constant 9 : index
    %c0_71 = arith.constant 0 : index
    %c0_72 = arith.constant 0 : index
    %49 = vector.load %arg12[%c9, %c0_71, %c0_72] : memref<10x10x128xbf16, #tpu.memory_space<vmem>>, vector<1x10x128xbf16>
    tpu.vector_store %arg12[%c9, %c0_71, %c0_72], %46 {strides = array<i32>} : memref<10x10x128xbf16, #tpu.memory_space<vmem>>, vector<1x10x128xbf16>,
    %c1_73 = arith.constant 1 : index
    %c0_74 = arith.constant 0 : index
    %c0_75 = arith.constant 0 : index
    %50 = vector.load %arg12[%c1_73, %c0_74, %c0_75] : memref<10x10x128xbf16, #tpu.memory_space<vmem>>, vector<8x1x128xbf16>
    tpu.vector_store %arg12[%c1_73, %c0_74, %c0_75], %47 {strides = array<i32>} : memref<10x10x128xbf16, #tpu.memory_space<vmem>>, vector<8x1x128xbf16>,
    %c1_76 = arith.constant 1 : index
    %c9_77 = arith.constant 9 : index
    %c0_78 = arith.constant 0 : index
    %51 = vector.load %arg12[%c1_76, %c9_77, %c0_78] : memref<10x10x128xbf16, #tpu.memory_space<vmem>>, vector<8x1x128xbf16>
    tpu.vector_store %arg12[%c1_76, %c9_77, %c0_78], %47 {strides = array<i32>} : memref<10x10x128xbf16, #tpu.memory_space<vmem>>, vector<8x1x128xbf16>,
    %52 = vector.shape_cast %37 : vector<64x128xf32> to vector<8x8x128xf32>
    %53 = arith.truncf %52 : vector<8x8x128xf32> to vector<8x8x128xbf16>
    %c1_79 = arith.constant 1 : index
    %c1_80 = arith.constant 1 : index
    %c0_81 = arith.constant 0 : index
    %54 = vector.load %arg12[%c1_79, %c1_80, %c0_81] : memref<10x10x128xbf16, #tpu.memory_space<vmem>>, vector<8x8x128xbf16>
    tpu.vector_store %arg12[%c1_79, %c1_80, %c0_81], %53 {strides = array<i32>} : memref<10x10x128xbf16, #tpu.memory_space<vmem>>, vector<8x8x128xbf16>,
    %c0_82 = arith.constant 0 : index
    %c0_83 = arith.constant 0 : index
    %c0_84 = arith.constant 0 : index
    %55 = vector.load %arg12[%c0_82, %c0_83, %c0_84] : memref<10x10x128xbf16, #tpu.memory_space<vmem>>, vector<8x8x128xbf16>
    %56 = vector.shape_cast %55 : vector<8x8x128xbf16> to vector<64x128xbf16>
    %c0_85 = arith.constant 0 : index
    %c1_86 = arith.constant 1 : index
    %c0_87 = arith.constant 0 : index
    %57 = vector.load %arg12[%c0_85, %c1_86, %c0_87] : memref<10x10x128xbf16, #tpu.memory_space<vmem>>, vector<8x8x128xbf16>
    %58 = vector.shape_cast %57 : vector<8x8x128xbf16> to vector<64x128xbf16>
    %c0_88 = arith.constant 0 : index
    %c2 = arith.constant 2 : index
    %c0_89 = arith.constant 0 : index
    %59 = vector.load %arg12[%c0_88, %c2, %c0_89] : memref<10x10x128xbf16, #tpu.memory_space<vmem>>, vector<8x8x128xbf16>
    %60 = vector.shape_cast %59 : vector<8x8x128xbf16> to vector<64x128xbf16>
    %c1_90 = arith.constant 1 : index
    %c0_91 = arith.constant 0 : index
    %c0_92 = arith.constant 0 : index
    %61 = vector.load %arg12[%c1_90, %c0_91, %c0_92] : memref<10x10x128xbf16, #tpu.memory_space<vmem>>, vector<8x8x128xbf16>
    %62 = vector.shape_cast %61 : vector<8x8x128xbf16> to vector<64x128xbf16>
    %c1_93 = arith.constant 1 : index
    %c1_94 = arith.constant 1 : index
    %c0_95 = arith.constant 0 : index
    %63 = vector.load %arg12[%c1_93, %c1_94, %c0_95] : memref<10x10x128xbf16, #tpu.memory_space<vmem>>, vector<8x8x128xbf16>
    %64 = vector.shape_cast %63 : vector<8x8x128xbf16> to vector<64x128xbf16>
    %c1_96 = arith.constant 1 : index
    %c2_97 = arith.constant 2 : index
    %c0_98 = arith.constant 0 : index
    %65 = vector.load %arg12[%c1_96, %c2_97, %c0_98] : memref<10x10x128xbf16, #tpu.memory_space<vmem>>, vector<8x8x128xbf16>
    %66 = vector.shape_cast %65 : vector<8x8x128xbf16> to vector<64x128xbf16>
    %c2_99 = arith.constant 2 : index
    %c0_100 = arith.constant 0 : index
    %c0_101 = arith.constant 0 : index
    %67 = vector.load %arg12[%c2_99, %c0_100, %c0_101] : memref<10x10x128xbf16, #tpu.memory_space<vmem>>, vector<8x8x128xbf16>
    %68 = vector.shape_cast %67 : vector<8x8x128xbf16> to vector<64x128xbf16>
    %c2_102 = arith.constant 2 : index
    %c1_103 = arith.constant 1 : index
    %c0_104 = arith.constant 0 : index
    %69 = vector.load %arg12[%c2_102, %c1_103, %c0_104] : memref<10x10x128xbf16, #tpu.memory_space<vmem>>, vector<8x8x128xbf16>
    %70 = vector.shape_cast %69 : vector<8x8x128xbf16> to vector<64x128xbf16>
    %c2_105 = arith.constant 2 : index
    %c2_106 = arith.constant 2 : index
    %c0_107 = arith.constant 0 : index
    %71 = vector.load %arg12[%c2_105, %c2_106, %c0_107] : memref<10x10x128xbf16, #tpu.memory_space<vmem>>, vector<8x8x128xbf16>
    %72 = vector.shape_cast %71 : vector<8x8x128xbf16> to vector<64x128xbf16>
    %73 = tpu.concatenate %56, %58, %60, %62, %64, %66, %68, %70, %72 in 1 : vector<64x128xbf16>, vector<64x128xbf16>, vector<64x128xbf16>, vector<64x128xbf16>, vector<64x128xbf16>, vector<64x128xbf16>, vector<64x128xbf16>, vector<64x128xbf16>, vector<64x128xbf16> -> vector<64x1152xbf16>
    %c0_108 = arith.constant 0 : index
    %c0_109 = arith.constant 0 : index
    %74 = vector.load %arg3[%c0_108, %c0_109] : memref<1152x128xbf16, #tpu.memory_space<vmem>>, vector<1152x128xbf16>
    %cst_110 = arith.constant dense<0.000000e+00> : vector<64x128xf32>
    %75 = tpu.matmul %73, %74, %cst_110 {dimension_numbers = #tpu.dot_dimension_numbers<[1], [0], [0], [1], [0, 0, 1, 1], [], []>} : vector<64x1152xbf16>, vector<1152x128xbf16>, vector<64x128xf32> -> vector<64x128xf32>
    %c0_111 = arith.constant 0 : index
    %c0_112 = arith.constant 0 : index
    %76 = vector.load %arg7[%c0_111, %c0_112] : memref<1x128xf32, #tpu.memory_space<vmem>>, vector<1x128xf32>
    %77 = vector.broadcast %76 : vector<1x128xf32> to vector<64x128xf32>
    %78 = arith.mulf %75, %77 : vector<64x128xf32>
    %c0_113 = arith.constant 0 : index
    %c0_114 = arith.constant 0 : index
    %79 = vector.load %arg8[%c0_113, %c0_114] : memref<1x128xf32, #tpu.memory_space<vmem>>, vector<1x128xf32>
    %80 = vector.broadcast %79 : vector<1x128xf32> to vector<64x128xf32>
    %81 = arith.addf %78, %80 : vector<64x128xf32>
    %82 = arith.addf %81, %45 : vector<64x128xf32>
    %cst_115 = arith.constant 0.000000e+00 : f32
    %83 = vector.broadcast %cst_115 : f32 to vector<64x128xf32>
    %84 = arith.maximumf %82, %83 : vector<64x128xf32>
    %85 = vector.shape_cast %84 : vector<64x128xf32> to vector<8x8x128xf32>
    %86 = arith.truncf %85 : vector<8x8x128xf32> to vector<8x8x128xbf16>
    %c0_116 = arith.constant 0 : index
    %c0_117 = arith.constant 0 : index
    %c0_118 = arith.constant 0 : index
    %c0_119 = arith.constant 0 : index
    %87 = vector.load %arg11[%c0_116, %c0_117, %c0_118, %c0_119] : memref<1x8x8x128xbf16, #tpu.memory_space<vmem>>, vector<1x8x8x128xbf16>
    %88 = vector.shape_cast %87 : vector<1x8x8x128xbf16> to vector<8x8x128xbf16>
    %89 = vector.shape_cast %86 : vector<8x8x128xbf16> to vector<1x8x8x128xbf16>
    tpu.vector_store %arg11[%c0_116, %c0_117, %c0_118, %c0_119], %89 {strides = array<i32>} : memref<1x8x8x128xbf16, #tpu.memory_space<vmem>>, vector<1x8x8x128xbf16>,
    return
  }
  func.func @transform_0(%arg0: i32) -> (i32, i32, i32, i32, i32, i32) {
    %c0_i32 = arith.constant 0 : i32
    %c0_i32_0 = arith.constant 0 : i32
    %c0_i32_1 = arith.constant 0 : i32
    %c0_i32_2 = arith.constant 0 : i32
    %c0_i32_3 = arith.constant 0 : i32
    %c0_i32_4 = arith.constant 0 : i32
    return %arg0, %c0_i32, %c0_i32_0, %c0_i32_1, %c0_i32_2, %c0_i32_3 : i32, i32, i32, i32, i32, i32
  }
  func.func @transform_1(%arg0: i32) -> (i32, i32) {
    %c0_i32 = arith.constant 0 : i32
    %c0_i32_0 = arith.constant 0 : i32
    %c0_i32_1 = arith.constant 0 : i32
    return %c0_i32, %c0_i32_0 : i32, i32
  }
  func.func @transform_2(%arg0: i32) -> (i32, i32) {
    %c0_i32 = arith.constant 0 : i32
    %c0_i32_0 = arith.constant 0 : i32
    %c0_i32_1 = arith.constant 0 : i32
    return %c0_i32, %c0_i32_0 : i32, i32
  }
  func.func @transform_3(%arg0: i32) -> (i32, i32) {
    %c0_i32 = arith.constant 0 : i32
    %c0_i32_0 = arith.constant 0 : i32
    %c0_i32_1 = arith.constant 0 : i32
    return %c0_i32, %c0_i32_0 : i32, i32
  }
  func.func @transform_4(%arg0: i32) -> (i32, i32) {
    %c0_i32 = arith.constant 0 : i32
    %c0_i32_0 = arith.constant 0 : i32
    %c0_i32_1 = arith.constant 0 : i32
    return %c0_i32, %c0_i32_0 : i32, i32
  }
  func.func @transform_5(%arg0: i32) -> (i32, i32) {
    %c0_i32 = arith.constant 0 : i32
    %c0_i32_0 = arith.constant 0 : i32
    %c0_i32_1 = arith.constant 0 : i32
    return %c0_i32, %c0_i32_0 : i32, i32
  }
  func.func @transform_6(%arg0: i32) -> (i32, i32) {
    %c0_i32 = arith.constant 0 : i32
    %c0_i32_0 = arith.constant 0 : i32
    %c0_i32_1 = arith.constant 0 : i32
    return %c0_i32, %c0_i32_0 : i32, i32
  }
  func.func @transform_7(%arg0: i32) -> (i32, i32) {
    %c0_i32 = arith.constant 0 : i32
    %c0_i32_0 = arith.constant 0 : i32
    %c0_i32_1 = arith.constant 0 : i32
    return %c0_i32, %c0_i32_0 : i32, i32
  }
  func.func @transform_8(%arg0: i32) -> (i32, i32) {
    %c0_i32 = arith.constant 0 : i32
    %c0_i32_0 = arith.constant 0 : i32
    %c0_i32_1 = arith.constant 0 : i32
    return %c0_i32, %c0_i32_0 : i32, i32
  }
  func.func @transform_9(%arg0: i32) -> (i32, i32) {
    %c0_i32 = arith.constant 0 : i32
    %c0_i32_0 = arith.constant 0 : i32
    %c0_i32_1 = arith.constant 0 : i32
    return %c0_i32, %c0_i32_0 : i32, i32
  }
  func.func @transform_10(%arg0: i32) -> (i32, i32, i32, i32) {
    %c0_i32 = arith.constant 0 : i32
    %c0_i32_0 = arith.constant 0 : i32
    %c0_i32_1 = arith.constant 0 : i32
    %c0_i32_2 = arith.constant 0 : i32
    return %arg0, %c0_i32, %c0_i32_0, %c0_i32_1 : i32, i32, i32, i32
  }
}

</mosaic_0001>

<llo_original>
// kernel: tpu_custom_call.1
$region0: #{tpu_custom_call.1}
  #allocation0 [shape = 'u32[]', space=smem, size = 0x4, offset = 0x4, fixed_abs, tag = 'smem constant byte address 0x4 - core index']
  #allocation1 [shape = 'u32[144,128]{1,0:T(1,128)}', space=vmem, size = 0x12000, scoped, tag = 'internal scratch']
  #allocation2 [shape = 'bf16[10,10,128]{2,1,0:T(8,128)(2,1)}', space=vmem, size = 0xa000, scoped, tag = 'scratch operand']
  %s0 = inlined_call_operand.vmem [shape: bf16[2,2,2,9,9,128], index: 0, kind: input, shape index: {}]
  %s1 = inlined_call_operand.vmem [shape: bf16[1152,128], index: 1, kind: input, shape index: {}]
  %s2 = inlined_call_operand.hbm [shape: bf16[1152,128], index: 2, kind: input, shape index: {}]
  %s3 = inlined_call_operand.vmem [shape: bf16[128,128], index: 3, kind: input, shape index: {}]
  %s4 = inlined_call_operand.vmem [shape: f32[1,128], index: 4, kind: input, shape index: {}]
  %s5 = inlined_call_operand.vmem [shape: f32[1,128], index: 5, kind: input, shape index: {}]
  %s6 = inlined_call_operand.vmem [shape: f32[1,128], index: 6, kind: input, shape index: {}]
  %s7 = inlined_call_operand.vmem [shape: f32[1,128], index: 7, kind: input, shape index: {}]
  %s8 = inlined_call_operand.vmem [shape: f32[1,128], index: 8, kind: input, shape index: {}]
  %s9 = inlined_call_operand.vmem [shape: f32[1,128], index: 9, kind: input, shape index: {}]
  %s10 = inlined_call_operand.hbm [shape: bf16[2,8,8,128], index: 10, kind: output, shape index: {}]
  %s11 = sld [smem:[#allocation0]]
  $region77: #{tpu_custom_call.1} parent=0
    _
  %s13 = ssub.s32 1, %s11
  %s14 = scalar_select 0, %s13, %s11
  $region1: #{tpu_custom_call.1} parent=0
    #allocation3 [shape = 'u8[294912]{0}', space=vmem, size = 0x48000, scoped, tag = 'input window, operand 2, single buffered']
    #allocation4 [shape = 's32[2]{0}', space=sflag, size = 0x8, scoped, tag = 'scoped memory for tpu_custom_call.1']
    #allocation5 [shape = 's32[2]{0}', space=sflag, size = 0x8, scoped, tag = 'scoped memory for tpu_custom_call.1']
    #allocation6 [shape = 'u8[32768]{0}', space=vmem, size = 0x8000, scoped, tag = 'output window, operand 0']
    %15 = vsyncpa [#allocation4], 0
    %16 = vsyncpa [#allocation5], 0
    %s17 = scalar_lea.sflag [#allocation5], 1
    %18 = vsyncpa %s17, 0
    loop: start=0, step=1, limit=4
    $region2: #{tpu_custom_call.1} parent=1 // loop_pre_header
      _
    $region3: #{tpu_custom_call.1} parent=1 // loop_header
      %s20 = sphi 0, %s24
      %p21 = scmp.ge.s32.totalorder %s20, 4
      %s30 = sphi 0, %s32
      %s33 = sphi 0, %s30
      %s34 = sphi 0, %s33
      %s50 = sphi 0, %s34
      %s54 = sphi 0, %s54
      %s56 = sphi 0, %s54
      %s57 = sphi 0, %s56
      %s71 = sphi 0, %s57
      %s75 = sphi 0, %s75
      %s77 = sphi 0, %s75
      %s78 = sphi 0, %s77
      %s92 = sphi 0, %s78
      %s96 = sphi 0, %s96
      %s98 = sphi 0, %s96
      %s99 = sphi 0, %s98
      %s113 = sphi 0, %s99
      %s117 = sphi 0, %s117
      %s119 = sphi 0, %s117
      %s120 = sphi 0, %s119
      %s134 = sphi 0, %s120
      %s138 = sphi 0, %s138
      %s140 = sphi 0, %s138
      %s141 = sphi 0, %s140
      %s155 = sphi 0, %s141
      %s159 = sphi 0, %s159
      %s161 = sphi 0, %s159
      %s162 = sphi 0, %s161
      %s176 = sphi 0, %s162
      %s180 = sphi 0, %s180
      %s182 = sphi 0, %s180
      %s183 = sphi 0, %s182
      %s197 = sphi 0, %s183
      %s201 = sphi 0, %s201
      %s203 = sphi 0, %s201
      %s204 = sphi 0, %s203
      %s218 = sphi 0, %s204
      %s222 = sphi 0, %s222
      %s224 = sphi 0, %s222
      %s225 = sphi 0, %s224
      %s239 = sphi 0, %s225
      %s245 = sphi 0, %s247
      %s248 = sphi 0, %s245
      %s249 = sphi 0, %s248
      %s265 = sphi 0, %s249
    $region4: #{tpu_custom_call.1} parent=1 // loop_header_branch
      %23 = sbr.rel (%p21) target = $region8
    $region5: #{tpu_custom_call.1} parent=1 // loop_body
      %s25 = ssub.s32 %s20, 1
      %s26 = ssub.s32 %s20, 2
      %s27 = sadd.s32 %s20, 1
      %s28 = ssub.s32 %s20, %s27
      %p29 = scmp.eq.s32.totalorder %s28, 0
      %s31 = sadd.s32 %s30, 1
      %s32 = scalar_select %p29, %s30, %s31
      %p35 = pneg %p29
      %p36 = scmp.eq.s32.totalorder %s20, 1
      %p37 = por %p35, %p36
      %p38 = scmp.ne.s32.totalorder %s30, %s33
      %p39 = scmp.eq.s32.totalorder %s20, 0
      %p40 = por %p38, %p39
      %p41 = scmp.ne.s32.totalorder %s30, %s33
      %p42 = scmp.eq.s32.totalorder %s25, 1
      %p43 = por %p41, %p42
      %p44 = scmp.ne.s32.totalorder %s33, %s34
      %p45 = scmp.eq.s32.totalorder %s25, 0
      %p46 = por %p44, %p45
      %p47 = scmp.ne.s32.totalorder %s33, %s34
      %p48 = scmp.eq.s32.totalorder %s26, 1
      %p49 = por %p47, %p48
      %p51 = scmp.ne.s32.totalorder %s34, %s50
      %p52 = scmp.eq.s32.totalorder %s26, 0
      %p53 = por %p51, %p52
      %s55 = sadd.s32 %s54, 1
      %p58 = scmp.eq.s32.totalorder %s20, 1
      %p59 = scmp.ne.s32.totalorder %s54, %s56
      %p60 = scmp.eq.s32.totalorder %s20, 0
      %p61 = por %p59, %p60
      %p62 = scmp.ne.s32.totalorder %s54, %s56
      %p63 = scmp.eq.s32.totalorder %s25, 1
      %p64 = por %p62, %p63
      %p65 = scmp.ne.s32.totalorder %s56, %s57
      %p66 = scmp.eq.s32.totalorder %s25, 0
      %p67 = por %p65, %p66
      %p68 = scmp.ne.s32.totalorder %s56, %s57
      %p69 = scmp.eq.s32.totalorder %s26, 1
      %p70 = por %p68, %p69
      %p72 = scmp.ne.s32.totalorder %s57, %s71
      %p73 = scmp.eq.s32.totalorder %s26, 0
      %p74 = por %p72, %p73
      %s76 = sadd.s32 %s75, 1
      %p79 = scmp.eq.s32.totalorder %s20, 1
      %p80 = scmp.ne.s32.totalorder %s75, %s77
      %p81 = scmp.eq.s32.totalorder %s20, 0
      %p82 = por %p80, %p81
      %p83 = scmp.ne.s32.totalorder %s75, %s77
      %p84 = scmp.eq.s32.totalorder %s25, 1
      %p85 = por %p83, %p84
      %p86 = scmp.ne.s32.totalorder %s77, %s78
      %p87 = scmp.eq.s32.totalorder %s25, 0
      %p88 = por %p86, %p87
      %p89 = scmp.ne.s32.totalorder %s77, %s78
      %p90 = scmp.eq.s32.totalorder %s26, 1
      %p91 = por %p89, %p90
      %p93 = scmp.ne.s32.totalorder %s78, %s92
      %p94 = scmp.eq.s32.totalorder %s26, 0
      %p95 = por %p93, %p94
      %s97 = sadd.s32 %s96, 1
      %p100 = scmp.eq.s32.totalorder %s20, 1
      %p101 = scmp.ne.s32.totalorder %s96, %s98
      %p102 = scmp.eq.s32.totalorder %s20, 0
      %p103 = por %p101, %p102
      %p104 = scmp.ne.s32.totalorder %s96, %s98
      %p105 = scmp.eq.s32.totalorder %s25, 1
      %p106 = por %p104, %p105
      %p107 = scmp.ne.s32.totalorder %s98, %s99
      %p108 = scmp.eq.s32.totalorder %s25, 0
      %p109 = por %p107, %p108
      %p110 = scmp.ne.s32.totalorder %s98, %s99
      %p111 = scmp.eq.s32.totalorder %s26, 1
      %p112 = por %p110, %p111
      %p114 = scmp.ne.s32.totalorder %s99, %s113
      %p115 = scmp.eq.s32.totalorder %s26, 0
      %p116 = por %p114, %p115
      %s118 = sadd.s32 %s117, 1
      %p121 = scmp.eq.s32.totalorder %s20, 1
      %p122 = scmp.ne.s32.totalorder %s117, %s119
      %p123 = scmp.eq.s32.totalorder %s20, 0
      %p124 = por %p122, %p123
      %p125 = scmp.ne.s32.totalorder %s117, %s119
      %p126 = scmp.eq.s32.totalorder %s25, 1
      %p127 = por %p125, %p126
      %p128 = scmp.ne.s32.totalorder %s119, %s120
      %p129 = scmp.eq.s32.totalorder %s25, 0
      %p130 = por %p128, %p129
      %p131 = scmp.ne.s32.totalorder %s119, %s120
      %p132 = scmp.eq.s32.totalorder %s26, 1
      %p133 = por %p131, %p132
      %p135 = scmp.ne.s32.totalorder %s120, %s134
      %p136 = scmp.eq.s32.totalorder %s26, 0
      %p137 = por %p135, %p136
      %s139 = sadd.s32 %s138, 1
      %p142 = scmp.eq.s32.totalorder %s20, 1
      %p143 = scmp.ne.s32.totalorder %s138, %s140
      %p144 = scmp.eq.s32.totalorder %s20, 0
      %p145 = por %p143, %p144
      %p146 = scmp.ne.s32.totalorder %s138, %s140
      %p147 = scmp.eq.s32.totalorder %s25, 1
      %p148 = por %p146, %p147
      %p149 = scmp.ne.s32.totalorder %s140, %s141
      %p150 = scmp.eq.s32.totalorder %s25, 0
      %p151 = por %p149, %p150
      %p152 = scmp.ne.s32.totalorder %s140, %s141
      %p153 = scmp.eq.s32.totalorder %s26, 1
      %p154 = por %p152, %p153
      %p156 = scmp.ne.s32.totalorder %s141, %s155
      %p157 = scmp.eq.s32.totalorder %s26, 0
      %p158 = por %p156, %p157
      %s160 = sadd.s32 %s159, 1
      %p163 = scmp.eq.s32.totalorder %s20, 1
      %p164 = scmp.ne.s32.totalorder %s159, %s161
      %p165 = scmp.eq.s32.totalorder %s20, 0
      %p166 = por %p164, %p165
      %p167 = scmp.ne.s32.totalorder %s159, %s161
      %p168 = scmp.eq.s32.totalorder %s25, 1
      %p169 = por %p167, %p168
      %p170 = scmp.ne.s32.totalorder %s161, %s162
      %p171 = scmp.eq.s32.totalorder %s25, 0
      %p172 = por %p170, %p171
      %p173 = scmp.ne.s32.totalorder %s161, %s162
      %p174 = scmp.eq.s32.totalorder %s26, 1
      %p175 = por %p173, %p174
      %p177 = scmp.ne.s32.totalorder %s162, %s176
      %p178 = scmp.eq.s32.totalorder %s26, 0
      %p179 = por %p177, %p178
      %s181 = sadd.s32 %s180, 1
      %p184 = scmp.eq.s32.totalorder %s20, 1
      %p185 = scmp.ne.s32.totalorder %s180, %s182
      %p186 = scmp.eq.s32.totalorder %s20, 0
      %p187 = por %p185, %p186
      %p188 = scmp.ne.s32.totalorder %s180, %s182
      %p189 = scmp.eq.s32.totalorder %s25, 1
      %p190 = por %p188, %p189
      %p191 = scmp.ne.s32.totalorder %s182, %s183
      %p192 = scmp.eq.s32.totalorder %s25, 0
      %p193 = por %p191, %p192
      %p194 = scmp.ne.s32.totalorder %s182, %s183
      %p195 = scmp.eq.s32.totalorder %s26, 1
      %p196 = por %p194, %p195
      %p198 = scmp.ne.s32.totalorder %s183, %s197
      %p199 = scmp.eq.s32.totalorder %s26, 0
      %p200 = por %p198, %p199
      %s202 = sadd.s32 %s201, 1
      %p205 = scmp.eq.s32.totalorder %s20, 1
      %p206 = scmp.ne.s32.totalorder %s201, %s203
      %p207 = scmp.eq.s32.totalorder %s20, 0
      %p208 = por %p206, %p207
      %p209 = scmp.ne.s32.totalorder %s201, %s203
      %p210 = scmp.eq.s32.totalorder %s25, 1
      %p211 = por %p209, %p210
      %p212 = scmp.ne.s32.totalorder %s203, %s204
      %p213 = scmp.eq.s32.totalorder %s25, 0
      %p214 = por %p212, %p213
      %p215 = scmp.ne.s32.totalorder %s203, %s204
      %p216 = scmp.eq.s32.totalorder %s26, 1
      %p217 = por %p215, %p216
      %p219 = scmp.ne.s32.totalorder %s204, %s218
      %p220 = scmp.eq.s32.totalorder %s26, 0
      %p221 = por %p219, %p220
      %s223 = sadd.s32 %s222, 1
      %p226 = scmp.eq.s32.totalorder %s20, 1
      %p227 = scmp.ne.s32.totalorder %s222, %s224
      %p228 = scmp.eq.s32.totalorder %s20, 0
      %p229 = por %p227, %p228
      %p230 = scmp.ne.s32.totalorder %s222, %s224
      %p231 = scmp.eq.s32.totalorder %s25, 1
      %p232 = por %p230, %p231
      %p233 = scmp.ne.s32.totalorder %s224, %s225
      %p234 = scmp.eq.s32.totalorder %s25, 0
      %p235 = por %p233, %p234
      %p236 = scmp.ne.s32.totalorder %s224, %s225
      %p237 = scmp.eq.s32.totalorder %s26, 1
      %p238 = por %p236, %p237
      %p240 = scmp.ne.s32.totalorder %s225, %s239
      %p241 = scmp.eq.s32.totalorder %s26, 0
      %p242 = por %p240, %p241
      %s243 = ssub.s32 %s20, %s27
      %p244 = scmp.eq.s32.totalorder %s243, 0
      %s246 = sadd.s32 %s245, 1
      %s247 = scalar_select %p244, %s245, %s246
      %p250 = pneg %p244
      %p251 = scmp.eq.s32.totalorder %s20, 1
      %p252 = por %p250, %p251
      %p253 = scmp.ne.s32.totalorder %s245, %s248
      %p254 = scmp.eq.s32.totalorder %s20, 0
      %p255 = por %p253, %p254
      %p256 = scmp.ne.s32.totalorder %s245, %s248
      %p257 = scmp.eq.s32.totalorder %s25, 1
      %p258 = por %p256, %p257
      %p259 = scmp.ne.s32.totalorder %s248, %s249
      %p260 = scmp.eq.s32.totalorder %s25, 0
      %p261 = por %p259, %p260
      %p262 = scmp.ne.s32.totalorder %s248, %s249
      %p263 = scmp.eq.s32.totalorder %s26, 1
      %p264 = por %p262, %p263
      %p266 = scmp.ne.s32.totalorder %s249, %s265
      %p267 = scmp.eq.s32.totalorder %s26, 0
      %p268 = por %p266, %p267
      %p269 = scmp.le.s32.totalorder 1, %s20
      %p270 = scmp.lt.s32.totalorder %s20, 3
      %p271 = pnand %p269, %p270
      %p272 = pneg %p271
      // Predicated region
      $region9: #{tpu_custom_call.1} parent=5 // pred_check
        _
      $region10: #{tpu_custom_call.1} parent=5 // pred_check_branch
        %274 = sbr.rel (%p271) target = $region12
      $region11: #{tpu_custom_call.1} parent=5 // pred_region
        %s275 = ssub.s32 %s20, 1
        // Predicated region
        $region13: #{tpu_custom_call.1} parent=11 // pred_check
          %p276 = pneg %p67
        $region14: #{tpu_custom_call.1} parent=11 // pred_check_branch
          %278 = sbr.rel (%p276) target = $region16
        $region15: #{tpu_custom_call.1} parent=11 // pred_region
          _
        $region16: #{tpu_custom_call.1} parent=11 // pred_fallthru
          _
        // Predicated region
        $region17: #{tpu_custom_call.1} parent=11 // pred_check
          %p279 = pneg %p88
        $region18: #{tpu_custom_call.1} parent=11 // pred_check_branch
          %281 = sbr.rel (%p279) target = $region20
        $region19: #{tpu_custom_call.1} parent=11 // pred_region
          %s283 = ssub.s32 9216, 9216
          %284 = vsyncadd [#allocation4], %s283
          %s285 = sshll.u32 [#allocation3], 4
          %s286 = int_to_ptr.vmem [resolvable:$true] %s285
          %291 = dma.hbm_to_vmem [thread:$0]  %s2, 9216, %s286, [#allocation4], 64, 64, 4
        $region20: #{tpu_custom_call.1} parent=11 // pred_fallthru
          _
        // Predicated region
        $region21: #{tpu_custom_call.1} parent=11 // pred_check
          %p292 = pneg %p109
        $region22: #{tpu_custom_call.1} parent=11 // pred_check_branch
          %294 = sbr.rel (%p292) target = $region24
        $region23: #{tpu_custom_call.1} parent=11 // pred_region
          _
        $region24: #{tpu_custom_call.1} parent=11 // pred_fallthru
          _
        // Predicated region
        $region25: #{tpu_custom_call.1} parent=11 // pred_check
          %p295 = pneg %p130
        $region26: #{tpu_custom_call.1} parent=11 // pred_check_branch
          %297 = sbr.rel (%p295) target = $region28
        $region27: #{tpu_custom_call.1} parent=11 // pred_region
          _
        $region28: #{tpu_custom_call.1} parent=11 // pred_fallthru
          _
        // Predicated region
        $region29: #{tpu_custom_call.1} parent=11 // pred_check
          %p298 = pneg %p151
        $region30: #{tpu_custom_call.1} parent=11 // pred_check_branch
          %300 = sbr.rel (%p298) target = $region32
        $region31: #{tpu_custom_call.1} parent=11 // pred_region
          _
        $region32: #{tpu_custom_call.1} parent=11 // pred_fallthru
          _
        // Predicated region
        $region33: #{tpu_custom_call.1} parent=11 // pred_check
          %p301 = pneg %p172
        $region34: #{tpu_custom_call.1} parent=11 // pred_check_branch
          %303 = sbr.rel (%p301) target = $region36
        $region35: #{tpu_custom_call.1} parent=11 // pred_region
          _
        $region36: #{tpu_custom_call.1} parent=11 // pred_fallthru
          _
        // Predicated region
        $region37: #{tpu_custom_call.1} parent=11 // pred_check
          %p304 = pneg %p193
        $region38: #{tpu_custom_call.1} parent=11 // pred_check_branch
          %306 = sbr.rel (%p304) target = $region40
        $region39: #{tpu_custom_call.1} parent=11 // pred_region
          _
        $region40: #{tpu_custom_call.1} parent=11 // pred_fallthru
          _
        // Predicated region
        $region41: #{tpu_custom_call.1} parent=11 // pred_check
          %p307 = pneg %p214
        $region42: #{tpu_custom_call.1} parent=11 // pred_check_branch
          %309 = sbr.rel (%p307) target = $region44
        $region43: #{tpu_custom_call.1} parent=11 // pred_region
          _
        $region44: #{tpu_custom_call.1} parent=11 // pred_fallthru
          _
        // Predicated region
        $region45: #{tpu_custom_call.1} parent=11 // pred_check
          %p310 = pneg %p235
        $region46: #{tpu_custom_call.1} parent=11 // pred_check_branch
          %312 = sbr.rel (%p310) target = $region48
        $region47: #{tpu_custom_call.1} parent=11 // pred_region
          _
        $region48: #{tpu_custom_call.1} parent=11 // pred_fallthru
          _
      $region12: #{tpu_custom_call.1} parent=5 // pred_fallthru
        _
      %p313 = scmp.lt.s32.totalorder %s20, 2
      // Predicated region
      $region49: #{tpu_custom_call.1} parent=5 // pred_check
        %p314 = pneg %p313
      $region50: #{tpu_custom_call.1} parent=5 // pred_check_branch
        %316 = sbr.rel (%p314) target = $region52
      $region51: #{tpu_custom_call.1} parent=5 // pred_region
        // Predicated region
        $region53: #{tpu_custom_call.1} parent=51 // pred_check
          %p317 = pneg %p40
        $region54: #{tpu_custom_call.1} parent=51 // pred_check_branch
          %319 = sbr.rel (%p317) target = $region56
        $region55: #{tpu_custom_call.1} parent=51 // pred_region
          %p320 = scmp.lt.s32.totalorder %s20, 1
          %s321 = scalar_select %p320, %s20, 1
          %s322 = smul.addr %s321, 72
          %s323 = smul.addr %s322, 4
          %s324 = scalar_lea.vmem %s0, %s323
        $region56: #{tpu_custom_call.1} parent=51 // pred_fallthru
          _
      $region52: #{tpu_custom_call.1} parent=5 // pred_fallthru
        _
      %p325 = scmp.le.s32.totalorder 1, %s20
      %p326 = scmp.lt.s32.totalorder %s20, 3
      %p327 = pnand %p325, %p326
      %p328 = pneg %p327
      // Predicated region
      $region57: #{tpu_custom_call.1} parent=5 // pred_check
        _
      $region58: #{tpu_custom_call.1} parent=5 // pred_check_branch
        %330 = sbr.rel (%p327) target = $region60
      $region59: #{tpu_custom_call.1} parent=5 // pred_region
        %s331 = ssub.s32 %s20, 1
        // Predicated region
        $region61: #{tpu_custom_call.1} parent=59 // pred_check
          %p332 = pneg %p88
        $region62: #{tpu_custom_call.1} parent=59 // pred_check_branch
          %334 = sbr.rel (%p332) target = $region64
        $region63: #{tpu_custom_call.1} parent=59 // pred_region
          %335 = dma.done [#allocation4], 9216
        $region64: #{tpu_custom_call.1} parent=59 // pred_fallthru
          _
        %p336 = scmp.lt.s32.totalorder %s25, 1
        %s337 = scalar_select %p336, %s25, 1
        %s338 = smul.addr %s337, 72
        %s339 = smul.addr %s338, 4
        %s340 = scalar_lea.vmem %s0, %s339
        %p341 = pneg %p46
        %p342 = pneg %p43
        %p343 = pneg %p67
        %p344 = pneg %p64
        %p345 = pneg %p88
        %p346 = pneg %p85
        %p347 = pneg %p109
        %p348 = pneg %p106
        %p349 = pneg %p130
        %p350 = pneg %p127
        %p351 = pneg %p151
        %p352 = pneg %p148
        %p353 = pneg %p172
        %p354 = pneg %p169
        %p355 = pneg %p193
        %p356 = pneg %p190
        %p357 = pneg %p214
        %p358 = pneg %p211
        %p359 = pneg %p235
        %p360 = pneg %p232
        %p361 = pneg %p261
        %p362 = pneg %p258
        %s363 = sand.u32 %s248, 1
        %s364 = scalar_lea.sflag [#allocation5], %s363
        %s365 = sand.u32 %s248, 1
        %s366 = smul.addr %s365, 32
        %s367 = scalar_lea.vmem [#allocation6], %s366
        %p368 = scmp.lt.s32.totalorder %s25, 1
        %s369 = scalar_select %p368, %s25, 1
        %s370 = smul.addr %s369, 72
        %s371 = smul.addr %s370, 4
        %s372 = scalar_lea.vmem %s0, %s371
        %v374 = vld [vmem:[%s372] sm:$0xf]
        %v375 = vld [vmem:[%s372 + $0x8] sm:$0xf]
        %v376 = vld [vmem:[%s372 + $0x10] sm:$0xf]
        %v377 = vld [vmem:[%s372 + $0x18] sm:$0xf]
        %v378 = vld [vmem:[%s372 + $0x20] sm:$0xf]
        %v379 = vld [vmem:[%s372 + $0x28] sm:$0xf]
        %v380 = vld [vmem:[%s372 + $0x30] sm:$0xf]
        %v381 = vld [vmem:[%s372 + $0x38] sm:$0xf]
        %s382 = scalar_lea.vmem %s372, 72
        %v383 = vld [vmem:[%s382] sm:$0xf]
        %v384 = vld [vmem:[%s382 + $0x8] sm:$0xf]
        %v385 = vld [vmem:[%s382 + $0x10] sm:$0xf]
        %v386 = vld [vmem:[%s382 + $0x18] sm:$0xf]
        %v387 = vld [vmem:[%s382 + $0x20] sm:$0xf]
        %v388 = vld [vmem:[%s382 + $0x28] sm:$0xf]
        %v389 = vld [vmem:[%s382 + $0x30] sm:$0xf]
        %v390 = vld [vmem:[%s382 + $0x38] sm:$0xf]
        %v391 = vld [vmem:[%s372 + $0x4] sm:$0x1]
        %v392 = vld [vmem:[%s372 + $0xc] sm:$0x1]
        %v393 = vld [vmem:[%s372 + $0x14] sm:$0x1]
        %v394 = vld [vmem:[%s372 + $0x1c] sm:$0x1]
        %v395 = vld [vmem:[%s372 + $0x24] sm:$0x1]
        %v396 = vld [vmem:[%s372 + $0x2c] sm:$0x1]
        %v397 = vld [vmem:[%s372 + $0x34] sm:$0x1]
        %v398 = vld [vmem:[%s372 + $0x3c] sm:$0x1]
        %vm399 = vsmask.f32 3328
        %vm400 = vsmask.f32 7440
        %vm401 = vmor %vm399, %vm400
        %v403 = vshrl.u32 %v374, 16
        %v405 = vrot.slane %v403, 4
        %v406 = vshll.u32 %v374, 16
        %v408 = vrot.slane %v406, 5
        %v409 = vor.u32 %v405, %v408
        %v410 = vrot.slane %v409, 4
        %v412 = vshll.u32 %v391, 16
        %v414 = vrot.slane %v412, 5
        %v415 = vsel %vm401, %v410, %v414
        %v417 = vshrl.u32 %v375, 16
        %v419 = vrot.slane %v417, 4
        %v420 = vshll.u32 %v375, 16
        %v422 = vrot.slane %v420, 5
        %v423 = vor.u32 %v419, %v422
        %v424 = vrot.slane %v423, 4
        %v426 = vshll.u32 %v392, 16
        %v428 = vrot.slane %v426, 5
        %v429 = vsel %vm401, %v424, %v428
        %v431 = vshrl.u32 %v376, 16
        %v433 = vrot.slane %v431, 4
        %v434 = vshll.u32 %v376, 16
        %v436 = vrot.slane %v434, 5
        %v437 = vor.u32 %v433, %v436
        %v438 = vrot.slane %v437, 4
        %v440 = vshll.u32 %v393, 16
        %v442 = vrot.slane %v440, 5
        %v443 = vsel %vm401, %v438, %v442
        %v445 = vshrl.u32 %v377, 16
        %v447 = vrot.slane %v445, 4
        %v448 = vshll.u32 %v377, 16
        %v450 = vrot.slane %v448, 5
        %v451 = vor.u32 %v447, %v450
        %v452 = vrot.slane %v451, 4
        %v454 = vshll.u32 %v394, 16
        %v456 = vrot.slane %v454, 5
        %v457 = vsel %vm401, %v452, %v456
        %v459 = vshrl.u32 %v378, 16
        %v461 = vrot.slane %v459, 4
        %v462 = vshll.u32 %v378, 16
        %v464 = vrot.slane %v462, 5
        %v465 = vor.u32 %v461, %v464
        %v466 = vrot.slane %v465, 4
        %v468 = vshll.u32 %v395, 16
        %v470 = vrot.slane %v468, 5
        %v471 = vsel %vm401, %v466, %v470
        %v473 = vshrl.u32 %v379, 16
        %v475 = vrot.slane %v473, 4
        %v476 = vshll.u32 %v379, 16
        %v478 = vrot.slane %v476, 5
        %v479 = vor.u32 %v475, %v478
        %v480 = vrot.slane %v479, 4
        %v482 = vshll.u32 %v396, 16
        %v484 = vrot.slane %v482, 5
        %v485 = vsel %vm401, %v480, %v484
        %v487 = vshrl.u32 %v380, 16
        %v489 = vrot.slane %v487, 4
        %v490 = vshll.u32 %v380, 16
        %v492 = vrot.slane %v490, 5
        %v493 = vor.u32 %v489, %v492
        %v494 = vrot.slane %v493, 4
        %v496 = vshll.u32 %v397, 16
        %v498 = vrot.slane %v496, 5
        %v499 = vsel %vm401, %v494, %v498
        %v501 = vshrl.u32 %v381, 16
        %v503 = vrot.slane %v501, 4
        %v504 = vshll.u32 %v381, 16
        %v506 = vrot.slane %v504, 5
        %v507 = vor.u32 %v503, %v506
        %v508 = vrot.slane %v507, 4
        %v510 = vshll.u32 %v398, 16
        %v512 = vrot.slane %v510, 5
        %v513 = vsel %vm401, %v508, %v512
        %s514 = scalar_lea.vmem %s372, 144
        %v515 = vld [vmem:[%s514] sm:$0xf]
        %v516 = vld [vmem:[%s514 + $0x8] sm:$0xf]
        %v517 = vld [vmem:[%s514 + $0x10] sm:$0xf]
        %v518 = vld [vmem:[%s514 + $0x18] sm:$0xf]
        %v519 = vld [vmem:[%s514 + $0x20] sm:$0xf]
        %v520 = vld [vmem:[%s514 + $0x28] sm:$0xf]
        %v521 = vld [vmem:[%s514 + $0x30] sm:$0xf]
        %v522 = vld [vmem:[%s514 + $0x38] sm:$0xf]
        %s523 = scalar_lea.vmem %s372, 216
        %v524 = vld [vmem:[%s523] sm:$0xf]
        %v525 = vld [vmem:[%s523 + $0x8] sm:$0xf]
        %v526 = vld [vmem:[%s523 + $0x10] sm:$0xf]
        %v527 = vld [vmem:[%s523 + $0x18] sm:$0xf]
        %v528 = vld [vmem:[%s523 + $0x20] sm:$0xf]
        %v529 = vld [vmem:[%s523 + $0x28] sm:$0xf]
        %v530 = vld [vmem:[%s523 + $0x30] sm:$0xf]
        %v531 = vld [vmem:[%s523 + $0x38] sm:$0xf]
        %v532 = vld [vmem:[%s514 + $0x4] sm:$0x1]
        %v533 = vld [vmem:[%s514 + $0xc] sm:$0x1]
        %v534 = vld [vmem:[%s514 + $0x14] sm:$0x1]
        %v535 = vld [vmem:[%s514 + $0x1c] sm:$0x1]
        %v536 = vld [vmem:[%s514 + $0x24] sm:$0x1]
        %v537 = vld [vmem:[%s514 + $0x2c] sm:$0x1]
        %v538 = vld [vmem:[%s514 + $0x34] sm:$0x1]
        %v539 = vld [vmem:[%s514 + $0x3c] sm:$0x1]
        %v541 = vshrl.u32 %v515, 16
        %v543 = vrot.slane %v541, 4
        %v544 = vshll.u32 %v515, 16
        %v546 = vrot.slane %v544, 5
        %v547 = vor.u32 %v543, %v546
        %v548 = vrot.slane %v547, 4
        %v550 = vshll.u32 %v532, 16
        %v552 = vrot.slane %v550, 5
        %v553 = vsel %vm401, %v548, %v552
        %v555 = vshrl.u32 %v516, 16
        %v557 = vrot.slane %v555, 4
        %v558 = vshll.u32 %v516, 16
        %v560 = vrot.slane %v558, 5
        %v561 = vor.u32 %v557, %v560
        %v562 = vrot.slane %v561, 4
        %v564 = vshll.u32 %v533, 16
        %v566 = vrot.slane %v564, 5
        %v567 = vsel %vm401, %v562, %v566
        %v569 = vshrl.u32 %v517, 16
        %v571 = vrot.slane %v569, 4
        %v572 = vshll.u32 %v517, 16
        %v574 = vrot.slane %v572, 5
        %v575 = vor.u32 %v571, %v574
        %v576 = vrot.slane %v575, 4
        %v578 = vshll.u32 %v534, 16
        %v580 = vrot.slane %v578, 5
        %v581 = vsel %vm401, %v576, %v580
        %v583 = vshrl.u32 %v518, 16
        %v585 = vrot.slane %v583, 4
        %v586 = vshll.u32 %v518, 16
        %v588 = vrot.slane %v586, 5
        %v589 = vor.u32 %v585, %v588
        %v590 = vrot.slane %v589, 4
        %v592 = vshll.u32 %v535, 16
        %v594 = vrot.slane %v592, 5
        %v595 = vsel %vm401, %v590, %v594
        %v597 = vshrl.u32 %v519, 16
        %v599 = vrot.slane %v597, 4
        %v600 = vshll.u32 %v519, 16
        %v602 = vrot.slane %v600, 5
        %v603 = vor.u32 %v599, %v602
        %v604 = vrot.slane %v603, 4
        %v606 = vshll.u32 %v536, 16
        %v608 = vrot.slane %v606, 5
        %v609 = vsel %vm401, %v604, %v608
        %v611 = vshrl.u32 %v520, 16
        %v613 = vrot.slane %v611, 4
        %v614 = vshll.u32 %v520, 16
        %v616 = vrot.slane %v614, 5
        %v617 = vor.u32 %v613, %v616
        %v618 = vrot.slane %v617, 4
        %v620 = vshll.u32 %v537, 16
        %v622 = vrot.slane %v620, 5
        %v623 = vsel %vm401, %v618, %v622
        %v625 = vshrl.u32 %v521, 16
        %v627 = vrot.slane %v625, 4
        %v628 = vshll.u32 %v521, 16
        %v630 = vrot.slane %v628, 5
        %v631 = vor.u32 %v627, %v630
        %v632 = vrot.slane %v631, 4
        %v634 = vshll.u32 %v538, 16
        %v636 = vrot.slane %v634, 5
        %v637 = vsel %vm401, %v632, %v636
        %v639 = vshrl.u32 %v522, 16
        %v641 = vrot.slane %v639, 4
        %v642 = vshll.u32 %v522, 16
        %v644 = vrot.slane %v642, 5
        %v645 = vor.u32 %v641, %v644
        %v646 = vrot.slane %v645, 4
        %v648 = vshll.u32 %v539, 16
        %v650 = vrot.slane %v648, 5
        %v651 = vsel %vm401, %v646, %v650
        %s652 = scalar_lea.vmem %s372, 8
        %v653 = vld [vmem:[%s652] sm:$0xf]
        %v654 = vld [vmem:[%s652 + $0x8] sm:$0xf]
        %v655 = vld [vmem:[%s652 + $0x10] sm:$0xf]
        %v656 = vld [vmem:[%s652 + $0x18] sm:$0xf]
        %v657 = vld [vmem:[%s652 + $0x20] sm:$0xf]
        %v658 = vld [vmem:[%s652 + $0x28] sm:$0xf]
        %v659 = vld [vmem:[%s652 + $0x30] sm:$0xf]
        %v660 = vld [vmem:[%s652 + $0x38] sm:$0xf]
        %s661 = scalar_lea.vmem %s372, 80
        %v662 = vld [vmem:[%s661] sm:$0xf]
        %v663 = vld [vmem:[%s661 + $0x8] sm:$0xf]
        %v664 = vld [vmem:[%s661 + $0x10] sm:$0xf]
        %v665 = vld [vmem:[%s661 + $0x18] sm:$0xf]
        %v666 = vld [vmem:[%s661 + $0x20] sm:$0xf]
        %v667 = vld [vmem:[%s661 + $0x28] sm:$0xf]
        %v668 = vld [vmem:[%s661 + $0x30] sm:$0xf]
        %v669 = vld [vmem:[%s661 + $0x38] sm:$0xf]
        %v670 = vld [vmem:[%s652 + $0x4] sm:$0x1]
        %v671 = vld [vmem:[%s652 + $0xc] sm:$0x1]
        %v672 = vld [vmem:[%s652 + $0x14] sm:$0x1]
        %v673 = vld [vmem:[%s652 + $0x1c] sm:$0x1]
        %v674 = vld [vmem:[%s652 + $0x24] sm:$0x1]
        %v675 = vld [vmem:[%s652 + $0x2c] sm:$0x1]
        %v676 = vld [vmem:[%s652 + $0x34] sm:$0x1]
        %v677 = vld [vmem:[%s652 + $0x3c] sm:$0x1]
        %v679 = vshrl.u32 %v653, 16
        %v681 = vrot.slane %v679, 4
        %v682 = vshll.u32 %v653, 16
        %v684 = vrot.slane %v682, 5
        %v685 = vor.u32 %v681, %v684
        %v686 = vrot.slane %v685, 4
        %v688 = vshll.u32 %v670, 16
        %v690 = vrot.slane %v688, 5
        %v691 = vsel %vm401, %v686, %v690
        %v693 = vshrl.u32 %v654, 16
        %v695 = vrot.slane %v693, 4
        %v696 = vshll.u32 %v654, 16
        %v698 = vrot.slane %v696, 5
        %v699 = vor.u32 %v695, %v698
        %v700 = vrot.slane %v699, 4
        %v702 = vshll.u32 %v671, 16
        %v704 = vrot.slane %v702, 5
        %v705 = vsel %vm401, %v700, %v704
        %v707 = vshrl.u32 %v655, 16
        %v709 = vrot.slane %v707, 4
        %v710 = vshll.u32 %v655, 16
        %v712 = vrot.slane %v710, 5
        %v713 = vor.u32 %v709, %v712
        %v714 = vrot.slane %v713, 4
        %v716 = vshll.u32 %v672, 16
        %v718 = vrot.slane %v716, 5
        %v719 = vsel %vm401, %v714, %v718
        %v721 = vshrl.u32 %v656, 16
        %v723 = vrot.slane %v721, 4
        %v724 = vshll.u32 %v656, 16
        %v726 = vrot.slane %v724, 5
        %v727 = vor.u32 %v723, %v726
        %v728 = vrot.slane %v727, 4
        %v730 = vshll.u32 %v673, 16
        %v732 = vrot.slane %v730, 5
        %v733 = vsel %vm401, %v728, %v732
        %v735 = vshrl.u32 %v657, 16
        %v737 = vrot.slane %v735, 4
        %v738 = vshll.u32 %v657, 16
        %v740 = vrot.slane %v738, 5
        %v741 = vor.u32 %v737, %v740
        %v742 = vrot.slane %v741, 4
        %v744 = vshll.u32 %v674, 16
        %v746 = vrot.slane %v744, 5
        %v747 = vsel %vm401, %v742, %v746
        %v749 = vshrl.u32 %v658, 16
        %v751 = vrot.slane %v749, 4
        %v752 = vshll.u32 %v658, 16
        %v754 = vrot.slane %v752, 5
        %v755 = vor.u32 %v751, %v754
        %v756 = vrot.slane %v755, 4
        %v758 = vshll.u32 %v675, 16
        %v760 = vrot.slane %v758, 5
        %v761 = vsel %vm401, %v756, %v760
        %v763 = vshrl.u32 %v659, 16
        %v765 = vrot.slane %v763, 4
        %v766 = vshll.u32 %v659, 16
        %v768 = vrot.slane %v766, 5
        %v769 = vor.u32 %v765, %v768
        %v770 = vrot.slane %v769, 4
        %v772 = vshll.u32 %v676, 16
        %v774 = vrot.slane %v772, 5
        %v775 = vsel %vm401, %v770, %v774
        %v777 = vshrl.u32 %v660, 16
        %v779 = vrot.slane %v777, 4
        %v780 = vshll.u32 %v660, 16
        %v782 = vrot.slane %v780, 5
        %v783 = vor.u32 %v779, %v782
        %v784 = vrot.slane %v783, 4
        %v786 = vshll.u32 %v677, 16
        %v788 = vrot.slane %v786, 5
        %v789 = vsel %vm401, %v784, %v788
        %v798 = vunpack.c.l.b16 %v374
        %v799 = vunpack.c.l.b16 %v375
        %v800 = vunpack.c.l.b16 %v376
        %v801 = vunpack.c.l.b16 %v377
        %v802 = vunpack.c.l.b16 %v378
        %v803 = vunpack.c.l.b16 %v379
        %v804 = vunpack.c.l.b16 %v380
        %v805 = vunpack.c.l.b16 %v381
        %v806 = vpack.c.b16 %v799, %v798
        %v807 = vpack.c.b16 %v801, %v800
        %v808 = vpack.c.b16 %v803, %v802
        %v809 = vpack.c.b16 %v805, %v804
        %v822 = vunpack.c.l.b16 %v383
        %v823 = vunpack.c.l.b16 %v384
        %v824 = vunpack.c.l.b16 %v385
        %v825 = vunpack.c.l.b16 %v386
        %v826 = vunpack.c.l.b16 %v387
        %v827 = vunpack.c.l.b16 %v388
        %v828 = vunpack.c.l.b16 %v389
        %v829 = vunpack.c.l.b16 %v390
        %v830 = vpack.c.b16 %v823, %v822
        %v831 = vpack.c.b16 %v825, %v824
        %v832 = vpack.c.b16 %v827, %v826
        %v833 = vpack.c.b16 %v829, %v828
        %v838 = vunpack.c.l.b16 %v415
        %v839 = vunpack.c.l.b16 %v429
        %v840 = vunpack.c.l.b16 %v443
        %v841 = vunpack.c.l.b16 %v457
        %v842 = vunpack.c.l.b16 %v471
        %v843 = vunpack.c.l.b16 %v485
        %v844 = vunpack.c.l.b16 %v499
        %v845 = vunpack.c.l.b16 %v513
        %v846 = vpack.c.b16 %v839, %v838
        %v847 = vpack.c.b16 %v841, %v840
        %v848 = vpack.c.b16 %v843, %v842
        %v849 = vpack.c.b16 %v845, %v844
        %v862 = vunpack.c.l.b16 %v515
        %v863 = vunpack.c.l.b16 %v516
        %v864 = vunpack.c.l.b16 %v517
        %v865 = vunpack.c.l.b16 %v518
        %v866 = vunpack.c.l.b16 %v519
        %v867 = vunpack.c.l.b16 %v520
        %v868 = vunpack.c.l.b16 %v521
        %v869 = vunpack.c.l.b16 %v522
        %v870 = vpack.c.b16 %v863, %v862
        %v871 = vpack.c.b16 %v865, %v864
        %v872 = vpack.c.b16 %v867, %v866
        %v873 = vpack.c.b16 %v869, %v868
        %v886 = vunpack.c.l.b16 %v524
        %v887 = vunpack.c.l.b16 %v525
        %v888 = vunpack.c.l.b16 %v526
        %v889 = vunpack.c.l.b16 %v527
        %v890 = vunpack.c.l.b16 %v528
        %v891 = vunpack.c.l.b16 %v529
        %v892 = vunpack.c.l.b16 %v530
        %v893 = vunpack.c.l.b16 %v531
        %v894 = vpack.c.b16 %v887, %v886
        %v895 = vpack.c.b16 %v889, %v888
        %v896 = vpack.c.b16 %v891, %v890
        %v897 = vpack.c.b16 %v893, %v892
        %v902 = vunpack.c.l.b16 %v553
        %v903 = vunpack.c.l.b16 %v567
        %v904 = vunpack.c.l.b16 %v581
        %v905 = vunpack.c.l.b16 %v595
        %v906 = vunpack.c.l.b16 %v609
        %v907 = vunpack.c.l.b16 %v623
        %v908 = vunpack.c.l.b16 %v637
        %v909 = vunpack.c.l.b16 %v651
        %v910 = vpack.c.b16 %v903, %v902
        %v911 = vpack.c.b16 %v905, %v904
        %v912 = vpack.c.b16 %v907, %v906
        %v913 = vpack.c.b16 %v909, %v908
        %v926 = vunpack.c.l.b16 %v653
        %v927 = vunpack.c.l.b16 %v654
        %v928 = vunpack.c.l.b16 %v655
        %v929 = vunpack.c.l.b16 %v656
        %v930 = vunpack.c.l.b16 %v657
        %v931 = vunpack.c.l.b16 %v658
        %v932 = vunpack.c.l.b16 %v659
        %v933 = vunpack.c.l.b16 %v660
        %v934 = vpack.c.b16 %v927, %v926
        %v935 = vpack.c.b16 %v929, %v928
        %v936 = vpack.c.b16 %v931, %v930
        %v937 = vpack.c.b16 %v933, %v932
        %v950 = vunpack.c.l.b16 %v662
        %v951 = vunpack.c.l.b16 %v663
        %v952 = vunpack.c.l.b16 %v664
        %v953 = vunpack.c.l.b16 %v665
        %v954 = vunpack.c.l.b16 %v666
        %v955 = vunpack.c.l.b16 %v667
        %v956 = vunpack.c.l.b16 %v668
        %v957 = vunpack.c.l.b16 %v669
        %v958 = vpack.c.b16 %v951, %v950
        %v959 = vpack.c.b16 %v953, %v952
        %v960 = vpack.c.b16 %v955, %v954
        %v961 = vpack.c.b16 %v957, %v956
        %v966 = vunpack.c.l.b16 %v691
        %v967 = vunpack.c.l.b16 %v705
        %v968 = vunpack.c.l.b16 %v719
        %v969 = vunpack.c.l.b16 %v733
        %v970 = vunpack.c.l.b16 %v747
        %v971 = vunpack.c.l.b16 %v761
        %v972 = vunpack.c.l.b16 %v775
        %v973 = vunpack.c.l.b16 %v789
        %v974 = vpack.c.b16 %v967, %v966
        %v975 = vpack.c.b16 %v969, %v968
        %v976 = vpack.c.b16 %v971, %v970
        %v977 = vpack.c.b16 %v973, %v972
        %v982 = vld [vmem:[%s1] sm:$0xf]
        %v983 = vld [vmem:[%s1 + $0x4] sm:$0xf]
        %v984 = vld [vmem:[%s1 + $0x8] sm:$0xf]
        %v985 = vld [vmem:[%s1 + $0xc] sm:$0xf]
        %v986 = vld [vmem:[%s1 + $0x10] sm:$0xf]
        %v987 = vld [vmem:[%s1 + $0x14] sm:$0xf]
        %v988 = vld [vmem:[%s1 + $0x18] sm:$0xf]
        %v989 = vld [vmem:[%s1 + $0x1c] sm:$0xf]
        %v990 = vld [vmem:[%s1 + $0x20] sm:$0xf]
        %v991 = vld [vmem:[%s1 + $0x24] sm:$0xf]
        %v992 = vld [vmem:[%s1 + $0x28] sm:$0xf]
        %v993 = vld [vmem:[%s1 + $0x2c] sm:$0xf]
        %v994 = vld [vmem:[%s1 + $0x30] sm:$0xf]
        %v995 = vld [vmem:[%s1 + $0x34] sm:$0xf]
        %v996 = vld [vmem:[%s1 + $0x38] sm:$0xf]
        %v997 = vld [vmem:[%s1 + $0x3c] sm:$0xf]
        %v998 = vld [vmem:[%s1 + $0x40] sm:$0xf]
        %v999 = vld [vmem:[%s1 + $0x44] sm:$0xf]
        %v1000 = vld [vmem:[%s1 + $0x48] sm:$0xf]
        %v1001 = vld [vmem:[%s1 + $0x4c] sm:$0xf]
        %v1002 = vld [vmem:[%s1 + $0x50] sm:$0xf]
        %v1003 = vld [vmem:[%s1 + $0x54] sm:$0xf]
        %v1004 = vld [vmem:[%s1 + $0x58] sm:$0xf]
        %v1005 = vld [vmem:[%s1 + $0x5c] sm:$0xf]
        %v1006 = vld [vmem:[%s1 + $0x60] sm:$0xf]
        %v1007 = vld [vmem:[%s1 + $0x64] sm:$0xf]
        %v1008 = vld [vmem:[%s1 + $0x68] sm:$0xf]
        %v1009 = vld [vmem:[%s1 + $0x6c] sm:$0xf]
        %v1010 = vld [vmem:[%s1 + $0x70] sm:$0xf]
        %v1011 = vld [vmem:[%s1 + $0x74] sm:$0xf]
        %v1012 = vld [vmem:[%s1 + $0x78] sm:$0xf]
        %v1013 = vld [vmem:[%s1 + $0x7c] sm:$0xf]
        %v1014 = vld [vmem:[%s1 + $0x80] sm:$0xf]
        %v1015 = vld [vmem:[%s1 + $0x84] sm:$0xf]
        %v1016 = vld [vmem:[%s1 + $0x88] sm:$0xf]
        %v1017 = vld [vmem:[%s1 + $0x8c] sm:$0xf]
        %v1018 = vld [vmem:[%s1 + $0x90] sm:$0xf]
        %v1019 = vld [vmem:[%s1 + $0x94] sm:$0xf]
        %v1020 = vld [vmem:[%s1 + $0x98] sm:$0xf]
        %v1021 = vld [vmem:[%s1 + $0x9c] sm:$0xf]
        %v1022 = vld [vmem:[%s1 + $0xa0] sm:$0xf]
        %v1023 = vld [vmem:[%s1 + $0xa4] sm:$0xf]
        %v1024 = vld [vmem:[%s1 + $0xa8] sm:$0xf]
        %v1025 = vld [vmem:[%s1 + $0xac] sm:$0xf]
        %v1026 = vld [vmem:[%s1 + $0xb0] sm:$0xf]
        %v1027 = vld [vmem:[%s1 + $0xb4] sm:$0xf]
        %v1028 = vld [vmem:[%s1 + $0xb8] sm:$0xf]
        %v1029 = vld [vmem:[%s1 + $0xbc] sm:$0xf]
        %v1030 = vld [vmem:[%s1 + $0xc0] sm:$0xf]
        %v1031 = vld [vmem:[%s1 + $0xc4] sm:$0xf]
        %v1032 = vld [vmem:[%s1 + $0xc8] sm:$0xf]
        %v1033 = vld [vmem:[%s1 + $0xcc] sm:$0xf]
        %v1034 = vld [vmem:[%s1 + $0xd0] sm:$0xf]
        %v1035 = vld [vmem:[%s1 + $0xd4] sm:$0xf]
        %v1036 = vld [vmem:[%s1 + $0xd8] sm:$0xf]
        %v1037 = vld [vmem:[%s1 + $0xdc] sm:$0xf]
        %v1038 = vld [vmem:[%s1 + $0xe0] sm:$0xf]
        %v1039 = vld [vmem:[%s1 + $0xe4] sm:$0xf]
        %v1040 = vld [vmem:[%s1 + $0xe8] sm:$0xf]
        %v1041 = vld [vmem:[%s1 + $0xec] sm:$0xf]
        %v1042 = vld [vmem:[%s1 + $0xf0] sm:$0xf]
        %v1043 = vld [vmem:[%s1 + $0xf4] sm:$0xf]
        %v1044 = vld [vmem:[%s1 + $0xf8] sm:$0xf]
        %v1045 = vld [vmem:[%s1 + $0xfc] sm:$0xf]
        %v1046 = vld [vmem:[%s1 + $0x100] sm:$0xf]
        %v1047 = vld [vmem:[%s1 + $0x104] sm:$0xf]
        %v1048 = vld [vmem:[%s1 + $0x108] sm:$0xf]
        %v1049 = vld [vmem:[%s1 + $0x10c] sm:$0xf]
        %v1050 = vld [vmem:[%s1 + $0x110] sm:$0xf]
        %v1051 = vld [vmem:[%s1 + $0x114] sm:$0xf]
        %v1052 = vld [vmem:[%s1 + $0x118] sm:$0xf]
        %v1053 = vld [vmem:[%s1 + $0x11c] sm:$0xf]
        %v1054 = vld [vmem:[%s1 + $0x120] sm:$0xf]
        %v1055 = vld [vmem:[%s1 + $0x124] sm:$0xf]
        %v1056 = vld [vmem:[%s1 + $0x128] sm:$0xf]
        %v1057 = vld [vmem:[%s1 + $0x12c] sm:$0xf]
        %v1058 = vld [vmem:[%s1 + $0x130] sm:$0xf]
        %v1059 = vld [vmem:[%s1 + $0x134] sm:$0xf]
        %v1060 = vld [vmem:[%s1 + $0x138] sm:$0xf]
        %v1061 = vld [vmem:[%s1 + $0x13c] sm:$0xf]
        %v1062 = vld [vmem:[%s1 + $0x140] sm:$0xf]
        %v1063 = vld [vmem:[%s1 + $0x144] sm:$0xf]
        %v1064 = vld [vmem:[%s1 + $0x148] sm:$0xf]
        %v1065 = vld [vmem:[%s1 + $0x14c] sm:$0xf]
        %v1066 = vld [vmem:[%s1 + $0x150] sm:$0xf]
        %v1067 = vld [vmem:[%s1 + $0x154] sm:$0xf]
        %v1068 = vld [vmem:[%s1 + $0x158] sm:$0xf]
        %v1069 = vld [vmem:[%s1 + $0x15c] sm:$0xf]
        %v1070 = vld [vmem:[%s1 + $0x160] sm:$0xf]
        %v1071 = vld [vmem:[%s1 + $0x164] sm:$0xf]
        %v1072 = vld [vmem:[%s1 + $0x168] sm:$0xf]
        %v1073 = vld [vmem:[%s1 + $0x16c] sm:$0xf]
        %v1074 = vld [vmem:[%s1 + $0x170] sm:$0xf]
        %v1075 = vld [vmem:[%s1 + $0x174] sm:$0xf]
        %v1076 = vld [vmem:[%s1 + $0x178] sm:$0xf]
        %v1077 = vld [vmem:[%s1 + $0x17c] sm:$0xf]
        %v1078 = vld [vmem:[%s1 + $0x180] sm:$0xf]
        %v1079 = vld [vmem:[%s1 + $0x184] sm:$0xf]
        %v1080 = vld [vmem:[%s1 + $0x188] sm:$0xf]
        %v1081 = vld [vmem:[%s1 + $0x18c] sm:$0xf]
        %v1082 = vld [vmem:[%s1 + $0x190] sm:$0xf]
        %v1083 = vld [vmem:[%s1 + $0x194] sm:$0xf]
        %v1084 = vld [vmem:[%s1 + $0x198] sm:$0xf]
        %v1085 = vld [vmem:[%s1 + $0x19c] sm:$0xf]
        %v1086 = vld [vmem:[%s1 + $0x1a0] sm:$0xf]
        %v1087 = vld [vmem:[%s1 + $0x1a4] sm:$0xf]
        %v1088 = vld [vmem:[%s1 + $0x1a8] sm:$0xf]
        %v1089 = vld [vmem:[%s1 + $0x1ac] sm:$0xf]
        %v1090 = vld [vmem:[%s1 + $0x1b0] sm:$0xf]
        %v1091 = vld [vmem:[%s1 + $0x1b4] sm:$0xf]
        %v1092 = vld [vmem:[%s1 + $0x1b8] sm:$0xf]
        %v1093 = vld [vmem:[%s1 + $0x1bc] sm:$0xf]
        %v1094 = vld [vmem:[%s1 + $0x1c0] sm:$0xf]
        %v1095 = vld [vmem:[%s1 + $0x1c4] sm:$0xf]
        %v1096 = vld [vmem:[%s1 + $0x1c8] sm:$0xf]
        %v1097 = vld [vmem:[%s1 + $0x1cc] sm:$0xf]
        %v1098 = vld [vmem:[%s1 + $0x1d0] sm:$0xf]
        %v1099 = vld [vmem:[%s1 + $0x1d4] sm:$0xf]
        %v1100 = vld [vmem:[%s1 + $0x1d8] sm:$0xf]
        %v1101 = vld [vmem:[%s1 + $0x1dc] sm:$0xf]
        %v1102 = vld [vmem:[%s1 + $0x1e0] sm:$0xf]
        %v1103 = vld [vmem:[%s1 + $0x1e4] sm:$0xf]
        %v1104 = vld [vmem:[%s1 + $0x1e8] sm:$0xf]
        %v1105 = vld [vmem:[%s1 + $0x1ec] sm:$0xf]
        %v1106 = vld [vmem:[%s1 + $0x1f0] sm:$0xf]
        %v1107 = vld [vmem:[%s1 + $0x1f4] sm:$0xf]
        %v1108 = vld [vmem:[%s1 + $0x1f8] sm:$0xf]
        %v1109 = vld [vmem:[%s1 + $0x1fc] sm:$0xf]
        %v1110 = vld [vmem:[%s1 + $0x200] sm:$0xf]
        %v1111 = vld [vmem:[%s1 + $0x204] sm:$0xf]
        %v1112 = vld [vmem:[%s1 + $0x208] sm:$0xf]
        %v1113 = vld [vmem:[%s1 + $0x20c] sm:$0xf]
        %v1114 = vld [vmem:[%s1 + $0x210] sm:$0xf]
        %v1115 = vld [vmem:[%s1 + $0x214] sm:$0xf]
        %v1116 = vld [vmem:[%s1 + $0x218] sm:$0xf]
        %v1117 = vld [vmem:[%s1 + $0x21c] sm:$0xf]
        %v1118 = vld [vmem:[%s1 + $0x220] sm:$0xf]
        %v1119 = vld [vmem:[%s1 + $0x224] sm:$0xf]
        %v1120 = vld [vmem:[%s1 + $0x228] sm:$0xf]
        %v1121 = vld [vmem:[%s1 + $0x22c] sm:$0xf]
        %v1122 = vld [vmem:[%s1 + $0x230] sm:$0xf]
        %v1123 = vld [vmem:[%s1 + $0x234] sm:$0xf]
        %v1124 = vld [vmem:[%s1 + $0x238] sm:$0xf]
        %v1125 = vld [vmem:[%s1 + $0x23c] sm:$0xf]
        %v1270 = vunpack.c.l.b16 %v982
        %v1271 = vunpack.c.l.b16 %v983
        %v1272 = vunpack.c.l.b16 %v984
        %v1273 = vunpack.c.l.b16 %v985
        %v1274 = vunpack.c.l.b16 %v986
        %v1275 = vunpack.c.l.b16 %v987
        %v1276 = vunpack.c.l.b16 %v988
        %v1277 = vunpack.c.l.b16 %v989
        %v1278 = vunpack.c.l.b16 %v990
        %v1279 = vunpack.c.l.b16 %v991
        %v1280 = vunpack.c.l.b16 %v992
        %v1281 = vunpack.c.l.b16 %v993
        %v1282 = vunpack.c.l.b16 %v994
        %v1283 = vunpack.c.l.b16 %v995
        %v1284 = vunpack.c.l.b16 %v996
        %v1285 = vunpack.c.l.b16 %v997
        %v1286 = vunpack.c.l.b16 %v998
        %v1287 = vunpack.c.l.b16 %v999
        %v1288 = vunpack.c.l.b16 %v1000
        %v1289 = vunpack.c.l.b16 %v1001
        %v1290 = vunpack.c.l.b16 %v1002
        %v1291 = vunpack.c.l.b16 %v1003
        %v1292 = vunpack.c.l.b16 %v1004
        %v1293 = vunpack.c.l.b16 %v1005
        %v1294 = vunpack.c.l.b16 %v1006
        %v1295 = vunpack.c.l.b16 %v1007
        %v1296 = vunpack.c.l.b16 %v1008
        %v1297 = vunpack.c.l.b16 %v1009
        %v1298 = vunpack.c.l.b16 %v1010
        %v1299 = vunpack.c.l.b16 %v1011
        %v1300 = vunpack.c.l.b16 %v1012
        %v1301 = vunpack.c.l.b16 %v1013
        %v1302 = vunpack.c.l.b16 %v1014
        %v1303 = vunpack.c.l.b16 %v1015
        %v1304 = vunpack.c.l.b16 %v1016
        %v1305 = vunpack.c.l.b16 %v1017
        %v1306 = vunpack.c.l.b16 %v1018
        %v1307 = vunpack.c.l.b16 %v1019
        %v1308 = vunpack.c.l.b16 %v1020
        %v1309 = vunpack.c.l.b16 %v1021
        %v1310 = vunpack.c.l.b16 %v1022
        %v1311 = vunpack.c.l.b16 %v1023
        %v1312 = vunpack.c.l.b16 %v1024
        %v1313 = vunpack.c.l.b16 %v1025
        %v1314 = vunpack.c.l.b16 %v1026
        %v1315 = vunpack.c.l.b16 %v1027
        %v1316 = vunpack.c.l.b16 %v1028
        %v1317 = vunpack.c.l.b16 %v1029
        %v1318 = vunpack.c.l.b16 %v1030
        %v1319 = vunpack.c.l.b16 %v1031
        %v1320 = vunpack.c.l.b16 %v1032
        %v1321 = vunpack.c.l.b16 %v1033
        %v1322 = vunpack.c.l.b16 %v1034
        %v1323 = vunpack.c.l.b16 %v1035
        %v1324 = vunpack.c.l.b16 %v1036
        %v1325 = vunpack.c.l.b16 %v1037
        %v1326 = vunpack.c.l.b16 %v1038
        %v1327 = vunpack.c.l.b16 %v1039
        %v1328 = vunpack.c.l.b16 %v1040
        %v1329 = vunpack.c.l.b16 %v1041
        %v1330 = vunpack.c.l.b16 %v1042
        %v1331 = vunpack.c.l.b16 %v1043
        %v1332 = vunpack.c.l.b16 %v1044
        %v1333 = vunpack.c.l.b16 %v1045
        %v1334 = vunpack.c.l.b16 %v1046
        %v1335 = vunpack.c.l.b16 %v1047
        %v1336 = vunpack.c.l.b16 %v1048
        %v1337 = vunpack.c.l.b16 %v1049
        %v1338 = vunpack.c.l.b16 %v1050
        %v1339 = vunpack.c.l.b16 %v1051
        %v1340 = vunpack.c.l.b16 %v1052
        %v1341 = vunpack.c.l.b16 %v1053
        %v1342 = vunpack.c.l.b16 %v1054
        %v1343 = vunpack.c.l.b16 %v1055
        %v1344 = vunpack.c.l.b16 %v1056
        %v1345 = vunpack.c.l.b16 %v1057
        %v1346 = vunpack.c.l.b16 %v1058
        %v1347 = vunpack.c.l.b16 %v1059
        %v1348 = vunpack.c.l.b16 %v1060
        %v1349 = vunpack.c.l.b16 %v1061
        %v1350 = vunpack.c.l.b16 %v1062
        %v1351 = vunpack.c.l.b16 %v1063
        %v1352 = vunpack.c.l.b16 %v1064
        %v1353 = vunpack.c.l.b16 %v1065
        %v1354 = vunpack.c.l.b16 %v1066
        %v1355 = vunpack.c.l.b16 %v1067
        %v1356 = vunpack.c.l.b16 %v1068
        %v1357 = vunpack.c.l.b16 %v1069
        %v1358 = vunpack.c.l.b16 %v1070
        %v1359 = vunpack.c.l.b16 %v1071
        %v1360 = vunpack.c.l.b16 %v1072
        %v1361 = vunpack.c.l.b16 %v1073
        %v1362 = vunpack.c.l.b16 %v1074
        %v1363 = vunpack.c.l.b16 %v1075
        %v1364 = vunpack.c.l.b16 %v1076
        %v1365 = vunpack.c.l.b16 %v1077
        %v1366 = vunpack.c.l.b16 %v1078
        %v1367 = vunpack.c.l.b16 %v1079
        %v1368 = vunpack.c.l.b16 %v1080
        %v1369 = vunpack.c.l.b16 %v1081
        %v1370 = vunpack.c.l.b16 %v1082
        %v1371 = vunpack.c.l.b16 %v1083
        %v1372 = vunpack.c.l.b16 %v1084
        %v1373 = vunpack.c.l.b16 %v1085
        %v1374 = vunpack.c.l.b16 %v1086
        %v1375 = vunpack.c.l.b16 %v1087
        %v1376 = vunpack.c.l.b16 %v1088
        %v1377 = vunpack.c.l.b16 %v1089
        %v1378 = vunpack.c.l.b16 %v1090
        %v1379 = vunpack.c.l.b16 %v1091
        %v1380 = vunpack.c.l.b16 %v1092
        %v1381 = vunpack.c.l.b16 %v1093
        %v1382 = vunpack.c.l.b16 %v1094
        %v1383 = vunpack.c.l.b16 %v1095
        %v1384 = vunpack.c.l.b16 %v1096
        %v1385 = vunpack.c.l.b16 %v1097
        %v1386 = vunpack.c.l.b16 %v1098
        %v1387 = vunpack.c.l.b16 %v1099
        %v1388 = vunpack.c.l.b16 %v1100
        %v1389 = vunpack.c.l.b16 %v1101
        %v1390 = vunpack.c.l.b16 %v1102
        %v1391 = vunpack.c.l.b16 %v1103
        %v1392 = vunpack.c.l.b16 %v1104
        %v1393 = vunpack.c.l.b16 %v1105
        %v1394 = vunpack.c.l.b16 %v1106
        %v1395 = vunpack.c.l.b16 %v1107
        %v1396 = vunpack.c.l.b16 %v1108
        %v1397 = vunpack.c.l.b16 %v1109
        %v1398 = vunpack.c.l.b16 %v1110
        %v1399 = vunpack.c.l.b16 %v1111
        %v1400 = vunpack.c.l.b16 %v1112
        %v1401 = vunpack.c.l.b16 %v1113
        %v1402 = vunpack.c.l.b16 %v1114
        %v1403 = vunpack.c.l.b16 %v1115
        %v1404 = vunpack.c.l.b16 %v1116
        %v1405 = vunpack.c.l.b16 %v1117
        %v1406 = vunpack.c.l.b16 %v1118
        %v1407 = vunpack.c.l.b16 %v1119
        %v1408 = vunpack.c.l.b16 %v1120
        %v1409 = vunpack.c.l.b16 %v1121
        %v1410 = vunpack.c.l.b16 %v1122
        %v1411 = vunpack.c.l.b16 %v1123
        %v1412 = vunpack.c.l.b16 %v1124
        %v1413 = vunpack.c.l.b16 %v1125
        %v1414 = vpack.c.b16 %v1271, %v1270
        %v1415 = vpack.c.b16 %v1273, %v1272
        %v1416 = vpack.c.b16 %v1275, %v1274
        %v1417 = vpack.c.b16 %v1277, %v1276
        %v1418 = vpack.c.b16 %v1279, %v1278
        %v1419 = vpack.c.b16 %v1281, %v1280
        %v1420 = vpack.c.b16 %v1283, %v1282
        %v1421 = vpack.c.b16 %v1285, %v1284
        %v1422 = vpack.c.b16 %v1287, %v1286
        %v1423 = vpack.c.b16 %v1289, %v1288
        %v1424 = vpack.c.b16 %v1291, %v1290
        %v1425 = vpack.c.b16 %v1293, %v1292
        %v1426 = vpack.c.b16 %v1295, %v1294
        %v1427 = vpack.c.b16 %v1297, %v1296
        %v1428 = vpack.c.b16 %v1299, %v1298
        %v1429 = vpack.c.b16 %v1301, %v1300
        %v1430 = vpack.c.b16 %v1303, %v1302
        %v1431 = vpack.c.b16 %v1305, %v1304
        %v1432 = vpack.c.b16 %v1307, %v1306
        %v1433 = vpack.c.b16 %v1309, %v1308
        %v1434 = vpack.c.b16 %v1311, %v1310
        %v1435 = vpack.c.b16 %v1313, %v1312
        %v1436 = vpack.c.b16 %v1315, %v1314
        %v1437 = vpack.c.b16 %v1317, %v1316
        %v1438 = vpack.c.b16 %v1319, %v1318
        %v1439 = vpack.c.b16 %v1321, %v1320
        %v1440 = vpack.c.b16 %v1323, %v1322
        %v1441 = vpack.c.b16 %v1325, %v1324
        %v1442 = vpack.c.b16 %v1327, %v1326
        %v1443 = vpack.c.b16 %v1329, %v1328
        %v1444 = vpack.c.b16 %v1331, %v1330
        %v1445 = vpack.c.b16 %v1333, %v1332
        %v1446 = vpack.c.b16 %v1335, %v1334
        %v1447 = vpack.c.b16 %v1337, %v1336
        %v1448 = vpack.c.b16 %v1339, %v1338
        %v1449 = vpack.c.b16 %v1341, %v1340
        %v1450 = vpack.c.b16 %v1343, %v1342
        %v1451 = vpack.c.b16 %v1345, %v1344
        %v1452 = vpack.c.b16 %v1347, %v1346
        %v1453 = vpack.c.b16 %v1349, %v1348
        %v1454 = vpack.c.b16 %v1351, %v1350
        %v1455 = vpack.c.b16 %v1353, %v1352
        %v1456 = vpack.c.b16 %v1355, %v1354
        %v1457 = vpack.c.b16 %v1357, %v1356
        %v1458 = vpack.c.b16 %v1359, %v1358
        %v1459 = vpack.c.b16 %v1361, %v1360
        %v1460 = vpack.c.b16 %v1363, %v1362
        %v1461 = vpack.c.b16 %v1365, %v1364
        %v1462 = vpack.c.b16 %v1367, %v1366
        %v1463 = vpack.c.b16 %v1369, %v1368
        %v1464 = vpack.c.b16 %v1371, %v1370
        %v1465 = vpack.c.b16 %v1373, %v1372
        %v1466 = vpack.c.b16 %v1375, %v1374
        %v1467 = vpack.c.b16 %v1377, %v1376
        %v1468 = vpack.c.b16 %v1379, %v1378
        %v1469 = vpack.c.b16 %v1381, %v1380
        %v1470 = vpack.c.b16 %v1383, %v1382
        %v1471 = vpack.c.b16 %v1385, %v1384
        %v1472 = vpack.c.b16 %v1387, %v1386
        %v1473 = vpack.c.b16 %v1389, %v1388
        %v1474 = vpack.c.b16 %v1391, %v1390
        %v1475 = vpack.c.b16 %v1393, %v1392
        %v1476 = vpack.c.b16 %v1395, %v1394
        %v1477 = vpack.c.b16 %v1397, %v1396
        %v1478 = vpack.c.b16 %v1399, %v1398
        %v1479 = vpack.c.b16 %v1401, %v1400
        %v1480 = vpack.c.b16 %v1403, %v1402
        %v1481 = vpack.c.b16 %v1405, %v1404
        %v1482 = vpack.c.b16 %v1407, %v1406
        %v1483 = vpack.c.b16 %v1409, %v1408
        %v1484 = vpack.c.b16 %v1411, %v1410
        %v1485 = vpack.c.b16 %v1413, %v1412
        %1558 = vmatprep.subr.bf16.mxu0 0
        %1559 = vmatpush1.bf16.msra.mxu0 %v1414
        %1560 = vmatprep.subr.bf16.mxu0 0
        %1561 = vmatpush1.bf16.msra.mxu0 %v1415
        %1562 = vmatprep.subr.bf16.mxu0 0
        %1563 = vmatpush1.bf16.msra.mxu0 %v1416
        %1564 = vmatprep.subr.bf16.mxu0 0
        %1565 = vmatpush1.bf16.msra.mxu0 %v1417
        %1566 = vmatprep.subr.bf16.mxu0 0
        %1567 = vmatpush1.bf16.msra.mxu0 %v1418
        %1568 = vmatprep.subr.bf16.mxu0 0
        %1569 = vmatpush1.bf16.msra.mxu0 %v1419
        %1570 = vmatprep.subr.bf16.mxu0 0
        %1571 = vmatpush1.bf16.msra.mxu0 %v1420
        %1572 = vmatprep.subr.bf16.mxu0 0
        %1573 = vmatpush1.bf16.msra.mxu0 %v1421
        %1574 = vmatprep.subr.bf16.mxu0 0
        %1575 = vmatpush1.bf16.msra.mxu0 %v1422
        %1576 = vmatprep.subr.bf16.mxu0 0
        %1577 = vmatpush1.bf16.msra.mxu0 %v1423
        %1578 = vmatprep.subr.bf16.mxu0 0
        %1579 = vmatpush1.bf16.msra.mxu0 %v1424
        %1580 = vmatprep.subr.bf16.mxu0 0
        %1581 = vmatpush1.bf16.msra.mxu0 %v1425
        %1582 = vmatprep.subr.bf16.mxu0 0
        %1583 = vmatpush1.bf16.msra.mxu0 %v1426
        %1584 = vmatprep.subr.bf16.mxu0 0
        %1585 = vmatpush1.bf16.msra.mxu0 %v1427
        %1586 = vmatprep.subr.bf16.mxu0 0
        %1587 = vmatpush1.bf16.msra.mxu0 %v1428
        %1588 = vmatprep.subr.bf16.mxu0 0
        %1589 = vmatpush1.bf16.msra.mxu0 %v1429
        %1590 = vmatprep.mubr.bf16.mxu0 %v830
        %1591 = vmatmul.mubr.bf16.gmra.mrb[0].mxu0 %v806
        %v1592 = vpop.f32.mrb[0].mxu0
        %v1593 = vadd.f32 0.0, %v1592
        %v1594 = vpop.f32.mrb[0].mxu0
        %v1595 = vpop.f32.mrb[0].mxu0
        %v1596 = vadd.f32 0.0, %v1595
        %v1597 = vpop.f32.mrb[0].mxu0
        %1598 = vmatprep.mubr.bf16.mxu0 %v831
        %1599 = vmatmul.mubr.bf16.gmra.mrb[0].mxu0 %v807
        %v1600 = vpop.f32.mrb[0].mxu0
        %v1601 = vadd.f32 0.0, %v1600
        %v1602 = vpop.f32.mrb[0].mxu0
        %v1603 = vpop.f32.mrb[0].mxu0
        %v1604 = vadd.f32 0.0, %v1603
        %v1605 = vpop.f32.mrb[0].mxu0
        %1606 = vmatprep.mubr.bf16.mxu0 %v832
        %1607 = vmatmul.mubr.bf16.gmra.mrb[0].mxu0 %v808
        %v1608 = vpop.f32.mrb[0].mxu0
        %v1609 = vadd.f32 0.0, %v1608
        %v1610 = vpop.f32.mrb[0].mxu0
        %v1611 = vpop.f32.mrb[0].mxu0
        %v1612 = vadd.f32 0.0, %v1611
        %v1613 = vpop.f32.mrb[0].mxu0
        %1614 = vmatprep.mubr.bf16.mxu0 %v833
        %1615 = vmatmul.mubr.bf16.gmra.mrb[0].mxu0 %v809
        %v1616 = vpop.f32.mrb[0].mxu0
        %v1617 = vadd.f32 0.0, %v1616
        %v1618 = vpop.f32.mrb[0].mxu0
        %v1619 = vpop.f32.mrb[0].mxu0
        %v1620 = vadd.f32 0.0, %v1619
        %v1621 = vpop.f32.mrb[0].mxu0
        %1622 = vdwg.mxu0
        %1623 = vmatprep.subr.bf16.mxu0 0
        %1624 = vmatpush1.bf16.msra.mxu0 %v1430
        %1625 = vmatprep.subr.bf16.mxu0 0
        %1626 = vmatpush1.bf16.msra.mxu0 %v1431
        %1627 = vmatprep.subr.bf16.mxu0 0
        %1628 = vmatpush1.bf16.msra.mxu0 %v1432
        %1629 = vmatprep.subr.bf16.mxu0 0
        %1630 = vmatpush1.bf16.msra.mxu0 %v1433
        %1631 = vmatprep.subr.bf16.mxu0 0
        %1632 = vmatpush1.bf16.msra.mxu0 %v1434
        %1633 = vmatprep.subr.bf16.mxu0 0
        %1634 = vmatpush1.bf16.msra.mxu0 %v1435
        %1635 = vmatprep.subr.bf16.mxu0 0
        %1636 = vmatpush1.bf16.msra.mxu0 %v1436
        %1637 = vmatprep.subr.bf16.mxu0 0
        %1638 = vmatpush1.bf16.msra.mxu0 %v1437
        %1639 = vmatprep.subr.bf16.mxu0 0
        %1640 = vmatpush1.bf16.msra.mxu0 %v1438
        %1641 = vmatprep.subr.bf16.mxu0 0
        %1642 = vmatpush1.bf16.msra.mxu0 %v1439
        %1643 = vmatprep.subr.bf16.mxu0 0
        %1644 = vmatpush1.bf16.msra.mxu0 %v1440
        %1645 = vmatprep.subr.bf16.mxu0 0
        %1646 = vmatpush1.bf16.msra.mxu0 %v1441
        %1647 = vmatprep.subr.bf16.mxu0 0
        %1648 = vmatpush1.bf16.msra.mxu0 %v1442
        %1649 = vmatprep.subr.bf16.mxu0 0
        %1650 = vmatpush1.bf16.msra.mxu0 %v1443
        %1651 = vmatprep.subr.bf16.mxu0 0
        %1652 = vmatpush1.bf16.msra.mxu0 %v1444
        %1653 = vmatprep.subr.bf16.mxu0 0
        %1654 = vmatpush1.bf16.msra.mxu0 %v1445
        %1655 = vmatprep.mubr.bf16.mxu0 %v870
        %1656 = vmatmul.mubr.bf16.gmra.mrb[0].mxu0 %v846
        %v1657 = vpop.f32.mrb[0].mxu0
        %v1658 = vadd.f32 %v1593, %v1657
        %v1659 = vpop.f32.mrb[0].mxu0
        %v1660 = vpop.f32.mrb[0].mxu0
        %v1661 = vadd.f32 %v1596, %v1660
        %v1662 = vpop.f32.mrb[0].mxu0
        %1663 = vmatprep.mubr.bf16.mxu0 %v871
        %1664 = vmatmul.mubr.bf16.gmra.mrb[0].mxu0 %v847
        %v1665 = vpop.f32.mrb[0].mxu0
        %v1666 = vadd.f32 %v1601, %v1665
        %v1667 = vpop.f32.mrb[0].mxu0
        %v1668 = vpop.f32.mrb[0].mxu0
        %v1669 = vadd.f32 %v1604, %v1668
        %v1670 = vpop.f32.mrb[0].mxu0
        %1671 = vmatprep.mubr.bf16.mxu0 %v872
        %1672 = vmatmul.mubr.bf16.gmra.mrb[0].mxu0 %v848
        %v1673 = vpop.f32.mrb[0].mxu0
        %v1674 = vadd.f32 %v1609, %v1673
        %v1675 = vpop.f32.mrb[0].mxu0
        %v1676 = vpop.f32.mrb[0].mxu0
        %v1677 = vadd.f32 %v1612, %v1676
        %v1678 = vpop.f32.mrb[0].mxu0
        %1679 = vmatprep.mubr.bf16.mxu0 %v873
        %1680 = vmatmul.mubr.bf16.gmra.mrb[0].mxu0 %v849
        %v1681 = vpop.f32.mrb[0].mxu0
        %v1682 = vadd.f32 %v1617, %v1681
        %v1683 = vpop.f32.mrb[0].mxu0
        %v1684 = vpop.f32.mrb[0].mxu0
        %v1685 = vadd.f32 %v1620, %v1684
        %v1686 = vpop.f32.mrb[0].mxu0
        %1687 = vdwg.mxu0
        %1688 = vmatprep.subr.bf16.mxu0 0
        %1689 = vmatpush1.bf16.msra.mxu0 %v1446
        %1690 = vmatprep.subr.bf16.mxu0 0
        %1691 = vmatpush1.bf16.msra.mxu0 %v1447
        %1692 = vmatprep.subr.bf16.mxu0 0
        %1693 = vmatpush1.bf16.msra.mxu0 %v1448
        %1694 = vmatprep.subr.bf16.mxu0 0
        %1695 = vmatpush1.bf16.msra.mxu0 %v1449
        %1696 = vmatprep.subr.bf16.mxu0 0
        %1697 = vmatpush1.bf16.msra.mxu0 %v1450
        %1698 = vmatprep.subr.bf16.mxu0 0
        %1699 = vmatpush1.bf16.msra.mxu0 %v1451
        %1700 = vmatprep.subr.bf16.mxu0 0
        %1701 = vmatpush1.bf16.msra.mxu0 %v1452
        %1702 = vmatprep.subr.bf16.mxu0 0
        %1703 = vmatpush1.bf16.msra.mxu0 %v1453
        %1704 = vmatprep.subr.bf16.mxu0 0
        %1705 = vmatpush1.bf16.msra.mxu0 %v1454
        %1706 = vmatprep.subr.bf16.mxu0 0
        %1707 = vmatpush1.bf16.msra.mxu0 %v1455
        %1708 = vmatprep.subr.bf16.mxu0 0
        %1709 = vmatpush1.bf16.msra.mxu0 %v1456
        %1710 = vmatprep.subr.bf16.mxu0 0
        %1711 = vmatpush1.bf16.msra.mxu0 %v1457
        %1712 = vmatprep.subr.bf16.mxu0 0
        %1713 = vmatpush1.bf16.msra.mxu0 %v1458
        %1714 = vmatprep.subr.bf16.mxu0 0
        %1715 = vmatpush1.bf16.msra.mxu0 %v1459
        %1716 = vmatprep.subr.bf16.mxu0 0
        %1717 = vmatpush1.bf16.msra.mxu0 %v1460
        %1718 = vmatprep.subr.bf16.mxu0 0
        %1719 = vmatpush1.bf16.msra.mxu0 %v1461
        %1720 = vmatprep.mubr.bf16.mxu0 %v910
        %1721 = vmatmul.mubr.bf16.gmra.mrb[0].mxu0 %v894
        %v1722 = vpop.f32.mrb[0].mxu0
        %v1723 = vadd.f32 %v1658, %v1722
        %v1724 = vpop.f32.mrb[0].mxu0
        %v1725 = vpop.f32.mrb[0].mxu0
        %v1726 = vadd.f32 %v1661, %v1725
        %v1727 = vpop.f32.mrb[0].mxu0
        %1728 = vmatprep.mubr.bf16.mxu0 %v911
        %1729 = vmatmul.mubr.bf16.gmra.mrb[0].mxu0 %v895
        %v1730 = vpop.f32.mrb[0].mxu0
        %v1731 = vadd.f32 %v1666, %v1730
        %v1732 = vpop.f32.mrb[0].mxu0
        %v1733 = vpop.f32.mrb[0].mxu0
        %v1734 = vadd.f32 %v1669, %v1733
        %v1735 = vpop.f32.mrb[0].mxu0
        %1736 = vmatprep.mubr.bf16.mxu0 %v912
        %1737 = vmatmul.mubr.bf16.gmra.mrb[0].mxu0 %v896
        %v1738 = vpop.f32.mrb[0].mxu0
        %v1739 = vadd.f32 %v1674, %v1738
        %v1740 = vpop.f32.mrb[0].mxu0
        %v1741 = vpop.f32.mrb[0].mxu0
        %v1742 = vadd.f32 %v1677, %v1741
        %v1743 = vpop.f32.mrb[0].mxu0
        %1744 = vmatprep.mubr.bf16.mxu0 %v913
        %1745 = vmatmul.mubr.bf16.gmra.mrb[0].mxu0 %v897
        %v1746 = vpop.f32.mrb[0].mxu0
        %v1747 = vadd.f32 %v1682, %v1746
        %v1748 = vpop.f32.mrb[0].mxu0
        %v1749 = vpop.f32.mrb[0].mxu0
        %v1750 = vadd.f32 %v1685, %v1749
        %v1751 = vpop.f32.mrb[0].mxu0
        %1752 = vdwg.mxu0
        %1753 = vmatprep.subr.bf16.mxu0 0
        %1754 = vmatpush1.bf16.msra.mxu0 %v1462
        %1755 = vmatprep.subr.bf16.mxu0 0
        %1756 = vmatpush1.bf16.msra.mxu0 %v1463
        %1757 = vmatprep.subr.bf16.mxu0 0
        %1758 = vmatpush1.bf16.msra.mxu0 %v1464
        %1759 = vmatprep.subr.bf16.mxu0 0
        %1760 = vmatpush1.bf16.msra.mxu0 %v1465
        %1761 = vmatprep.subr.bf16.mxu0 0
        %1762 = vmatpush1.bf16.msra.mxu0 %v1466
        %1763 = vmatprep.subr.bf16.mxu0 0
        %1764 = vmatpush1.bf16.msra.mxu0 %v1467
        %1765 = vmatprep.subr.bf16.mxu0 0
        %1766 = vmatpush1.bf16.msra.mxu0 %v1468
        %1767 = vmatprep.subr.bf16.mxu0 0
        %1768 = vmatpush1.bf16.msra.mxu0 %v1469
        %1769 = vmatprep.subr.bf16.mxu0 0
        %1770 = vmatpush1.bf16.msra.mxu0 %v1470
        %1771 = vmatprep.subr.bf16.mxu0 0
        %1772 = vmatpush1.bf16.msra.mxu0 %v1471
        %1773 = vmatprep.subr.bf16.mxu0 0
        %1774 = vmatpush1.bf16.msra.mxu0 %v1472
        %1775 = vmatprep.subr.bf16.mxu0 0
        %1776 = vmatpush1.bf16.msra.mxu0 %v1473
        %1777 = vmatprep.subr.bf16.mxu0 0
        %1778 = vmatpush1.bf16.msra.mxu0 %v1474
        %1779 = vmatprep.subr.bf16.mxu0 0
        %1780 = vmatpush1.bf16.msra.mxu0 %v1475
        %1781 = vmatprep.subr.bf16.mxu0 0
        %1782 = vmatpush1.bf16.msra.mxu0 %v1476
        %1783 = vmatprep.subr.bf16.mxu0 0
        %1784 = vmatpush1.bf16.msra.mxu0 %v1477
        %1785 = vmatprep.mubr.bf16.mxu0 %v958
        %1786 = vmatmul.mubr.bf16.gmra.mrb[0].mxu0 %v934
        %v1787 = vpop.f32.mrb[0].mxu0
        %v1788 = vadd.f32 %v1723, %v1787
        %v1789 = vpop.f32.mrb[0].mxu0
        %v1790 = vpop.f32.mrb[0].mxu0
        %v1791 = vadd.f32 %v1726, %v1790
        %v1792 = vpop.f32.mrb[0].mxu0
        %1793 = vmatprep.mubr.bf16.mxu0 %v959
        %1794 = vmatmul.mubr.bf16.gmra.mrb[0].mxu0 %v935
        %v1795 = vpop.f32.mrb[0].mxu0
        %v1796 = vadd.f32 %v1731, %v1795
        %v1797 = vpop.f32.mrb[0].mxu0
        %v1798 = vpop.f32.mrb[0].mxu0
        %v1799 = vadd.f32 %v1734, %v1798
        %v1800 = vpop.f32.mrb[0].mxu0
        %1801 = vmatprep.mubr.bf16.mxu0 %v960
        %1802 = vmatmul.mubr.bf16.gmra.mrb[0].mxu0 %v936
        %v1803 = vpop.f32.mrb[0].mxu0
        %v1804 = vadd.f32 %v1739, %v1803
        %v1805 = vpop.f32.mrb[0].mxu0
        %v1806 = vpop.f32.mrb[0].mxu0
        %v1807 = vadd.f32 %v1742, %v1806
        %v1808 = vpop.f32.mrb[0].mxu0
        %1809 = vmatprep.mubr.bf16.mxu0 %v961
        %1810 = vmatmul.mubr.bf16.gmra.mrb[0].mxu0 %v937
        %v1811 = vpop.f32.mrb[0].mxu0
        %v1812 = vadd.f32 %v1747, %v1811
        %v1813 = vpop.f32.mrb[0].mxu0
        %v1814 = vpop.f32.mrb[0].mxu0
        %v1815 = vadd.f32 %v1750, %v1814
        %v1816 = vpop.f32.mrb[0].mxu0
        %1817 = vdwg.mxu0
        %1818 = vmatprep.subr.bf16.mxu0 0
        %1819 = vmatpush1.bf16.msra.mxu0 %v1478
        %1820 = vmatprep.subr.bf16.mxu0 0
        %1821 = vmatpush1.bf16.msra.mxu0 %v1479
        %1822 = vmatprep.subr.bf16.mxu0 0
        %1823 = vmatpush1.bf16.msra.mxu0 %v1480
        %1824 = vmatprep.subr.bf16.mxu0 0
        %1825 = vmatpush1.bf16.msra.mxu0 %v1481
        %1826 = vmatprep.subr.bf16.mxu0 0
        %1827 = vmatpush1.bf16.msra.mxu0 %v1482
        %1828 = vmatprep.subr.bf16.mxu0 0
        %1829 = vmatpush1.bf16.msra.mxu0 %v1483
        %1830 = vmatprep.subr.bf16.mxu0 0
        %1831 = vmatpush1.bf16.msra.mxu0 %v1484
        %1832 = vmatprep.subr.bf16.mxu0 0
        %1833 = vmatpush1.bf16.msra.mxu0 %v1485
        %1834 = vmatprep.subr.bf16.mxu0 0
        %1835 = vmatpush1.bf16.msra.mxu0 0
        %1836 = vmatprep.subr.bf16.mxu0 0
        %1837 = vmatpush1.bf16.msra.mxu0 0
        %1838 = vmatprep.subr.bf16.mxu0 0
        %1839 = vmatpush1.bf16.msra.mxu0 0
        %1840 = vmatprep.subr.bf16.mxu0 0
        %1841 = vmatpush1.bf16.msra.mxu0 0
        %1842 = vmatprep.subr.bf16.mxu0 0
        %1843 = vmatpush1.bf16.msra.mxu0 0
        %1844 = vmatprep.subr.bf16.mxu0 0
        %1845 = vmatpush1.bf16.msra.mxu0 0
        %1846 = vmatprep.subr.bf16.mxu0 0
        %1847 = vmatpush1.bf16.msra.mxu0 0
        %1848 = vmatprep.subr.bf16.mxu0 0
        %1849 = vmatpush1.bf16.msra.mxu0 0
        %1850 = vmatprep.mubr.bf16.mxu0 0
        %1851 = vmatmul.mubr.bf16.gmra.mrb[0].mxu0 %v974
        %v1852 = vpop.f32.mrb[0].mxu0
        %v1853 = vadd.f32 %v1788, %v1852
        %v1854 = vpop.f32.mrb[0].mxu0
        %v1855 = vpop.f32.mrb[0].mxu0
        %v1856 = vadd.f32 %v1791, %v1855
        %v1857 = vpop.f32.mrb[0].mxu0
        %1858 = vmatprep.mubr.bf16.mxu0 0
        %1859 = vmatmul.mubr.bf16.gmra.mrb[0].mxu0 %v975
        %v1860 = vpop.f32.mrb[0].mxu0
        %v1861 = vadd.f32 %v1796, %v1860
        %v1862 = vpop.f32.mrb[0].mxu0
        %v1863 = vpop.f32.mrb[0].mxu0
        %v1864 = vadd.f32 %v1799, %v1863
        %v1865 = vpop.f32.mrb[0].mxu0
        %1866 = vmatprep.mubr.bf16.mxu0 0
        %1867 = vmatmul.mubr.bf16.gmra.mrb[0].mxu0 %v976
        %v1868 = vpop.f32.mrb[0].mxu0
        %v1869 = vadd.f32 %v1804, %v1868
        %v1870 = vpop.f32.mrb[0].mxu0
        %v1871 = vpop.f32.mrb[0].mxu0
        %v1872 = vadd.f32 %v1807, %v1871
        %v1873 = vpop.f32.mrb[0].mxu0
        %1874 = vmatprep.mubr.bf16.mxu0 0
        %1875 = vmatmul.mubr.bf16.gmra.mrb[0].mxu0 %v977
        %v1876 = vpop.f32.mrb[0].mxu0
        %v1877 = vadd.f32 %v1812, %v1876
        %v1878 = vpop.f32.mrb[0].mxu0
        %v1879 = vpop.f32.mrb[0].mxu0
        %v1880 = vadd.f32 %v1815, %v1879
        %v1881 = vpop.f32.mrb[0].mxu0
        %1882 = vdwg.mxu0
        %v1883 = vld [vmem:[%s4] sm:$0x1]
        %v1885 = vlaneseq
        %v1886 = vshrl.u32 %v1885, 7
        %v1887 = vsub.s32 0, %v1886
        %v1888 = vrot.slane %v1883, %v1887
        %v1890 = vmul.f32 %v1853, %v1888
        %v1891 = vmul.f32 %v1856, %v1888
        %v1892 = vmul.f32 %v1861, %v1888
        %v1893 = vmul.f32 %v1864, %v1888
        %v1894 = vmul.f32 %v1869, %v1888
        %v1895 = vmul.f32 %v1872, %v1888
        %v1896 = vmul.f32 %v1877, %v1888
        %v1897 = vmul.f32 %v1880, %v1888
        %v1898 = vld [vmem:[%s5] sm:$0x1]
        %v1900 = vlaneseq
        %v1901 = vshrl.u32 %v1900, 7
        %v1902 = vsub.s32 0, %v1901
        %v1903 = vrot.slane %v1898, %v1902
        %v1905 = vadd.f32 %v1890, %v1903
        %v1906 = vadd.f32 %v1891, %v1903
        %v1907 = vadd.f32 %v1892, %v1903
        %v1908 = vadd.f32 %v1893, %v1903
        %v1909 = vadd.f32 %v1894, %v1903
        %v1910 = vadd.f32 %v1895, %v1903
        %v1911 = vadd.f32 %v1896, %v1903
        %v1912 = vadd.f32 %v1897, %v1903
        %v1913 = vmax.f32 %v1905, 0.0
        %v1914 = vmax.f32 %v1906, 0.0
        %v1915 = vmax.f32 %v1907, 0.0
        %v1916 = vmax.f32 %v1908, 0.0
        %v1917 = vmax.f32 %v1909, 0.0
        %v1918 = vmax.f32 %v1910, 0.0
        %v1919 = vmax.f32 %v1911, 0.0
        %v1920 = vmax.f32 %v1912, 0.0
        %v1921 = vld [vmem:[%s3] sm:$0xf]
        %v1922 = vld [vmem:[%s3 + $0x4] sm:$0xf]
        %v1923 = vld [vmem:[%s3 + $0x8] sm:$0xf]
        %v1924 = vld [vmem:[%s3 + $0xc] sm:$0xf]
        %v1925 = vld [vmem:[%s3 + $0x10] sm:$0xf]
        %v1926 = vld [vmem:[%s3 + $0x14] sm:$0xf]
        %v1927 = vld [vmem:[%s3 + $0x18] sm:$0xf]
        %v1928 = vld [vmem:[%s3 + $0x1c] sm:$0xf]
        %v1929 = vld [vmem:[%s3 + $0x20] sm:$0xf]
        %v1930 = vld [vmem:[%s3 + $0x24] sm:$0xf]
        %v1931 = vld [vmem:[%s3 + $0x28] sm:$0xf]
        %v1932 = vld [vmem:[%s3 + $0x2c] sm:$0xf]
        %v1933 = vld [vmem:[%s3 + $0x30] sm:$0xf]
        %v1934 = vld [vmem:[%s3 + $0x34] sm:$0xf]
        %v1935 = vld [vmem:[%s3 + $0x38] sm:$0xf]
        %v1936 = vld [vmem:[%s3 + $0x3c] sm:$0xf]
        %v1953 = vunpack.c.l.b16 %v1921
        %v1954 = vunpack.c.l.b16 %v1922
        %v1955 = vunpack.c.l.b16 %v1923
        %v1956 = vunpack.c.l.b16 %v1924
        %v1957 = vunpack.c.l.b16 %v1925
        %v1958 = vunpack.c.l.b16 %v1926
        %v1959 = vunpack.c.l.b16 %v1927
        %v1960 = vunpack.c.l.b16 %v1928
        %v1961 = vunpack.c.l.b16 %v1929
        %v1962 = vunpack.c.l.b16 %v1930
        %v1963 = vunpack.c.l.b16 %v1931
        %v1964 = vunpack.c.l.b16 %v1932
        %v1965 = vunpack.c.l.b16 %v1933
        %v1966 = vunpack.c.l.b16 %v1934
        %v1967 = vunpack.c.l.b16 %v1935
        %v1968 = vunpack.c.l.b16 %v1936
        %v1969 = vpack.c.b16 %v1954, %v1953
        %v1970 = vpack.c.b16 %v1956, %v1955
        %v1971 = vpack.c.b16 %v1958, %v1957
        %v1972 = vpack.c.b16 %v1960, %v1959
        %v1973 = vpack.c.b16 %v1962, %v1961
        %v1974 = vpack.c.b16 %v1964, %v1963
        %v1975 = vpack.c.b16 %v1966, %v1965
        %v1976 = vpack.c.b16 %v1968, %v1967
        %1985 = vmatprep.subr.bf16.mxu0 0
        %1986 = vmatpush1.bf16.msra.mxu0 %v1969
        %1987 = vmatprep.subr.bf16.mxu0 0
        %1988 = vmatpush1.bf16.msra.mxu0 %v1970
        %1989 = vmatprep.subr.bf16.mxu0 0
        %1990 = vmatpush1.bf16.msra.mxu0 %v1971
        %1991 = vmatprep.subr.bf16.mxu0 0
        %1992 = vmatpush1.bf16.msra.mxu0 %v1972
        %1993 = vmatprep.subr.bf16.mxu0 0
        %1994 = vmatpush1.bf16.msra.mxu0 %v1973
        %1995 = vmatprep.subr.bf16.mxu0 0
        %1996 = vmatpush1.bf16.msra.mxu0 %v1974
        %1997 = vmatprep.subr.bf16.mxu0 0
        %1998 = vmatpush1.bf16.msra.mxu0 %v1975
        %1999 = vmatprep.subr.bf16.mxu0 0
        %2000 = vmatpush1.bf16.msra.mxu0 %v1976
        %2001 = vmatprep.subr.bf16.mxu0 0
        %2002 = vmatpush1.bf16.msra.mxu0 0
        %2003 = vmatprep.subr.bf16.mxu0 0
        %2004 = vmatpush1.bf16.msra.mxu0 0
        %2005 = vmatprep.subr.bf16.mxu0 0
        %2006 = vmatpush1.bf16.msra.mxu0 0
        %2007 = vmatprep.subr.bf16.mxu0 0
        %2008 = vmatpush1.bf16.msra.mxu0 0
        %2009 = vmatprep.subr.bf16.mxu0 0
        %2010 = vmatpush1.bf16.msra.mxu0 0
        %2011 = vmatprep.subr.bf16.mxu0 0
        %2012 = vmatpush1.bf16.msra.mxu0 0
        %2013 = vmatprep.subr.bf16.mxu0 0
        %2014 = vmatpush1.bf16.msra.mxu0 0
        %2015 = vmatprep.subr.bf16.mxu0 0
        %2016 = vmatpush1.bf16.msra.mxu0 0
        %2017 = vmatprep.mubr.bf16.mxu0 0
        %2018 = vmatmul.mubr.bf16.gmra.mrb[0].mxu0 %v894
        %v2019 = vpop.f32.mrb[0].mxu0
        %v2020 = vadd.f32 0.0, %v2019
        %v2021 = vpop.f32.mrb[0].mxu0
        %v2022 = vpop.f32.mrb[0].mxu0
        %v2023 = vadd.f32 0.0, %v2022
        %v2024 = vpop.f32.mrb[0].mxu0
        %2025 = vmatprep.mubr.bf16.mxu0 0
        %2026 = vmatmul.mubr.bf16.gmra.mrb[0].mxu0 %v895
        %v2027 = vpop.f32.mrb[0].mxu0
        %v2028 = vadd.f32 0.0, %v2027
        %v2029 = vpop.f32.mrb[0].mxu0
        %v2030 = vpop.f32.mrb[0].mxu0
        %v2031 = vadd.f32 0.0, %v2030
        %v2032 = vpop.f32.mrb[0].mxu0
        %2033 = vmatprep.mubr.bf16.mxu0 0
        %2034 = vmatmul.mubr.bf16.gmra.mrb[0].mxu0 %v896
        %v2035 = vpop.f32.mrb[0].mxu0
        %v2036 = vadd.f32 0.0, %v2035
        %v2037 = vpop.f32.mrb[0].mxu0
        %v2038 = vpop.f32.mrb[0].mxu0
        %v2039 = vadd.f32 0.0, %v2038
        %v2040 = vpop.f32.mrb[0].mxu0
        %2041 = vmatprep.mubr.bf16.mxu0 0
        %2042 = vmatmul.mubr.bf16.gmra.mrb[0].mxu0 %v897
        %v2043 = vpop.f32.mrb[0].mxu0
        %v2044 = vadd.f32 0.0, %v2043
        %v2045 = vpop.f32.mrb[0].mxu0
        %v2046 = vpop.f32.mrb[0].mxu0
        %v2047 = vadd.f32 0.0, %v2046
        %v2048 = vpop.f32.mrb[0].mxu0
        %2049 = vdwg.mxu0
        %v2050 = vld [vmem:[%s8] sm:$0x1]
        %v2052 = vlaneseq
        %v2053 = vshrl.u32 %v2052, 7
        %v2054 = vsub.s32 0, %v2053
        %v2055 = vrot.slane %v2050, %v2054
        %v2057 = vmul.f32 %v2020, %v2055
        %v2058 = vmul.f32 %v2023, %v2055
        %v2059 = vmul.f32 %v2028, %v2055
        %v2060 = vmul.f32 %v2031, %v2055
        %v2061 = vmul.f32 %v2036, %v2055
        %v2062 = vmul.f32 %v2039, %v2055
        %v2063 = vmul.f32 %v2044, %v2055
        %v2064 = vmul.f32 %v2047, %v2055
        %v2065 = vld [vmem:[%s9] sm:$0x1]
        %v2067 = vlaneseq
        %v2068 = vshrl.u32 %v2067, 7
        %v2069 = vsub.s32 0, %v2068
        %v2070 = vrot.slane %v2065, %v2069
        %v2072 = vadd.f32 %v2057, %v2070
        %v2073 = vadd.f32 %v2058, %v2070
        %v2074 = vadd.f32 %v2059, %v2070
        %v2075 = vadd.f32 %v2060, %v2070
        %v2076 = vadd.f32 %v2061, %v2070
        %v2077 = vadd.f32 %v2062, %v2070
        %v2078 = vadd.f32 %v2063, %v2070
        %v2079 = vadd.f32 %v2064, %v2070
        %2080 = vst [vmem:[#allocation2] sm:$0xf] 0
        %2081 = vst [vmem:[#allocation2 + $0x4] sm:$0x1] 0
        %s2082 = scalar_lea.vmem [#allocation2], 72
        %2083 = vst [vmem:[%s2082] sm:$0xf] 0
        %2084 = vst [vmem:[%s2082 + $0x4] sm:$0x1] 0
        %s2085 = scalar_lea.vmem [#allocation2], 8
        %vm2086 = vcmask 1040384
        %vm2087 = vsmask.f32 256
        %vm2088 = vmand %vm2086, %vm2087
        %v2089 = vld [vmem:[%s2085] sm:$0x1]
        %v2090 = vsel %vm2088, 0, %v2089
        %2091 = vst [vmem:[%s2085] sm:$0x1] %v2090
        %v2092 = vld [vmem:[%s2085 + $0x8] sm:$0x1]
        %v2093 = vsel %vm2088, 0, %v2092
        %2094 = vst [vmem:[%s2085 + $0x8] sm:$0x1] %v2093
        %v2095 = vld [vmem:[%s2085 + $0x10] sm:$0x1]
        %v2096 = vsel %vm2088, 0, %v2095
        %2097 = vst [vmem:[%s2085 + $0x10] sm:$0x1] %v2096
        %v2098 = vld [vmem:[%s2085 + $0x18] sm:$0x1]
        %v2099 = vsel %vm2088, 0, %v2098
        %2100 = vst [vmem:[%s2085 + $0x18] sm:$0x1] %v2099
        %v2101 = vld [vmem:[%s2085 + $0x20] sm:$0x1]
        %v2102 = vsel %vm2088, 0, %v2101
        %2103 = vst [vmem:[%s2085 + $0x20] sm:$0x1] %v2102
        %v2104 = vld [vmem:[%s2085 + $0x28] sm:$0x1]
        %v2105 = vsel %vm2088, 0, %v2104
        %2106 = vst [vmem:[%s2085 + $0x28] sm:$0x1] %v2105
        %v2107 = vld [vmem:[%s2085 + $0x30] sm:$0x1]
        %v2108 = vsel %vm2088, 0, %v2107
        %2109 = vst [vmem:[%s2085 + $0x30] sm:$0x1] %v2108
        %v2110 = vld [vmem:[%s2085 + $0x38] sm:$0x1]
        %v2111 = vsel %vm2088, 0, %v2110
        %2112 = vst [vmem:[%s2085 + $0x38] sm:$0x1] %v2111
        %vm2113 = vsmask.f32 7938
        %vm2114 = vmand %vm2086, %vm2113
        %v2115 = vld [vmem:[%s2085 + $0x4] sm:$0x1]
        %v2116 = vsel %vm2114, 0, %v2115
        %2117 = vst [vmem:[%s2085 + $0x4] sm:$0x1] %v2116
        %v2118 = vld [vmem:[%s2085 + $0xc] sm:$0x1]
        %v2119 = vsel %vm2114, 0, %v2118
        %2120 = vst [vmem:[%s2085 + $0xc] sm:$0x1] %v2119
        %v2121 = vld [vmem:[%s2085 + $0x14] sm:$0x1]
        %v2122 = vsel %vm2114, 0, %v2121
        %2123 = vst [vmem:[%s2085 + $0x14] sm:$0x1] %v2122
        %v2124 = vld [vmem:[%s2085 + $0x1c] sm:$0x1]
        %v2125 = vsel %vm2114, 0, %v2124
        %2126 = vst [vmem:[%s2085 + $0x1c] sm:$0x1] %v2125
        %v2127 = vld [vmem:[%s2085 + $0x24] sm:$0x1]
        %v2128 = vsel %vm2114, 0, %v2127
        %2129 = vst [vmem:[%s2085 + $0x24] sm:$0x1] %v2128
        %v2130 = vld [vmem:[%s2085 + $0x2c] sm:$0x1]
        %v2131 = vsel %vm2114, 0, %v2130
        %2132 = vst [vmem:[%s2085 + $0x2c] sm:$0x1] %v2131
        %v2133 = vld [vmem:[%s2085 + $0x34] sm:$0x1]
        %v2134 = vsel %vm2114, 0, %v2133
        %2135 = vst [vmem:[%s2085 + $0x34] sm:$0x1] %v2134
        %v2136 = vld [vmem:[%s2085 + $0x3c] sm:$0x1]
        %v2137 = vsel %vm2114, 0, %v2136
        %2138 = vst [vmem:[%s2085 + $0x3c] sm:$0x1] %v2137
        %v2139 = vpack.c.bf16 %v1913, %v1913
        %v2140 = vpack.c.bf16 %v1914, %v1914
        %v2141 = vpack.c.bf16 %v1915, %v1915
        %v2142 = vpack.c.bf16 %v1916, %v1916
        %v2143 = vpack.c.bf16 %v1917, %v1917
        %v2144 = vpack.c.bf16 %v1918, %v1918
        %v2145 = vpack.c.bf16 %v1919, %v1919
        %v2146 = vpack.c.bf16 %v1920, %v1920
        %v2155 = vunpack.c.l.b16 %v2139
        %v2156 = vunpack.c.l.b16 %v2140
        %v2157 = vunpack.c.l.b16 %v2141
        %v2158 = vunpack.c.l.b16 %v2142
        %v2159 = vunpack.c.l.b16 %v2143
        %v2160 = vunpack.c.l.b16 %v2144
        %v2161 = vunpack.c.l.b16 %v2145
        %v2162 = vunpack.c.l.b16 %v2146
        %v2163 = vpack.c.b16 %v2155, %v2155
        %v2164 = vpack.c.b16 %v2156, %v2156
        %v2165 = vpack.c.b16 %v2157, %v2157
        %v2166 = vpack.c.b16 %v2158, %v2158
        %v2167 = vpack.c.b16 %v2159, %v2159
        %v2168 = vpack.c.b16 %v2160, %v2160
        %v2169 = vpack.c.b16 %v2161, %v2161
        %v2170 = vpack.c.b16 %v2162, %v2162
        %v2172 = vshrl.u32 %v2163, 16
        %v2174 = vrot.slane %v2172, 7
        %v2175 = vshll.u32 %v2163, 16
        %v2177 = vor.u32 %v2174, %v2175
        %v2178 = vrot.slane %v2174, 4
        %v2180 = vshrl.u32 %v2164, 16
        %v2182 = vrot.slane %v2180, 7
        %v2183 = vshll.u32 %v2164, 16
        %v2185 = vor.u32 %v2182, %v2183
        %v2186 = vrot.slane %v2182, 4
        %v2188 = vshrl.u32 %v2165, 16
        %v2190 = vrot.slane %v2188, 7
        %v2191 = vshll.u32 %v2165, 16
        %v2193 = vor.u32 %v2190, %v2191
        %v2194 = vrot.slane %v2190, 4
        %v2196 = vshrl.u32 %v2166, 16
        %v2198 = vrot.slane %v2196, 7
        %v2199 = vshll.u32 %v2166, 16
        %v2201 = vor.u32 %v2198, %v2199
        %v2202 = vrot.slane %v2198, 4
        %v2204 = vshrl.u32 %v2167, 16
        %v2206 = vrot.slane %v2204, 7
        %v2207 = vshll.u32 %v2167, 16
        %v2209 = vor.u32 %v2206, %v2207
        %v2210 = vrot.slane %v2206, 4
        %v2212 = vshrl.u32 %v2168, 16
        %v2214 = vrot.slane %v2212, 7
        %v2215 = vshll.u32 %v2168, 16
        %v2217 = vor.u32 %v2214, %v2215
        %v2218 = vrot.slane %v2214, 4
        %v2220 = vshrl.u32 %v2169, 16
        %v2222 = vrot.slane %v2220, 7
        %v2223 = vshll.u32 %v2169, 16
        %v2225 = vor.u32 %v2222, %v2223
        %v2226 = vrot.slane %v2222, 4
        %v2228 = vshrl.u32 %v2170, 16
        %v2230 = vrot.slane %v2228, 7
        %v2231 = vshll.u32 %v2170, 16
        %v2233 = vor.u32 %v2230, %v2231
        %v2234 = vrot.slane %v2230, 4
        %vm2251 = vcmask 1043456
        %vm2252 = vmand %vm2251, %vm2113
        %v2253 = vld [vmem:[%s2085] sm:$0xf]
        %v2254 = vsel %vm2252, %v2177, %v2253
        %2255 = vst [vmem:[%s2085] sm:$0xf] %v2254
        %v2256 = vld [vmem:[%s2085 + $0x4] sm:$0x1]
        %v2257 = vsel %vm2088, %v2178, %v2256
        %2258 = vst [vmem:[%s2085 + $0x4] sm:$0x1] %v2257
        %v2259 = vld [vmem:[%s2085 + $0x8] sm:$0xf]
        %v2260 = vsel %vm2252, %v2185, %v2259
        %2261 = vst [vmem:[%s2085 + $0x8] sm:$0xf] %v2260
        %v2262 = vld [vmem:[%s2085 + $0xc] sm:$0x1]
        %v2263 = vsel %vm2088, %v2186, %v2262
        %2264 = vst [vmem:[%s2085 + $0xc] sm:$0x1] %v2263
        %v2265 = vld [vmem:[%s2085 + $0x10] sm:$0xf]
        %v2266 = vsel %vm2252, %v2193, %v2265
        %2267 = vst [vmem:[%s2085 + $0x10] sm:$0xf] %v2266
        %v2268 = vld [vmem:[%s2085 + $0x14] sm:$0x1]
        %v2269 = vsel %vm2088, %v2194, %v2268
        %2270 = vst [vmem:[%s2085 + $0x14] sm:$0x1] %v2269
        %v2271 = vld [vmem:[%s2085 + $0x18] sm:$0xf]
        %v2272 = vsel %vm2252, %v2201, %v2271
        %2273 = vst [vmem:[%s2085 + $0x18] sm:$0xf] %v2272
        %v2274 = vld [vmem:[%s2085 + $0x1c] sm:$0x1]
        %v2275 = vsel %vm2088, %v2202, %v2274
        %2276 = vst [vmem:[%s2085 + $0x1c] sm:$0x1] %v2275
        %v2277 = vld [vmem:[%s2085 + $0x20] sm:$0xf]
        %v2278 = vsel %vm2252, %v2209, %v2277
        %2279 = vst [vmem:[%s2085 + $0x20] sm:$0xf] %v2278
        %v2280 = vld [vmem:[%s2085 + $0x24] sm:$0x1]
        %v2281 = vsel %vm2088, %v2210, %v2280
        %2282 = vst [vmem:[%s2085 + $0x24] sm:$0x1] %v2281
        %v2283 = vld [vmem:[%s2085 + $0x28] sm:$0xf]
        %v2284 = vsel %vm2252, %v2217, %v2283
        %2285 = vst [vmem:[%s2085 + $0x28] sm:$0xf] %v2284
        %v2286 = vld [vmem:[%s2085 + $0x2c] sm:$0x1]
        %v2287 = vsel %vm2088, %v2218, %v2286
        %2288 = vst [vmem:[%s2085 + $0x2c] sm:$0x1] %v2287
        %v2289 = vld [vmem:[%s2085 + $0x30] sm:$0xf]
        %v2290 = vsel %vm2252, %v2225, %v2289
        %2291 = vst [vmem:[%s2085 + $0x30] sm:$0xf] %v2290
        %v2292 = vld [vmem:[%s2085 + $0x34] sm:$0x1]
        %v2293 = vsel %vm2088, %v2226, %v2292
        %2294 = vst [vmem:[%s2085 + $0x34] sm:$0x1] %v2293
        %v2295 = vld [vmem:[%s2085 + $0x38] sm:$0xf]
        %v2296 = vsel %vm2252, %v2233, %v2295
        %2297 = vst [vmem:[%s2085 + $0x38] sm:$0xf] %v2296
        %v2298 = vld [vmem:[%s2085 + $0x3c] sm:$0x1]
        %v2299 = vsel %vm2088, %v2234, %v2298
        %2300 = vst [vmem:[%s2085 + $0x3c] sm:$0x1] %v2299
        %v2301 = vld [vmem:[#allocation2] sm:$0xf]
        %v2302 = vld [vmem:[#allocation2 + $0x8] sm:$0xf]
        %v2303 = vld [vmem:[#allocation2 + $0x10] sm:$0xf]
        %v2304 = vld [vmem:[#allocation2 + $0x18] sm:$0xf]
        %v2305 = vld [vmem:[#allocation2 + $0x20] sm:$0xf]
        %v2306 = vld [vmem:[#allocation2 + $0x28] sm:$0xf]
        %v2307 = vld [vmem:[#allocation2 + $0x30] sm:$0xf]
        %v2308 = vld [vmem:[#allocation2 + $0x38] sm:$0xf]
        %v2309 = vld [vmem:[#allocation2 + $0x4] sm:$0x1]
        %v2310 = vld [vmem:[#allocation2 + $0xc] sm:$0x1]
        %v2311 = vld [vmem:[#allocation2 + $0x14] sm:$0x1]
        %v2312 = vld [vmem:[#allocation2 + $0x1c] sm:$0x1]
        %v2313 = vld [vmem:[#allocation2 + $0x24] sm:$0x1]
        %v2314 = vld [vmem:[#allocation2 + $0x2c] sm:$0x1]
        %v2315 = vld [vmem:[#allocation2 + $0x34] sm:$0x1]
        %v2316 = vld [vmem:[#allocation2 + $0x3c] sm:$0x1]
        %v2318 = vshrl.u32 %v2301, 16
        %v2320 = vrot.slane %v2318, 4
        %v2321 = vshll.u32 %v2301, 16
        %v2323 = vrot.slane %v2321, 5
        %v2324 = vor.u32 %v2320, %v2323
        %v2325 = vrot.slane %v2324, 4
        %v2327 = vshll.u32 %v2309, 16
        %v2329 = vrot.slane %v2327, 5
        %v2330 = vsel %vm401, %v2325, %v2329
        %v2332 = vshrl.u32 %v2302, 16
        %v2334 = vrot.slane %v2332, 4
        %v2335 = vshll.u32 %v2302, 16
        %v2337 = vrot.slane %v2335, 5
        %v2338 = vor.u32 %v2334, %v2337
        %v2339 = vrot.slane %v2338, 4
        %v2341 = vshll.u32 %v2310, 16
        %v2343 = vrot.slane %v2341, 5
        %v2344 = vsel %vm401, %v2339, %v2343
        %v2346 = vshrl.u32 %v2303, 16
        %v2348 = vrot.slane %v2346, 4
        %v2349 = vshll.u32 %v2303, 16
        %v2351 = vrot.slane %v2349, 5
        %v2352 = vor.u32 %v2348, %v2351
        %v2353 = vrot.slane %v2352, 4
        %v2355 = vshll.u32 %v2311, 16
        %v2357 = vrot.slane %v2355, 5
        %v2358 = vsel %vm401, %v2353, %v2357
        %v2360 = vshrl.u32 %v2304, 16
        %v2362 = vrot.slane %v2360, 4
        %v2363 = vshll.u32 %v2304, 16
        %v2365 = vrot.slane %v2363, 5
        %v2366 = vor.u32 %v2362, %v2365
        %v2367 = vrot.slane %v2366, 4
        %v2369 = vshll.u32 %v2312, 16
        %v2371 = vrot.slane %v2369, 5
        %v2372 = vsel %vm401, %v2367, %v2371
        %v2374 = vshrl.u32 %v2305, 16
        %v2376 = vrot.slane %v2374, 4
        %v2377 = vshll.u32 %v2305, 16
        %v2379 = vrot.slane %v2377, 5
        %v2380 = vor.u32 %v2376, %v2379
        %v2381 = vrot.slane %v2380, 4
        %v2383 = vshll.u32 %v2313, 16
        %v2385 = vrot.slane %v2383, 5
        %v2386 = vsel %vm401, %v2381, %v2385
        %v2388 = vshrl.u32 %v2306, 16
        %v2390 = vrot.slane %v2388, 4
        %v2391 = vshll.u32 %v2306, 16
        %v2393 = vrot.slane %v2391, 5
        %v2394 = vor.u32 %v2390, %v2393
        %v2395 = vrot.slane %v2394, 4
        %v2397 = vshll.u32 %v2314, 16
        %v2399 = vrot.slane %v2397, 5
        %v2400 = vsel %vm401, %v2395, %v2399
        %v2402 = vshrl.u32 %v2307, 16
        %v2404 = vrot.slane %v2402, 4
        %v2405 = vshll.u32 %v2307, 16
        %v2407 = vrot.slane %v2405, 5
        %v2408 = vor.u32 %v2404, %v2407
        %v2409 = vrot.slane %v2408, 4
        %v2411 = vshll.u32 %v2315, 16
        %v2413 = vrot.slane %v2411, 5
        %v2414 = vsel %vm401, %v2409, %v2413
        %v2416 = vshrl.u32 %v2308, 16
        %v2418 = vrot.slane %v2416, 4
        %v2419 = vshll.u32 %v2308, 16
        %v2421 = vrot.slane %v2419, 5
        %v2422 = vor.u32 %v2418, %v2421
        %v2423 = vrot.slane %v2422, 4
        %v2425 = vshll.u32 %v2316, 16
        %v2427 = vrot.slane %v2425, 5
        %v2428 = vsel %vm401, %v2423, %v2427
        %v2429 = vld [vmem:[#allocation2] sm:$0xe]
        %v2430 = vld [vmem:[#allocation2 + $0x8] sm:$0xe]
        %v2431 = vld [vmem:[#allocation2 + $0x10] sm:$0xe]
        %v2432 = vld [vmem:[#allocation2 + $0x18] sm:$0xe]
        %v2433 = vld [vmem:[#allocation2 + $0x20] sm:$0xe]
        %v2434 = vld [vmem:[#allocation2 + $0x28] sm:$0xe]
        %v2435 = vld [vmem:[#allocation2 + $0x30] sm:$0xe]
        %v2436 = vld [vmem:[#allocation2 + $0x38] sm:$0xe]
        %vm2453 = vcmask 1042432
        %vm2454 = vcmask 1046532
        %vm2455 = vmor %vm2453, %vm2454
        %v2456 = vrot.slane %v2429, 5
        %v2457 = vrot.slane %v2456, 4
        %v2458 = vrot.slane %v2309, 5
        %v2459 = vsel %vm2455, %v2457, %v2458
        %v2460 = vrot.slane %v2430, 5
        %v2461 = vrot.slane %v2460, 4
        %v2462 = vrot.slane %v2310, 5
        %v2463 = vsel %vm2455, %v2461, %v2462
        %v2464 = vrot.slane %v2431, 5
        %v2465 = vrot.slane %v2464, 4
        %v2466 = vrot.slane %v2311, 5
        %v2467 = vsel %vm2455, %v2465, %v2466
        %v2468 = vrot.slane %v2432, 5
        %v2469 = vrot.slane %v2468, 4
        %v2470 = vrot.slane %v2312, 5
        %v2471 = vsel %vm2455, %v2469, %v2470
        %v2472 = vrot.slane %v2433, 5
        %v2473 = vrot.slane %v2472, 4
        %v2474 = vrot.slane %v2313, 5
        %v2475 = vsel %vm2455, %v2473, %v2474
        %v2476 = vrot.slane %v2434, 5
        %v2477 = vrot.slane %v2476, 4
        %v2478 = vrot.slane %v2314, 5
        %v2479 = vsel %vm2455, %v2477, %v2478
        %v2480 = vrot.slane %v2435, 5
        %v2481 = vrot.slane %v2480, 4
        %v2482 = vrot.slane %v2315, 5
        %v2483 = vsel %vm2455, %v2481, %v2482
        %v2484 = vrot.slane %v2436, 5
        %v2485 = vrot.slane %v2484, 4
        %v2486 = vrot.slane %v2316, 5
        %v2487 = vsel %vm2455, %v2485, %v2486
        %v2488 = vld [vmem:[%s2085] sm:$0xf]
        %v2489 = vld [vmem:[%s2085 + $0x8] sm:$0xf]
        %v2490 = vld [vmem:[%s2085 + $0x10] sm:$0xf]
        %v2491 = vld [vmem:[%s2085 + $0x18] sm:$0xf]
        %v2492 = vld [vmem:[%s2085 + $0x20] sm:$0xf]
        %v2493 = vld [vmem:[%s2085 + $0x28] sm:$0xf]
        %v2494 = vld [vmem:[%s2085 + $0x30] sm:$0xf]
        %v2495 = vld [vmem:[%s2085 + $0x38] sm:$0xf]
        %v2496 = vld [vmem:[%s2085 + $0x4] sm:$0x1]
        %v2497 = vld [vmem:[%s2085 + $0xc] sm:$0x1]
        %v2498 = vld [vmem:[%s2085 + $0x14] sm:$0x1]
        %v2499 = vld [vmem:[%s2085 + $0x1c] sm:$0x1]
        %v2500 = vld [vmem:[%s2085 + $0x24] sm:$0x1]
        %v2501 = vld [vmem:[%s2085 + $0x2c] sm:$0x1]
        %v2502 = vld [vmem:[%s2085 + $0x34] sm:$0x1]
        %v2503 = vld [vmem:[%s2085 + $0x3c] sm:$0x1]
        %v2505 = vshrl.u32 %v2488, 16
        %v2507 = vrot.slane %v2505, 4
        %v2508 = vshll.u32 %v2488, 16
        %v2510 = vrot.slane %v2508, 5
        %v2511 = vor.u32 %v2507, %v2510
        %v2512 = vrot.slane %v2511, 4
        %v2514 = vshll.u32 %v2496, 16
        %v2516 = vrot.slane %v2514, 5
        %v2517 = vsel %vm401, %v2512, %v2516
        %v2519 = vshrl.u32 %v2489, 16
        %v2521 = vrot.slane %v2519, 4
        %v2522 = vshll.u32 %v2489, 16
        %v2524 = vrot.slane %v2522, 5
        %v2525 = vor.u32 %v2521, %v2524
        %v2526 = vrot.slane %v2525, 4
        %v2528 = vshll.u32 %v2497, 16
        %v2530 = vrot.slane %v2528, 5
        %v2531 = vsel %vm401, %v2526, %v2530
        %v2533 = vshrl.u32 %v2490, 16
        %v2535 = vrot.slane %v2533, 4
        %v2536 = vshll.u32 %v2490, 16
        %v2538 = vrot.slane %v2536, 5
        %v2539 = vor.u32 %v2535, %v2538
        %v2540 = vrot.slane %v2539, 4
        %v2542 = vshll.u32 %v2498, 16
        %v2544 = vrot.slane %v2542, 5
        %v2545 = vsel %vm401, %v2540, %v2544
        %v2547 = vshrl.u32 %v2491, 16
        %v2549 = vrot.slane %v2547, 4
        %v2550 = vshll.u32 %v2491, 16
        %v2552 = vrot.slane %v2550, 5
        %v2553 = vor.u32 %v2549, %v2552
        %v2554 = vrot.slane %v2553, 4
        %v2556 = vshll.u32 %v2499, 16
        %v2558 = vrot.slane %v2556, 5
        %v2559 = vsel %vm401, %v2554, %v2558
        %v2561 = vshrl.u32 %v2492, 16
        %v2563 = vrot.slane %v2561, 4
        %v2564 = vshll.u32 %v2492, 16
        %v2566 = vrot.slane %v2564, 5
        %v2567 = vor.u32 %v2563, %v2566
        %v2568 = vrot.slane %v2567, 4
        %v2570 = vshll.u32 %v2500, 16
        %v2572 = vrot.slane %v2570, 5
        %v2573 = vsel %vm401, %v2568, %v2572
        %v2575 = vshrl.u32 %v2493, 16
        %v2577 = vrot.slane %v2575, 4
        %v2578 = vshll.u32 %v2493, 16
        %v2580 = vrot.slane %v2578, 5
        %v2581 = vor.u32 %v2577, %v2580
        %v2582 = vrot.slane %v2581, 4
        %v2584 = vshll.u32 %v2501, 16
        %v2586 = vrot.slane %v2584, 5
        %v2587 = vsel %vm401, %v2582, %v2586
        %v2589 = vshrl.u32 %v2494, 16
        %v2591 = vrot.slane %v2589, 4
        %v2592 = vshll.u32 %v2494, 16
        %v2594 = vrot.slane %v2592, 5
        %v2595 = vor.u32 %v2591, %v2594
        %v2596 = vrot.slane %v2595, 4
        %v2598 = vshll.u32 %v2502, 16
        %v2600 = vrot.slane %v2598, 5
        %v2601 = vsel %vm401, %v2596, %v2600
        %v2603 = vshrl.u32 %v2495, 16
        %v2605 = vrot.slane %v2603, 4
        %v2606 = vshll.u32 %v2495, 16
        %v2608 = vrot.slane %v2606, 5
        %v2609 = vor.u32 %v2605, %v2608
        %v2610 = vrot.slane %v2609, 4
        %v2612 = vshll.u32 %v2503, 16
        %v2614 = vrot.slane %v2612, 5
        %v2615 = vsel %vm401, %v2610, %v2614
        %v2616 = vld [vmem:[%s2085] sm:$0xe]
        %v2617 = vld [vmem:[%s2085 + $0x8] sm:$0xe]
        %v2618 = vld [vmem:[%s2085 + $0x10] sm:$0xe]
        %v2619 = vld [vmem:[%s2085 + $0x18] sm:$0xe]
        %v2620 = vld [vmem:[%s2085 + $0x20] sm:$0xe]
        %v2621 = vld [vmem:[%s2085 + $0x28] sm:$0xe]
        %v2622 = vld [vmem:[%s2085 + $0x30] sm:$0xe]
        %v2623 = vld [vmem:[%s2085 + $0x38] sm:$0xe]
        %v2640 = vrot.slane %v2616, 5
        %v2641 = vrot.slane %v2640, 4
        %v2642 = vrot.slane %v2496, 5
        %v2643 = vsel %vm2455, %v2641, %v2642
        %v2644 = vrot.slane %v2617, 5
        %v2645 = vrot.slane %v2644, 4
        %v2646 = vrot.slane %v2497, 5
        %v2647 = vsel %vm2455, %v2645, %v2646
        %v2648 = vrot.slane %v2618, 5
        %v2649 = vrot.slane %v2648, 4
        %v2650 = vrot.slane %v2498, 5
        %v2651 = vsel %vm2455, %v2649, %v2650
        %v2652 = vrot.slane %v2619, 5
        %v2653 = vrot.slane %v2652, 4
        %v2654 = vrot.slane %v2499, 5
        %v2655 = vsel %vm2455, %v2653, %v2654
        %v2656 = vrot.slane %v2620, 5
        %v2657 = vrot.slane %v2656, 4
        %v2658 = vrot.slane %v2500, 5
        %v2659 = vsel %vm2455, %v2657, %v2658
        %v2660 = vrot.slane %v2621, 5
        %v2661 = vrot.slane %v2660, 4
        %v2662 = vrot.slane %v2501, 5
        %v2663 = vsel %vm2455, %v2661, %v2662
        %v2664 = vrot.slane %v2622, 5
        %v2665 = vrot.slane %v2664, 4
        %v2666 = vrot.slane %v2502, 5
        %v2667 = vsel %vm2455, %v2665, %v2666
        %v2668 = vrot.slane %v2623, 5
        %v2669 = vrot.slane %v2668, 4
        %v2670 = vrot.slane %v2503, 5
        %v2671 = vsel %vm2455, %v2669, %v2670
        %s2672 = scalar_lea.vmem [#allocation2], 16
        %v2673 = vld [vmem:[%s2672] sm:$0xf]
        %v2674 = vld [vmem:[%s2672 + $0x8] sm:$0xf]
        %v2675 = vld [vmem:[%s2672 + $0x10] sm:$0xf]
        %v2676 = vld [vmem:[%s2672 + $0x18] sm:$0xf]
        %v2677 = vld [vmem:[%s2672 + $0x20] sm:$0xf]
        %v2678 = vld [vmem:[%s2672 + $0x28] sm:$0xf]
        %v2679 = vld [vmem:[%s2672 + $0x30] sm:$0xf]
        %v2680 = vld [vmem:[%s2672 + $0x38] sm:$0xf]
        %v2681 = vld [vmem:[%s2672 + $0x4] sm:$0x1]
        %v2682 = vld [vmem:[%s2672 + $0xc] sm:$0x1]
        %v2683 = vld [vmem:[%s2672 + $0x14] sm:$0x1]
        %v2684 = vld [vmem:[%s2672 + $0x1c] sm:$0x1]
        %v2685 = vld [vmem:[%s2672 + $0x24] sm:$0x1]
        %v2686 = vld [vmem:[%s2672 + $0x2c] sm:$0x1]
        %v2687 = vld [vmem:[%s2672 + $0x34] sm:$0x1]
        %v2688 = vld [vmem:[%s2672 + $0x3c] sm:$0x1]
        %v2690 = vshrl.u32 %v2673, 16
        %v2692 = vrot.slane %v2690, 4
        %v2693 = vshll.u32 %v2673, 16
        %v2695 = vrot.slane %v2693, 5
        %v2696 = vor.u32 %v2692, %v2695
        %v2697 = vrot.slane %v2696, 4
        %v2699 = vshll.u32 %v2681, 16
        %v2701 = vrot.slane %v2699, 5
        %v2702 = vsel %vm401, %v2697, %v2701
        %v2704 = vshrl.u32 %v2674, 16
        %v2706 = vrot.slane %v2704, 4
        %v2707 = vshll.u32 %v2674, 16
        %v2709 = vrot.slane %v2707, 5
        %v2710 = vor.u32 %v2706, %v2709
        %v2711 = vrot.slane %v2710, 4
        %v2713 = vshll.u32 %v2682, 16
        %v2715 = vrot.slane %v2713, 5
        %v2716 = vsel %vm401, %v2711, %v2715
        %v2718 = vshrl.u32 %v2675, 16
        %v2720 = vrot.slane %v2718, 4
        %v2721 = vshll.u32 %v2675, 16
        %v2723 = vrot.slane %v2721, 5
        %v2724 = vor.u32 %v2720, %v2723
        %v2725 = vrot.slane %v2724, 4
        %v2727 = vshll.u32 %v2683, 16
        %v2729 = vrot.slane %v2727, 5
        %v2730 = vsel %vm401, %v2725, %v2729
        %v2732 = vshrl.u32 %v2676, 16
        %v2734 = vrot.slane %v2732, 4
        %v2735 = vshll.u32 %v2676, 16
        %v2737 = vrot.slane %v2735, 5
        %v2738 = vor.u32 %v2734, %v2737
        %v2739 = vrot.slane %v2738, 4
        %v2741 = vshll.u32 %v2684, 16
        %v2743 = vrot.slane %v2741, 5
        %v2744 = vsel %vm401, %v2739, %v2743
        %v2746 = vshrl.u32 %v2677, 16
        %v2748 = vrot.slane %v2746, 4
        %v2749 = vshll.u32 %v2677, 16
        %v2751 = vrot.slane %v2749, 5
        %v2752 = vor.u32 %v2748, %v2751
        %v2753 = vrot.slane %v2752, 4
        %v2755 = vshll.u32 %v2685, 16
        %v2757 = vrot.slane %v2755, 5
        %v2758 = vsel %vm401, %v2753, %v2757
        %v2760 = vshrl.u32 %v2678, 16
        %v2762 = vrot.slane %v2760, 4
        %v2763 = vshll.u32 %v2678, 16
        %v2765 = vrot.slane %v2763, 5
        %v2766 = vor.u32 %v2762, %v2765
        %v2767 = vrot.slane %v2766, 4
        %v2769 = vshll.u32 %v2686, 16
        %v2771 = vrot.slane %v2769, 5
        %v2772 = vsel %vm401, %v2767, %v2771
        %v2774 = vshrl.u32 %v2679, 16
        %v2776 = vrot.slane %v2774, 4
        %v2777 = vshll.u32 %v2679, 16
        %v2779 = vrot.slane %v2777, 5
        %v2780 = vor.u32 %v2776, %v2779
        %v2781 = vrot.slane %v2780, 4
        %v2783 = vshll.u32 %v2687, 16
        %v2785 = vrot.slane %v2783, 5
        %v2786 = vsel %vm401, %v2781, %v2785
        %v2788 = vshrl.u32 %v2680, 16
        %v2790 = vrot.slane %v2788, 4
        %v2791 = vshll.u32 %v2680, 16
        %v2793 = vrot.slane %v2791, 5
        %v2794 = vor.u32 %v2790, %v2793
        %v2795 = vrot.slane %v2794, 4
        %v2797 = vshll.u32 %v2688, 16
        %v2799 = vrot.slane %v2797, 5
        %v2800 = vsel %vm401, %v2795, %v2799
        %v2801 = vld [vmem:[%s2672] sm:$0xe]
        %v2802 = vld [vmem:[%s2672 + $0x8] sm:$0xe]
        %v2803 = vld [vmem:[%s2672 + $0x10] sm:$0xe]
        %v2804 = vld [vmem:[%s2672 + $0x18] sm:$0xe]
        %v2805 = vld [vmem:[%s2672 + $0x20] sm:$0xe]
        %v2806 = vld [vmem:[%s2672 + $0x28] sm:$0xe]
        %v2807 = vld [vmem:[%s2672 + $0x30] sm:$0xe]
        %v2808 = vld [vmem:[%s2672 + $0x38] sm:$0xe]
        %v2825 = vrot.slane %v2801, 5
        %v2826 = vrot.slane %v2825, 4
        %v2827 = vrot.slane %v2681, 5
        %v2828 = vsel %vm2455, %v2826, %v2827
        %v2829 = vrot.slane %v2802, 5
        %v2830 = vrot.slane %v2829, 4
        %v2831 = vrot.slane %v2682, 5
        %v2832 = vsel %vm2455, %v2830, %v2831
        %v2833 = vrot.slane %v2803, 5
        %v2834 = vrot.slane %v2833, 4
        %v2835 = vrot.slane %v2683, 5
        %v2836 = vsel %vm2455, %v2834, %v2835
        %v2837 = vrot.slane %v2804, 5
        %v2838 = vrot.slane %v2837, 4
        %v2839 = vrot.slane %v2684, 5
        %v2840 = vsel %vm2455, %v2838, %v2839
        %v2841 = vrot.slane %v2805, 5
        %v2842 = vrot.slane %v2841, 4
        %v2843 = vrot.slane %v2685, 5
        %v2844 = vsel %vm2455, %v2842, %v2843
        %v2845 = vrot.slane %v2806, 5
        %v2846 = vrot.slane %v2845, 4
        %v2847 = vrot.slane %v2686, 5
        %v2848 = vsel %vm2455, %v2846, %v2847
        %v2849 = vrot.slane %v2807, 5
        %v2850 = vrot.slane %v2849, 4
        %v2851 = vrot.slane %v2687, 5
        %v2852 = vsel %vm2455, %v2850, %v2851
        %v2853 = vrot.slane %v2808, 5
        %v2854 = vrot.slane %v2853, 4
        %v2855 = vrot.slane %v2688, 5
        %v2856 = vsel %vm2455, %v2854, %v2855
        %v2865 = vunpack.c.l.b16 %v2301
        %v2866 = vunpack.c.l.b16 %v2302
        %v2867 = vunpack.c.l.b16 %v2303
        %v2868 = vunpack.c.l.b16 %v2304
        %v2869 = vunpack.c.l.b16 %v2305
        %v2870 = vunpack.c.l.b16 %v2306
        %v2871 = vunpack.c.l.b16 %v2307
        %v2872 = vunpack.c.l.b16 %v2308
        %v2873 = vpack.c.b16 %v2866, %v2865
        %v2874 = vpack.c.b16 %v2868, %v2867
        %v2875 = vpack.c.b16 %v2870, %v2869
        %v2876 = vpack.c.b16 %v2872, %v2871
        %v2881 = vunpack.c.l.b16 %v2330
        %v2882 = vunpack.c.l.b16 %v2344
        %v2883 = vunpack.c.l.b16 %v2358
        %v2884 = vunpack.c.l.b16 %v2372
        %v2885 = vunpack.c.l.b16 %v2386
        %v2886 = vunpack.c.l.b16 %v2400
        %v2887 = vunpack.c.l.b16 %v2414
        %v2888 = vunpack.c.l.b16 %v2428
        %v2889 = vpack.c.b16 %v2882, %v2881
        %v2890 = vpack.c.b16 %v2884, %v2883
        %v2891 = vpack.c.b16 %v2886, %v2885
        %v2892 = vpack.c.b16 %v2888, %v2887
        %v2897 = vunpack.c.l.b16 %v2459
        %v2898 = vunpack.c.l.b16 %v2463
        %v2899 = vunpack.c.l.b16 %v2467
        %v2900 = vunpack.c.l.b16 %v2471
        %v2901 = vunpack.c.l.b16 %v2475
        %v2902 = vunpack.c.l.b16 %v2479
        %v2903 = vunpack.c.l.b16 %v2483
        %v2904 = vunpack.c.l.b16 %v2487
        %v2905 = vpack.c.b16 %v2898, %v2897
        %v2906 = vpack.c.b16 %v2900, %v2899
        %v2907 = vpack.c.b16 %v2902, %v2901
        %v2908 = vpack.c.b16 %v2904, %v2903
        %v2921 = vunpack.c.l.b16 %v2488
        %v2922 = vunpack.c.l.b16 %v2489
        %v2923 = vunpack.c.l.b16 %v2490
        %v2924 = vunpack.c.l.b16 %v2491
        %v2925 = vunpack.c.l.b16 %v2492
        %v2926 = vunpack.c.l.b16 %v2493
        %v2927 = vunpack.c.l.b16 %v2494
        %v2928 = vunpack.c.l.b16 %v2495
        %v2929 = vpack.c.b16 %v2922, %v2921
        %v2930 = vpack.c.b16 %v2924, %v2923
        %v2931 = vpack.c.b16 %v2926, %v2925
        %v2932 = vpack.c.b16 %v2928, %v2927
        %v2937 = vunpack.c.l.b16 %v2517
        %v2938 = vunpack.c.l.b16 %v2531
        %v2939 = vunpack.c.l.b16 %v2545
        %v2940 = vunpack.c.l.b16 %v2559
        %v2941 = vunpack.c.l.b16 %v2573
        %v2942 = vunpack.c.l.b16 %v2587
        %v2943 = vunpack.c.l.b16 %v2601
        %v2944 = vunpack.c.l.b16 %v2615
        %v2945 = vpack.c.b16 %v2938, %v2937
        %v2946 = vpack.c.b16 %v2940, %v2939
        %v2947 = vpack.c.b16 %v2942, %v2941
        %v2948 = vpack.c.b16 %v2944, %v2943
        %v2953 = vunpack.c.l.b16 %v2643
        %v2954 = vunpack.c.l.b16 %v2647
        %v2955 = vunpack.c.l.b16 %v2651
        %v2956 = vunpack.c.l.b16 %v2655
        %v2957 = vunpack.c.l.b16 %v2659
        %v2958 = vunpack.c.l.b16 %v2663
        %v2959 = vunpack.c.l.b16 %v2667
        %v2960 = vunpack.c.l.b16 %v2671
        %v2961 = vpack.c.b16 %v2954, %v2953
        %v2962 = vpack.c.b16 %v2956, %v2955
        %v2963 = vpack.c.b16 %v2958, %v2957
        %v2964 = vpack.c.b16 %v2960, %v2959
        %v2977 = vunpack.c.l.b16 %v2673
        %v2978 = vunpack.c.l.b16 %v2674
        %v2979 = vunpack.c.l.b16 %v2675
        %v2980 = vunpack.c.l.b16 %v2676
        %v2981 = vunpack.c.l.b16 %v2677
        %v2982 = vunpack.c.l.b16 %v2678
        %v2983 = vunpack.c.l.b16 %v2679
        %v2984 = vunpack.c.l.b16 %v2680
        %v2985 = vpack.c.b16 %v2978, %v2977
        %v2986 = vpack.c.b16 %v2980, %v2979
        %v2987 = vpack.c.b16 %v2982, %v2981
        %v2988 = vpack.c.b16 %v2984, %v2983
        %v2993 = vunpack.c.l.b16 %v2702
        %v2994 = vunpack.c.l.b16 %v2716
        %v2995 = vunpack.c.l.b16 %v2730
        %v2996 = vunpack.c.l.b16 %v2744
        %v2997 = vunpack.c.l.b16 %v2758
        %v2998 = vunpack.c.l.b16 %v2772
        %v2999 = vunpack.c.l.b16 %v2786
        %v3000 = vunpack.c.l.b16 %v2800
        %v3001 = vpack.c.b16 %v2994, %v2993
        %v3002 = vpack.c.b16 %v2996, %v2995
        %v3003 = vpack.c.b16 %v2998, %v2997
        %v3004 = vpack.c.b16 %v3000, %v2999
        %v3009 = vunpack.c.l.b16 %v2828
        %v3010 = vunpack.c.l.b16 %v2832
        %v3011 = vunpack.c.l.b16 %v2836
        %v3012 = vunpack.c.l.b16 %v2840
        %v3013 = vunpack.c.l.b16 %v2844
        %v3014 = vunpack.c.l.b16 %v2848
        %v3015 = vunpack.c.l.b16 %v2852
        %v3016 = vunpack.c.l.b16 %v2856
        %v3017 = vpack.c.b16 %v3010, %v3009
        %v3018 = vpack.c.b16 %v3012, %v3011
        %v3019 = vpack.c.b16 %v3014, %v3013
        %v3020 = vpack.c.b16 %v3016, %v3015
        %v3025 = vld [vmem:[#allocation3] sm:$0xf]
        %v3026 = vld [vmem:[#allocation3 + $0x4] sm:$0xf]
        %v3027 = vld [vmem:[#allocation3 + $0x8] sm:$0xf]
        %v3028 = vld [vmem:[#allocation3 + $0xc] sm:$0xf]
        %v3029 = vld [vmem:[#allocation3 + $0x10] sm:$0xf]
        %v3030 = vld [vmem:[#allocation3 + $0x14] sm:$0xf]
        %v3031 = vld [vmem:[#allocation3 + $0x18] sm:$0xf]
        %v3032 = vld [vmem:[#allocation3 + $0x1c] sm:$0xf]
        %v3033 = vld [vmem:[#allocation3 + $0x20] sm:$0xf]
        %v3034 = vld [vmem:[#allocation3 + $0x24] sm:$0xf]
        %v3035 = vld [vmem:[#allocation3 + $0x28] sm:$0xf]
        %v3036 = vld [vmem:[#allocation3 + $0x2c] sm:$0xf]
        %v3037 = vld [vmem:[#allocation3 + $0x30] sm:$0xf]
        %v3038 = vld [vmem:[#allocation3 + $0x34] sm:$0xf]
        %v3039 = vld [vmem:[#allocation3 + $0x38] sm:$0xf]
        %v3040 = vld [vmem:[#allocation3 + $0x3c] sm:$0xf]
        %v3041 = vld [vmem:[#allocation3 + $0x40] sm:$0xf]
        %v3042 = vld [vmem:[#allocation3 + $0x44] sm:$0xf]
        %v3043 = vld [vmem:[#allocation3 + $0x48] sm:$0xf]
        %v3044 = vld [vmem:[#allocation3 + $0x4c] sm:$0xf]
        %v3045 = vld [vmem:[#allocation3 + $0x50] sm:$0xf]
        %v3046 = vld [vmem:[#allocation3 + $0x54] sm:$0xf]
        %v3047 = vld [vmem:[#allocation3 + $0x58] sm:$0xf]
        %v3048 = vld [vmem:[#allocation3 + $0x5c] sm:$0xf]
        %v3049 = vld [vmem:[#allocation3 + $0x60] sm:$0xf]
        %v3050 = vld [vmem:[#allocation3 + $0x64] sm:$0xf]
        %v3051 = vld [vmem:[#allocation3 + $0x68] sm:$0xf]
        %v3052 = vld [vmem:[#allocation3 + $0x6c] sm:$0xf]
        %v3053 = vld [vmem:[#allocation3 + $0x70] sm:$0xf]
        %v3054 = vld [vmem:[#allocation3 + $0x74] sm:$0xf]
        %v3055 = vld [vmem:[#allocation3 + $0x78] sm:$0xf]
        %v3056 = vld [vmem:[#allocation3 + $0x7c] sm:$0xf]
        %v3057 = vld [vmem:[#allocation3 + $0x80] sm:$0xf]
        %v3058 = vld [vmem:[#allocation3 + $0x84] sm:$0xf]
        %v3059 = vld [vmem:[#allocation3 + $0x88] sm:$0xf]
        %v3060 = vld [vmem:[#allocation3 + $0x8c] sm:$0xf]
        %v3061 = vld [vmem:[#allocation3 + $0x90] sm:$0xf]
        %v3062 = vld [vmem:[#allocation3 + $0x94] sm:$0xf]
        %v3063 = vld [vmem:[#allocation3 + $0x98] sm:$0xf]
        %v3064 = vld [vmem:[#allocation3 + $0x9c] sm:$0xf]
        %v3065 = vld [vmem:[#allocation3 + $0xa0] sm:$0xf]
        %v3066 = vld [vmem:[#allocation3 + $0xa4] sm:$0xf]
        %v3067 = vld [vmem:[#allocation3 + $0xa8] sm:$0xf]
        %v3068 = vld [vmem:[#allocation3 + $0xac] sm:$0xf]
        %v3069 = vld [vmem:[#allocation3 + $0xb0] sm:$0xf]
        %v3070 = vld [vmem:[#allocation3 + $0xb4] sm:$0xf]
        %v3071 = vld [vmem:[#allocation3 + $0xb8] sm:$0xf]
        %v3072 = vld [vmem:[#allocation3 + $0xbc] sm:$0xf]
        %v3073 = vld [vmem:[#allocation3 + $0xc0] sm:$0xf]
        %v3074 = vld [vmem:[#allocation3 + $0xc4] sm:$0xf]
        %v3075 = vld [vmem:[#allocation3 + $0xc8] sm:$0xf]
        %v3076 = vld [vmem:[#allocation3 + $0xcc] sm:$0xf]
        %v3077 = vld [vmem:[#allocation3 + $0xd0] sm:$0xf]
        %v3078 = vld [vmem:[#allocation3 + $0xd4] sm:$0xf]
        %v3079 = vld [vmem:[#allocation3 + $0xd8] sm:$0xf]
        %v3080 = vld [vmem:[#allocation3 + $0xdc] sm:$0xf]
        %v3081 = vld [vmem:[#allocation3 + $0xe0] sm:$0xf]
        %v3082 = vld [vmem:[#allocation3 + $0xe4] sm:$0xf]
        %v3083 = vld [vmem:[#allocation3 + $0xe8] sm:$0xf]
        %v3084 = vld [vmem:[#allocation3 + $0xec] sm:$0xf]
        %v3085 = vld [vmem:[#allocation3 + $0xf0] sm:$0xf]
        %v3086 = vld [vmem:[#allocation3 + $0xf4] sm:$0xf]
        %v3087 = vld [vmem:[#allocation3 + $0xf8] sm:$0xf]
        %v3088 = vld [vmem:[#allocation3 + $0xfc] sm:$0xf]
        %v3089 = vld [vmem:[#allocation3 + $0x100] sm:$0xf]
        %v3090 = vld [vmem:[#allocation3 + $0x104] sm:$0xf]
        %v3091 = vld [vmem:[#allocation3 + $0x108] sm:$0xf]
        %v3092 = vld [vmem:[#allocation3 + $0x10c] sm:$0xf]
        %v3093 = vld [vmem:[#allocation3 + $0x110] sm:$0xf]
        %v3094 = vld [vmem:[#allocation3 + $0x114] sm:$0xf]
        %v3095 = vld [vmem:[#allocation3 + $0x118] sm:$0xf]
        %v3096 = vld [vmem:[#allocation3 + $0x11c] sm:$0xf]
        %v3097 = vld [vmem:[#allocation3 + $0x120] sm:$0xf]
        %v3098 = vld [vmem:[#allocation3 + $0x124] sm:$0xf]
        %v3099 = vld [vmem:[#allocation3 + $0x128] sm:$0xf]
        %v3100 = vld [vmem:[#allocation3 + $0x12c] sm:$0xf]
        %v3101 = vld [vmem:[#allocation3 + $0x130] sm:$0xf]
        %v3102 = vld [vmem:[#allocation3 + $0x134] sm:$0xf]
        %v3103 = vld [vmem:[#allocation3 + $0x138] sm:$0xf]
        %v3104 = vld [vmem:[#allocation3 + $0x13c] sm:$0xf]
        %v3105 = vld [vmem:[#allocation3 + $0x140] sm:$0xf]
        %v3106 = vld [vmem:[#allocation3 + $0x144] sm:$0xf]
        %v3107 = vld [vmem:[#allocation3 + $0x148] sm:$0xf]
        %v3108 = vld [vmem:[#allocation3 + $0x14c] sm:$0xf]
        %v3109 = vld [vmem:[#allocation3 + $0x150] sm:$0xf]
        %v3110 = vld [vmem:[#allocation3 + $0x154] sm:$0xf]
        %v3111 = vld [vmem:[#allocation3 + $0x158] sm:$0xf]
        %v3112 = vld [vmem:[#allocation3 + $0x15c] sm:$0xf]
        %v3113 = vld [vmem:[#allocation3 + $0x160] sm:$0xf]
        %v3114 = vld [vmem:[#allocation3 + $0x164] sm:$0xf]
        %v3115 = vld [vmem:[#allocation3 + $0x168] sm:$0xf]
        %v3116 = vld [vmem:[#allocation3 + $0x16c] sm:$0xf]
        %v3117 = vld [vmem:[#allocation3 + $0x170] sm:$0xf]
        %v3118 = vld [vmem:[#allocation3 + $0x174] sm:$0xf]
        %v3119 = vld [vmem:[#allocation3 + $0x178] sm:$0xf]
        %v3120 = vld [vmem:[#allocation3 + $0x17c] sm:$0xf]
        %v3121 = vld [vmem:[#allocation3 + $0x180] sm:$0xf]
        %v3122 = vld [vmem:[#allocation3 + $0x184] sm:$0xf]
        %v3123 = vld [vmem:[#allocation3 + $0x188] sm:$0xf]
        %v3124 = vld [vmem:[#allocation3 + $0x18c] sm:$0xf]
        %v3125 = vld [vmem:[#allocation3 + $0x190] sm:$0xf]
        %v3126 = vld [vmem:[#allocation3 + $0x194] sm:$0xf]
        %v3127 = vld [vmem:[#allocation3 + $0x198] sm:$0xf]
        %v3128 = vld [vmem:[#allocation3 + $0x19c] sm:$0xf]
        %v3129 = vld [vmem:[#allocation3 + $0x1a0] sm:$0xf]
        %v3130 = vld [vmem:[#allocation3 + $0x1a4] sm:$0xf]
        %v3131 = vld [vmem:[#allocation3 + $0x1a8] sm:$0xf]
        %v3132 = vld [vmem:[#allocation3 + $0x1ac] sm:$0xf]
        %v3133 = vld [vmem:[#allocation3 + $0x1b0] sm:$0xf]
        %v3134 = vld [vmem:[#allocation3 + $0x1b4] sm:$0xf]
        %v3135 = vld [vmem:[#allocation3 + $0x1b8] sm:$0xf]
        %v3136 = vld [vmem:[#allocation3 + $0x1bc] sm:$0xf]
        %v3137 = vld [vmem:[#allocation3 + $0x1c0] sm:$0xf]
        %v3138 = vld [vmem:[#allocation3 + $0x1c4] sm:$0xf]
        %v3139 = vld [vmem:[#allocation3 + $0x1c8] sm:$0xf]
        %v3140 = vld [vmem:[#allocation3 + $0x1cc] sm:$0xf]
        %v3141 = vld [vmem:[#allocation3 + $0x1d0] sm:$0xf]
        %v3142 = vld [vmem:[#allocation3 + $0x1d4] sm:$0xf]
        %v3143 = vld [vmem:[#allocation3 + $0x1d8] sm:$0xf]
        %v3144 = vld [vmem:[#allocation3 + $0x1dc] sm:$0xf]
        %v3145 = vld [vmem:[#allocation3 + $0x1e0] sm:$0xf]
        %v3146 = vld [vmem:[#allocation3 + $0x1e4] sm:$0xf]
        %v3147 = vld [vmem:[#allocation3 + $0x1e8] sm:$0xf]
        %v3148 = vld [vmem:[#allocation3 + $0x1ec] sm:$0xf]
        %v3149 = vld [vmem:[#allocation3 + $0x1f0] sm:$0xf]
        %v3150 = vld [vmem:[#allocation3 + $0x1f4] sm:$0xf]
        %v3151 = vld [vmem:[#allocation3 + $0x1f8] sm:$0xf]
        %v3152 = vld [vmem:[#allocation3 + $0x1fc] sm:$0xf]
        %v3153 = vld [vmem:[#allocation3 + $0x200] sm:$0xf]
        %v3154 = vld [vmem:[#allocation3 + $0x204] sm:$0xf]
        %v3155 = vld [vmem:[#allocation3 + $0x208] sm:$0xf]
        %v3156 = vld [vmem:[#allocation3 + $0x20c] sm:$0xf]
        %v3157 = vld [vmem:[#allocation3 + $0x210] sm:$0xf]
        %v3158 = vld [vmem:[#allocation3 + $0x214] sm:$0xf]
        %v3159 = vld [vmem:[#allocation3 + $0x218] sm:$0xf]
        %v3160 = vld [vmem:[#allocation3 + $0x21c] sm:$0xf]
        %v3161 = vld [vmem:[#allocation3 + $0x220] sm:$0xf]
        %v3162 = vld [vmem:[#allocation3 + $0x224] sm:$0xf]
        %v3163 = vld [vmem:[#allocation3 + $0x228] sm:$0xf]
        %v3164 = vld [vmem:[#allocation3 + $0x22c] sm:$0xf]
        %v3165 = vld [vmem:[#allocation3 + $0x230] sm:$0xf]
        %v3166 = vld [vmem:[#allocation3 + $0x234] sm:$0xf]
        %v3167 = vld [vmem:[#allocation3 + $0x238] sm:$0xf]
        %v3168 = vld [vmem:[#allocation3 + $0x23c] sm:$0xf]
        %v3313 = vunpack.c.l.b16 %v3025
        %v3314 = vunpack.c.l.b16 %v3026
        %v3315 = vunpack.c.l.b16 %v3027
        %v3316 = vunpack.c.l.b16 %v3028
        %v3317 = vunpack.c.l.b16 %v3029
        %v3318 = vunpack.c.l.b16 %v3030
        %v3319 = vunpack.c.l.b16 %v3031
        %v3320 = vunpack.c.l.b16 %v3032
        %v3321 = vunpack.c.l.b16 %v3033
        %v3322 = vunpack.c.l.b16 %v3034
        %v3323 = vunpack.c.l.b16 %v3035
        %v3324 = vunpack.c.l.b16 %v3036
        %v3325 = vunpack.c.l.b16 %v3037
        %v3326 = vunpack.c.l.b16 %v3038
        %v3327 = vunpack.c.l.b16 %v3039
        %v3328 = vunpack.c.l.b16 %v3040
        %v3329 = vunpack.c.l.b16 %v3041
        %v3330 = vunpack.c.l.b16 %v3042
        %v3331 = vunpack.c.l.b16 %v3043
        %v3332 = vunpack.c.l.b16 %v3044
        %v3333 = vunpack.c.l.b16 %v3045
        %v3334 = vunpack.c.l.b16 %v3046
        %v3335 = vunpack.c.l.b16 %v3047
        %v3336 = vunpack.c.l.b16 %v3048
        %v3337 = vunpack.c.l.b16 %v3049
        %v3338 = vunpack.c.l.b16 %v3050
        %v3339 = vunpack.c.l.b16 %v3051
        %v3340 = vunpack.c.l.b16 %v3052
        %v3341 = vunpack.c.l.b16 %v3053
        %v3342 = vunpack.c.l.b16 %v3054
        %v3343 = vunpack.c.l.b16 %v3055
        %v3344 = vunpack.c.l.b16 %v3056
        %v3345 = vunpack.c.l.b16 %v3057
        %v3346 = vunpack.c.l.b16 %v3058
        %v3347 = vunpack.c.l.b16 %v3059
        %v3348 = vunpack.c.l.b16 %v3060
        %v3349 = vunpack.c.l.b16 %v3061
        %v3350 = vunpack.c.l.b16 %v3062
        %v3351 = vunpack.c.l.b16 %v3063
        %v3352 = vunpack.c.l.b16 %v3064
        %v3353 = vunpack.c.l.b16 %v3065
        %v3354 = vunpack.c.l.b16 %v3066
        %v3355 = vunpack.c.l.b16 %v3067
        %v3356 = vunpack.c.l.b16 %v3068
        %v3357 = vunpack.c.l.b16 %v3069
        %v3358 = vunpack.c.l.b16 %v3070
        %v3359 = vunpack.c.l.b16 %v3071
        %v3360 = vunpack.c.l.b16 %v3072
        %v3361 = vunpack.c.l.b16 %v3073
        %v3362 = vunpack.c.l.b16 %v3074
        %v3363 = vunpack.c.l.b16 %v3075
        %v3364 = vunpack.c.l.b16 %v3076
        %v3365 = vunpack.c.l.b16 %v3077
        %v3366 = vunpack.c.l.b16 %v3078
        %v3367 = vunpack.c.l.b16 %v3079
        %v3368 = vunpack.c.l.b16 %v3080
        %v3369 = vunpack.c.l.b16 %v3081
        %v3370 = vunpack.c.l.b16 %v3082
        %v3371 = vunpack.c.l.b16 %v3083
        %v3372 = vunpack.c.l.b16 %v3084
        %v3373 = vunpack.c.l.b16 %v3085
        %v3374 = vunpack.c.l.b16 %v3086
        %v3375 = vunpack.c.l.b16 %v3087
        %v3376 = vunpack.c.l.b16 %v3088
        %v3377 = vunpack.c.l.b16 %v3089
        %v3378 = vunpack.c.l.b16 %v3090
        %v3379 = vunpack.c.l.b16 %v3091
        %v3380 = vunpack.c.l.b16 %v3092
        %v3381 = vunpack.c.l.b16 %v3093
        %v3382 = vunpack.c.l.b16 %v3094
        %v3383 = vunpack.c.l.b16 %v3095
        %v3384 = vunpack.c.l.b16 %v3096
        %v3385 = vunpack.c.l.b16 %v3097
        %v3386 = vunpack.c.l.b16 %v3098
        %v3387 = vunpack.c.l.b16 %v3099
        %v3388 = vunpack.c.l.b16 %v3100
        %v3389 = vunpack.c.l.b16 %v3101
        %v3390 = vunpack.c.l.b16 %v3102
        %v3391 = vunpack.c.l.b16 %v3103
        %v3392 = vunpack.c.l.b16 %v3104
        %v3393 = vunpack.c.l.b16 %v3105
        %v3394 = vunpack.c.l.b16 %v3106
        %v3395 = vunpack.c.l.b16 %v3107
        %v3396 = vunpack.c.l.b16 %v3108
        %v3397 = vunpack.c.l.b16 %v3109
        %v3398 = vunpack.c.l.b16 %v3110
        %v3399 = vunpack.c.l.b16 %v3111
        %v3400 = vunpack.c.l.b16 %v3112
        %v3401 = vunpack.c.l.b16 %v3113
        %v3402 = vunpack.c.l.b16 %v3114
        %v3403 = vunpack.c.l.b16 %v3115
        %v3404 = vunpack.c.l.b16 %v3116
        %v3405 = vunpack.c.l.b16 %v3117
        %v3406 = vunpack.c.l.b16 %v3118
        %v3407 = vunpack.c.l.b16 %v3119
        %v3408 = vunpack.c.l.b16 %v3120
        %v3409 = vunpack.c.l.b16 %v3121
        %v3410 = vunpack.c.l.b16 %v3122
        %v3411 = vunpack.c.l.b16 %v3123
        %v3412 = vunpack.c.l.b16 %v3124
        %v3413 = vunpack.c.l.b16 %v3125
        %v3414 = vunpack.c.l.b16 %v3126
        %v3415 = vunpack.c.l.b16 %v3127
        %v3416 = vunpack.c.l.b16 %v3128
        %v3417 = vunpack.c.l.b16 %v3129
        %v3418 = vunpack.c.l.b16 %v3130
        %v3419 = vunpack.c.l.b16 %v3131
        %v3420 = vunpack.c.l.b16 %v3132
        %v3421 = vunpack.c.l.b16 %v3133
        %v3422 = vunpack.c.l.b16 %v3134
        %v3423 = vunpack.c.l.b16 %v3135
        %v3424 = vunpack.c.l.b16 %v3136
        %v3425 = vunpack.c.l.b16 %v3137
        %v3426 = vunpack.c.l.b16 %v3138
        %v3427 = vunpack.c.l.b16 %v3139
        %v3428 = vunpack.c.l.b16 %v3140
        %v3429 = vunpack.c.l.b16 %v3141
        %v3430 = vunpack.c.l.b16 %v3142
        %v3431 = vunpack.c.l.b16 %v3143
        %v3432 = vunpack.c.l.b16 %v3144
        %v3433 = vunpack.c.l.b16 %v3145
        %v3434 = vunpack.c.l.b16 %v3146
        %v3435 = vunpack.c.l.b16 %v3147
        %v3436 = vunpack.c.l.b16 %v3148
        %v3437 = vunpack.c.l.b16 %v3149
        %v3438 = vunpack.c.l.b16 %v3150
        %v3439 = vunpack.c.l.b16 %v3151
        %v3440 = vunpack.c.l.b16 %v3152
        %v3441 = vunpack.c.l.b16 %v3153
        %v3442 = vunpack.c.l.b16 %v3154
        %v3443 = vunpack.c.l.b16 %v3155
        %v3444 = vunpack.c.l.b16 %v3156
        %v3445 = vunpack.c.l.b16 %v3157
        %v3446 = vunpack.c.l.b16 %v3158
        %v3447 = vunpack.c.l.b16 %v3159
        %v3448 = vunpack.c.l.b16 %v3160
        %v3449 = vunpack.c.l.b16 %v3161
        %v3450 = vunpack.c.l.b16 %v3162
        %v3451 = vunpack.c.l.b16 %v3163
        %v3452 = vunpack.c.l.b16 %v3164
        %v3453 = vunpack.c.l.b16 %v3165
        %v3454 = vunpack.c.l.b16 %v3166
        %v3455 = vunpack.c.l.b16 %v3167
        %v3456 = vunpack.c.l.b16 %v3168
        %v3457 = vpack.c.b16 %v3314, %v3313
        %v3458 = vpack.c.b16 %v3316, %v3315
        %v3459 = vpack.c.b16 %v3318, %v3317
        %v3460 = vpack.c.b16 %v3320, %v3319
        %v3461 = vpack.c.b16 %v3322, %v3321
        %v3462 = vpack.c.b16 %v3324, %v3323
        %v3463 = vpack.c.b16 %v3326, %v3325
        %v3464 = vpack.c.b16 %v3328, %v3327
        %v3465 = vpack.c.b16 %v3330, %v3329
        %v3466 = vpack.c.b16 %v3332, %v3331
        %v3467 = vpack.c.b16 %v3334, %v3333
        %v3468 = vpack.c.b16 %v3336, %v3335
        %v3469 = vpack.c.b16 %v3338, %v3337
        %v3470 = vpack.c.b16 %v3340, %v3339
        %v3471 = vpack.c.b16 %v3342, %v3341
        %v3472 = vpack.c.b16 %v3344, %v3343
        %v3473 = vpack.c.b16 %v3346, %v3345
        %v3474 = vpack.c.b16 %v3348, %v3347
        %v3475 = vpack.c.b16 %v3350, %v3349
        %v3476 = vpack.c.b16 %v3352, %v3351
        %v3477 = vpack.c.b16 %v3354, %v3353
        %v3478 = vpack.c.b16 %v3356, %v3355
        %v3479 = vpack.c.b16 %v3358, %v3357
        %v3480 = vpack.c.b16 %v3360, %v3359
        %v3481 = vpack.c.b16 %v3362, %v3361
        %v3482 = vpack.c.b16 %v3364, %v3363
        %v3483 = vpack.c.b16 %v3366, %v3365
        %v3484 = vpack.c.b16 %v3368, %v3367
        %v3485 = vpack.c.b16 %v3370, %v3369
        %v3486 = vpack.c.b16 %v3372, %v3371
        %v3487 = vpack.c.b16 %v3374, %v3373
        %v3488 = vpack.c.b16 %v3376, %v3375
        %v3489 = vpack.c.b16 %v3378, %v3377
        %v3490 = vpack.c.b16 %v3380, %v3379
        %v3491 = vpack.c.b16 %v3382, %v3381
        %v3492 = vpack.c.b16 %v3384, %v3383
        %v3493 = vpack.c.b16 %v3386, %v3385
        %v3494 = vpack.c.b16 %v3388, %v3387
        %v3495 = vpack.c.b16 %v3390, %v3389
        %v3496 = vpack.c.b16 %v3392, %v3391
        %v3497 = vpack.c.b16 %v3394, %v3393
        %v3498 = vpack.c.b16 %v3396, %v3395
        %v3499 = vpack.c.b16 %v3398, %v3397
        %v3500 = vpack.c.b16 %v3400, %v3399
        %v3501 = vpack.c.b16 %v3402, %v3401
        %v3502 = vpack.c.b16 %v3404, %v3403
        %v3503 = vpack.c.b16 %v3406, %v3405
        %v3504 = vpack.c.b16 %v3408, %v3407
        %v3505 = vpack.c.b16 %v3410, %v3409
        %v3506 = vpack.c.b16 %v3412, %v3411
        %v3507 = vpack.c.b16 %v3414, %v3413
        %v3508 = vpack.c.b16 %v3416, %v3415
        %v3509 = vpack.c.b16 %v3418, %v3417
        %v3510 = vpack.c.b16 %v3420, %v3419
        %v3511 = vpack.c.b16 %v3422, %v3421
        %v3512 = vpack.c.b16 %v3424, %v3423
        %v3513 = vpack.c.b16 %v3426, %v3425
        %v3514 = vpack.c.b16 %v3428, %v3427
        %v3515 = vpack.c.b16 %v3430, %v3429
        %v3516 = vpack.c.b16 %v3432, %v3431
        %v3517 = vpack.c.b16 %v3434, %v3433
        %v3518 = vpack.c.b16 %v3436, %v3435
        %v3519 = vpack.c.b16 %v3438, %v3437
        %v3520 = vpack.c.b16 %v3440, %v3439
        %v3521 = vpack.c.b16 %v3442, %v3441
        %v3522 = vpack.c.b16 %v3444, %v3443
        %v3523 = vpack.c.b16 %v3446, %v3445
        %v3524 = vpack.c.b16 %v3448, %v3447
        %v3525 = vpack.c.b16 %v3450, %v3449
        %v3526 = vpack.c.b16 %v3452, %v3451
        %v3527 = vpack.c.b16 %v3454, %v3453
        %v3528 = vpack.c.b16 %v3456, %v3455
        %3601 = vmatprep.subr.bf16.mxu0 0
        %3602 = vmatpush1.bf16.msra.mxu0 %v3457
        %3603 = vmatprep.subr.bf16.mxu0 0
        %3604 = vmatpush1.bf16.msra.mxu0 %v3458
        %3605 = vmatprep.subr.bf16.mxu0 0
        %3606 = vmatpush1.bf16.msra.mxu0 %v3459
        %3607 = vmatprep.subr.bf16.mxu0 0
        %3608 = vmatpush1.bf16.msra.mxu0 %v3460
        %3609 = vmatprep.subr.bf16.mxu0 0
        %3610 = vmatpush1.bf16.msra.mxu0 %v3461
        %3611 = vmatprep.subr.bf16.mxu0 0
        %3612 = vmatpush1.bf16.msra.mxu0 %v3462
        %3613 = vmatprep.subr.bf16.mxu0 0
        %3614 = vmatpush1.bf16.msra.mxu0 %v3463
        %3615 = vmatprep.subr.bf16.mxu0 0
        %3616 = vmatpush1.bf16.msra.mxu0 %v3464
        %3617 = vmatprep.subr.bf16.mxu0 0
        %3618 = vmatpush1.bf16.msra.mxu0 %v3465
        %3619 = vmatprep.subr.bf16.mxu0 0
        %3620 = vmatpush1.bf16.msra.mxu0 %v3466
        %3621 = vmatprep.subr.bf16.mxu0 0
        %3622 = vmatpush1.bf16.msra.mxu0 %v3467
        %3623 = vmatprep.subr.bf16.mxu0 0
        %3624 = vmatpush1.bf16.msra.mxu0 %v3468
        %3625 = vmatprep.subr.bf16.mxu0 0
        %3626 = vmatpush1.bf16.msra.mxu0 %v3469
        %3627 = vmatprep.subr.bf16.mxu0 0
        %3628 = vmatpush1.bf16.msra.mxu0 %v3470
        %3629 = vmatprep.subr.bf16.mxu0 0
        %3630 = vmatpush1.bf16.msra.mxu0 %v3471
        %3631 = vmatprep.subr.bf16.mxu0 0
        %3632 = vmatpush1.bf16.msra.mxu0 %v3472
        %3633 = vmatprep.mubr.bf16.mxu0 %v2889
        %3634 = vmatmul.mubr.bf16.gmra.mrb[0].mxu0 %v2873
        %v3635 = vpop.f32.mrb[0].mxu0
        %v3636 = vadd.f32 0.0, %v3635
        %v3637 = vpop.f32.mrb[0].mxu0
        %v3638 = vpop.f32.mrb[0].mxu0
        %v3639 = vadd.f32 0.0, %v3638
        %v3640 = vpop.f32.mrb[0].mxu0
        %3641 = vmatprep.mubr.bf16.mxu0 %v2890
        %3642 = vmatmul.mubr.bf16.gmra.mrb[0].mxu0 %v2874
        %v3643 = vpop.f32.mrb[0].mxu0
        %v3644 = vadd.f32 0.0, %v3643
        %v3645 = vpop.f32.mrb[0].mxu0
        %v3646 = vpop.f32.mrb[0].mxu0
        %v3647 = vadd.f32 0.0, %v3646
        %v3648 = vpop.f32.mrb[0].mxu0
        %3649 = vmatprep.mubr.bf16.mxu0 %v2891
        %3650 = vmatmul.mubr.bf16.gmra.mrb[0].mxu0 %v2875
        %v3651 = vpop.f32.mrb[0].mxu0
        %v3652 = vadd.f32 0.0, %v3651
        %v3653 = vpop.f32.mrb[0].mxu0
        %v3654 = vpop.f32.mrb[0].mxu0
        %v3655 = vadd.f32 0.0, %v3654
        %v3656 = vpop.f32.mrb[0].mxu0
        %3657 = vmatprep.mubr.bf16.mxu0 %v2892
        %3658 = vmatmul.mubr.bf16.gmra.mrb[0].mxu0 %v2876
        %v3659 = vpop.f32.mrb[0].mxu0
        %v3660 = vadd.f32 0.0, %v3659
        %v3661 = vpop.f32.mrb[0].mxu0
        %v3662 = vpop.f32.mrb[0].mxu0
        %v3663 = vadd.f32 0.0, %v3662
        %v3664 = vpop.f32.mrb[0].mxu0
        %3665 = vdwg.mxu0
        %3666 = vmatprep.subr.bf16.mxu0 0
        %3667 = vmatpush1.bf16.msra.mxu0 %v3473
        %3668 = vmatprep.subr.bf16.mxu0 0
        %3669 = vmatpush1.bf16.msra.mxu0 %v3474
        %3670 = vmatprep.subr.bf16.mxu0 0
        %3671 = vmatpush1.bf16.msra.mxu0 %v3475
        %3672 = vmatprep.subr.bf16.mxu0 0
        %3673 = vmatpush1.bf16.msra.mxu0 %v3476
        %3674 = vmatprep.subr.bf16.mxu0 0
        %3675 = vmatpush1.bf16.msra.mxu0 %v3477
        %3676 = vmatprep.subr.bf16.mxu0 0
        %3677 = vmatpush1.bf16.msra.mxu0 %v3478
        %3678 = vmatprep.subr.bf16.mxu0 0
        %3679 = vmatpush1.bf16.msra.mxu0 %v3479
        %3680 = vmatprep.subr.bf16.mxu0 0
        %3681 = vmatpush1.bf16.msra.mxu0 %v3480
        %3682 = vmatprep.subr.bf16.mxu0 0
        %3683 = vmatpush1.bf16.msra.mxu0 %v3481
        %3684 = vmatprep.subr.bf16.mxu0 0
        %3685 = vmatpush1.bf16.msra.mxu0 %v3482
        %3686 = vmatprep.subr.bf16.mxu0 0
        %3687 = vmatpush1.bf16.msra.mxu0 %v3483
        %3688 = vmatprep.subr.bf16.mxu0 0
        %3689 = vmatpush1.bf16.msra.mxu0 %v3484
        %3690 = vmatprep.subr.bf16.mxu0 0
        %3691 = vmatpush1.bf16.msra.mxu0 %v3485
        %3692 = vmatprep.subr.bf16.mxu0 0
        %3693 = vmatpush1.bf16.msra.mxu0 %v3486
        %3694 = vmatprep.subr.bf16.mxu0 0
        %3695 = vmatpush1.bf16.msra.mxu0 %v3487
        %3696 = vmatprep.subr.bf16.mxu0 0
        %3697 = vmatpush1.bf16.msra.mxu0 %v3488
        %3698 = vmatprep.mubr.bf16.mxu0 %v2929
        %3699 = vmatmul.mubr.bf16.gmra.mrb[0].mxu0 %v2905
        %v3700 = vpop.f32.mrb[0].mxu0
        %v3701 = vadd.f32 %v3636, %v3700
        %v3702 = vpop.f32.mrb[0].mxu0
        %v3703 = vpop.f32.mrb[0].mxu0
        %v3704 = vadd.f32 %v3639, %v3703
        %v3705 = vpop.f32.mrb[0].mxu0
        %3706 = vmatprep.mubr.bf16.mxu0 %v2930
        %3707 = vmatmul.mubr.bf16.gmra.mrb[0].mxu0 %v2906
        %v3708 = vpop.f32.mrb[0].mxu0
        %v3709 = vadd.f32 %v3644, %v3708
        %v3710 = vpop.f32.mrb[0].mxu0
        %v3711 = vpop.f32.mrb[0].mxu0
        %v3712 = vadd.f32 %v3647, %v3711
        %v3713 = vpop.f32.mrb[0].mxu0
        %3714 = vmatprep.mubr.bf16.mxu0 %v2931
        %3715 = vmatmul.mubr.bf16.gmra.mrb[0].mxu0 %v2907
        %v3716 = vpop.f32.mrb[0].mxu0
        %v3717 = vadd.f32 %v3652, %v3716
        %v3718 = vpop.f32.mrb[0].mxu0
        %v3719 = vpop.f32.mrb[0].mxu0
        %v3720 = vadd.f32 %v3655, %v3719
        %v3721 = vpop.f32.mrb[0].mxu0
        %3722 = vmatprep.mubr.bf16.mxu0 %v2932
        %3723 = vmatmul.mubr.bf16.gmra.mrb[0].mxu0 %v2908
        %v3724 = vpop.f32.mrb[0].mxu0
        %v3725 = vadd.f32 %v3660, %v3724
        %v3726 = vpop.f32.mrb[0].mxu0
        %v3727 = vpop.f32.mrb[0].mxu0
        %v3728 = vadd.f32 %v3663, %v3727
        %v3729 = vpop.f32.mrb[0].mxu0
        %3730 = vdwg.mxu0
        %3731 = vmatprep.subr.bf16.mxu0 0
        %3732 = vmatpush1.bf16.msra.mxu0 %v3489
        %3733 = vmatprep.subr.bf16.mxu0 0
        %3734 = vmatpush1.bf16.msra.mxu0 %v3490
        %3735 = vmatprep.subr.bf16.mxu0 0
        %3736 = vmatpush1.bf16.msra.mxu0 %v3491
        %3737 = vmatprep.subr.bf16.mxu0 0
        %3738 = vmatpush1.bf16.msra.mxu0 %v3492
        %3739 = vmatprep.subr.bf16.mxu0 0
        %3740 = vmatpush1.bf16.msra.mxu0 %v3493
        %3741 = vmatprep.subr.bf16.mxu0 0
        %3742 = vmatpush1.bf16.msra.mxu0 %v3494
        %3743 = vmatprep.subr.bf16.mxu0 0
        %3744 = vmatpush1.bf16.msra.mxu0 %v3495
        %3745 = vmatprep.subr.bf16.mxu0 0
        %3746 = vmatpush1.bf16.msra.mxu0 %v3496
        %3747 = vmatprep.subr.bf16.mxu0 0
        %3748 = vmatpush1.bf16.msra.mxu0 %v3497
        %3749 = vmatprep.subr.bf16.mxu0 0
        %3750 = vmatpush1.bf16.msra.mxu0 %v3498
        %3751 = vmatprep.subr.bf16.mxu0 0
        %3752 = vmatpush1.bf16.msra.mxu0 %v3499
        %3753 = vmatprep.subr.bf16.mxu0 0
        %3754 = vmatpush1.bf16.msra.mxu0 %v3500
        %3755 = vmatprep.subr.bf16.mxu0 0
        %3756 = vmatpush1.bf16.msra.mxu0 %v3501
        %3757 = vmatprep.subr.bf16.mxu0 0
        %3758 = vmatpush1.bf16.msra.mxu0 %v3502
        %3759 = vmatprep.subr.bf16.mxu0 0
        %3760 = vmatpush1.bf16.msra.mxu0 %v3503
        %3761 = vmatprep.subr.bf16.mxu0 0
        %3762 = vmatpush1.bf16.msra.mxu0 %v3504
        %3763 = vmatprep.mubr.bf16.mxu0 %v2961
        %3764 = vmatmul.mubr.bf16.gmra.mrb[0].mxu0 %v2945
        %v3765 = vpop.f32.mrb[0].mxu0
        %v3766 = vadd.f32 %v3701, %v3765
        %v3767 = vpop.f32.mrb[0].mxu0
        %v3768 = vpop.f32.mrb[0].mxu0
        %v3769 = vadd.f32 %v3704, %v3768
        %v3770 = vpop.f32.mrb[0].mxu0
        %3771 = vmatprep.mubr.bf16.mxu0 %v2962
        %3772 = vmatmul.mubr.bf16.gmra.mrb[0].mxu0 %v2946
        %v3773 = vpop.f32.mrb[0].mxu0
        %v3774 = vadd.f32 %v3709, %v3773
        %v3775 = vpop.f32.mrb[0].mxu0
        %v3776 = vpop.f32.mrb[0].mxu0
        %v3777 = vadd.f32 %v3712, %v3776
        %v3778 = vpop.f32.mrb[0].mxu0
        %3779 = vmatprep.mubr.bf16.mxu0 %v2963
        %3780 = vmatmul.mubr.bf16.gmra.mrb[0].mxu0 %v2947
        %v3781 = vpop.f32.mrb[0].mxu0
        %v3782 = vadd.f32 %v3717, %v3781
        %v3783 = vpop.f32.mrb[0].mxu0
        %v3784 = vpop.f32.mrb[0].mxu0
        %v3785 = vadd.f32 %v3720, %v3784
        %v3786 = vpop.f32.mrb[0].mxu0
        %3787 = vmatprep.mubr.bf16.mxu0 %v2964
        %3788 = vmatmul.mubr.bf16.gmra.mrb[0].mxu0 %v2948
        %v3789 = vpop.f32.mrb[0].mxu0
        %v3790 = vadd.f32 %v3725, %v3789
        %v3791 = vpop.f32.mrb[0].mxu0
        %v3792 = vpop.f32.mrb[0].mxu0
        %v3793 = vadd.f32 %v3728, %v3792
        %v3794 = vpop.f32.mrb[0].mxu0
        %3795 = vdwg.mxu0
        %3796 = vmatprep.subr.bf16.mxu0 0
        %3797 = vmatpush1.bf16.msra.mxu0 %v3505
        %3798 = vmatprep.subr.bf16.mxu0 0
        %3799 = vmatpush1.bf16.msra.mxu0 %v3506
        %3800 = vmatprep.subr.bf16.mxu0 0
        %3801 = vmatpush1.bf16.msra.mxu0 %v3507
        %3802 = vmatprep.subr.bf16.mxu0 0
        %3803 = vmatpush1.bf16.msra.mxu0 %v3508
        %3804 = vmatprep.subr.bf16.mxu0 0
        %3805 = vmatpush1.bf16.msra.mxu0 %v3509
        %3806 = vmatprep.subr.bf16.mxu0 0
        %3807 = vmatpush1.bf16.msra.mxu0 %v3510
        %3808 = vmatprep.subr.bf16.mxu0 0
        %3809 = vmatpush1.bf16.msra.mxu0 %v3511
        %3810 = vmatprep.subr.bf16.mxu0 0
        %3811 = vmatpush1.bf16.msra.mxu0 %v3512
        %3812 = vmatprep.subr.bf16.mxu0 0
        %3813 = vmatpush1.bf16.msra.mxu0 %v3513
        %3814 = vmatprep.subr.bf16.mxu0 0
        %3815 = vmatpush1.bf16.msra.mxu0 %v3514
        %3816 = vmatprep.subr.bf16.mxu0 0
        %3817 = vmatpush1.bf16.msra.mxu0 %v3515
        %3818 = vmatprep.subr.bf16.mxu0 0
        %3819 = vmatpush1.bf16.msra.mxu0 %v3516
        %3820 = vmatprep.subr.bf16.mxu0 0
        %3821 = vmatpush1.bf16.msra.mxu0 %v3517
        %3822 = vmatprep.subr.bf16.mxu0 0
        %3823 = vmatpush1.bf16.msra.mxu0 %v3518
        %3824 = vmatprep.subr.bf16.mxu0 0
        %3825 = vmatpush1.bf16.msra.mxu0 %v3519
        %3826 = vmatprep.subr.bf16.mxu0 0
        %3827 = vmatpush1.bf16.msra.mxu0 %v3520
        %3828 = vmatprep.mubr.bf16.mxu0 %v3001
        %3829 = vmatmul.mubr.bf16.gmra.mrb[0].mxu0 %v2985
        %v3830 = vpop.f32.mrb[0].mxu0
        %v3831 = vadd.f32 %v3766, %v3830
        %v3832 = vpop.f32.mrb[0].mxu0
        %v3833 = vpop.f32.mrb[0].mxu0
        %v3834 = vadd.f32 %v3769, %v3833
        %v3835 = vpop.f32.mrb[0].mxu0
        %3836 = vmatprep.mubr.bf16.mxu0 %v3002
        %3837 = vmatmul.mubr.bf16.gmra.mrb[0].mxu0 %v2986
        %v3838 = vpop.f32.mrb[0].mxu0
        %v3839 = vadd.f32 %v3774, %v3838
        %v3840 = vpop.f32.mrb[0].mxu0
        %v3841 = vpop.f32.mrb[0].mxu0
        %v3842 = vadd.f32 %v3777, %v3841
        %v3843 = vpop.f32.mrb[0].mxu0
        %3844 = vmatprep.mubr.bf16.mxu0 %v3003
        %3845 = vmatmul.mubr.bf16.gmra.mrb[0].mxu0 %v2987
        %v3846 = vpop.f32.mrb[0].mxu0
        %v3847 = vadd.f32 %v3782, %v3846
        %v3848 = vpop.f32.mrb[0].mxu0
        %v3849 = vpop.f32.mrb[0].mxu0
        %v3850 = vadd.f32 %v3785, %v3849
        %v3851 = vpop.f32.mrb[0].mxu0
        %3852 = vmatprep.mubr.bf16.mxu0 %v3004
        %3853 = vmatmul.mubr.bf16.gmra.mrb[0].mxu0 %v2988
        %v3854 = vpop.f32.mrb[0].mxu0
        %v3855 = vadd.f32 %v3790, %v3854
        %v3856 = vpop.f32.mrb[0].mxu0
        %v3857 = vpop.f32.mrb[0].mxu0
        %v3858 = vadd.f32 %v3793, %v3857
        %v3859 = vpop.f32.mrb[0].mxu0
        %3860 = vdwg.mxu0
        %3861 = vmatprep.subr.bf16.mxu0 0
        %3862 = vmatpush1.bf16.msra.mxu0 %v3521
        %3863 = vmatprep.subr.bf16.mxu0 0
        %3864 = vmatpush1.bf16.msra.mxu0 %v3522
        %3865 = vmatprep.subr.bf16.mxu0 0
        %3866 = vmatpush1.bf16.msra.mxu0 %v3523
        %3867 = vmatprep.subr.bf16.mxu0 0
        %3868 = vmatpush1.bf16.msra.mxu0 %v3524
        %3869 = vmatprep.subr.bf16.mxu0 0
        %3870 = vmatpush1.bf16.msra.mxu0 %v3525
        %3871 = vmatprep.subr.bf16.mxu0 0
        %3872 = vmatpush1.bf16.msra.mxu0 %v3526
        %3873 = vmatprep.subr.bf16.mxu0 0
        %3874 = vmatpush1.bf16.msra.mxu0 %v3527
        %3875 = vmatprep.subr.bf16.mxu0 0
        %3876 = vmatpush1.bf16.msra.mxu0 %v3528
        %3877 = vmatprep.subr.bf16.mxu0 0
        %3878 = vmatpush1.bf16.msra.mxu0 0
        %3879 = vmatprep.subr.bf16.mxu0 0
        %3880 = vmatpush1.bf16.msra.mxu0 0
        %3881 = vmatprep.subr.bf16.mxu0 0
        %3882 = vmatpush1.bf16.msra.mxu0 0
        %3883 = vmatprep.subr.bf16.mxu0 0
        %3884 = vmatpush1.bf16.msra.mxu0 0
        %3885 = vmatprep.subr.bf16.mxu0 0
        %3886 = vmatpush1.bf16.msra.mxu0 0
        %3887 = vmatprep.subr.bf16.mxu0 0
        %3888 = vmatpush1.bf16.msra.mxu0 0
        %3889 = vmatprep.subr.bf16.mxu0 0
        %3890 = vmatpush1.bf16.msra.mxu0 0
        %3891 = vmatprep.subr.bf16.mxu0 0
        %3892 = vmatpush1.bf16.msra.mxu0 0
        %3893 = vmatprep.mubr.bf16.mxu0 0
        %3894 = vmatmul.mubr.bf16.gmra.mrb[0].mxu0 %v3017
        %v3895 = vpop.f32.mrb[0].mxu0
        %v3896 = vadd.f32 %v3831, %v3895
        %v3897 = vpop.f32.mrb[0].mxu0
        %v3898 = vpop.f32.mrb[0].mxu0
        %v3899 = vadd.f32 %v3834, %v3898
        %v3900 = vpop.f32.mrb[0].mxu0
        %3901 = vmatprep.mubr.bf16.mxu0 0
        %3902 = vmatmul.mubr.bf16.gmra.mrb[0].mxu0 %v3018
        %v3903 = vpop.f32.mrb[0].mxu0
        %v3904 = vadd.f32 %v3839, %v3903
        %v3905 = vpop.f32.mrb[0].mxu0
        %v3906 = vpop.f32.mrb[0].mxu0
        %v3907 = vadd.f32 %v3842, %v3906
        %v3908 = vpop.f32.mrb[0].mxu0
        %3909 = vmatprep.mubr.bf16.mxu0 0
        %3910 = vmatmul.mubr.bf16.gmra.mrb[0].mxu0 %v3019
        %v3911 = vpop.f32.mrb[0].mxu0
        %v3912 = vadd.f32 %v3847, %v3911
        %v3913 = vpop.f32.mrb[0].mxu0
        %v3914 = vpop.f32.mrb[0].mxu0
        %v3915 = vadd.f32 %v3850, %v3914
        %v3916 = vpop.f32.mrb[0].mxu0
        %3917 = vmatprep.mubr.bf16.mxu0 0
        %3918 = vmatmul.mubr.bf16.gmra.mrb[0].mxu0 %v3020
        %v3919 = vpop.f32.mrb[0].mxu0
        %v3920 = vadd.f32 %v3855, %v3919
        %v3921 = vpop.f32.mrb[0].mxu0
        %v3922 = vpop.f32.mrb[0].mxu0
        %v3923 = vadd.f32 %v3858, %v3922
        %v3924 = vpop.f32.mrb[0].mxu0
        %3925 = vdwg.mxu0
        %v3926 = vld [vmem:[%s6] sm:$0x1]
        %v3928 = vlaneseq
        %v3929 = vshrl.u32 %v3928, 7
        %v3930 = vsub.s32 0, %v3929
        %v3931 = vrot.slane %v3926, %v3930
        %v3933 = vmul.f32 %v3896, %v3931
        %v3934 = vmul.f32 %v3899, %v3931
        %v3935 = vmul.f32 %v3904, %v3931
        %v3936 = vmul.f32 %v3907, %v3931
        %v3937 = vmul.f32 %v3912, %v3931
        %v3938 = vmul.f32 %v3915, %v3931
        %v3939 = vmul.f32 %v3920, %v3931
        %v3940 = vmul.f32 %v3923, %v3931
        %v3941 = vld [vmem:[%s7] sm:$0x1]
        %v3943 = vlaneseq
        %v3944 = vshrl.u32 %v3943, 7
        %v3945 = vsub.s32 0, %v3944
        %v3946 = vrot.slane %v3941, %v3945
        %v3948 = vadd.f32 %v3933, %v3946
        %v3949 = vadd.f32 %v3934, %v3946
        %v3950 = vadd.f32 %v3935, %v3946
        %v3951 = vadd.f32 %v3936, %v3946
        %v3952 = vadd.f32 %v3937, %v3946
        %v3953 = vadd.f32 %v3938, %v3946
        %v3954 = vadd.f32 %v3939, %v3946
        %v3955 = vadd.f32 %v3940, %v3946
        %v3956 = vadd.f32 %v3948, %v2072
        %v3957 = vadd.f32 %v3949, %v2073
        %v3958 = vadd.f32 %v3950, %v2074
        %v3959 = vadd.f32 %v3951, %v2075
        %v3960 = vadd.f32 %v3952, %v2076
        %v3961 = vadd.f32 %v3953, %v2077
        %v3962 = vadd.f32 %v3954, %v2078
        %v3963 = vadd.f32 %v3955, %v2079
        %v3964 = vmax.f32 %v3956, 0.0
        %v3965 = vmax.f32 %v3957, 0.0
        %v3966 = vmax.f32 %v3958, 0.0
        %v3967 = vmax.f32 %v3959, 0.0
        %v3968 = vmax.f32 %v3960, 0.0
        %v3969 = vmax.f32 %v3961, 0.0
        %v3970 = vmax.f32 %v3962, 0.0
        %v3971 = vmax.f32 %v3963, 0.0
        %v3972 = vpack.c.bf16 %v3964, %v3964
        %v3973 = vpack.c.bf16 %v3965, %v3965
        %v3974 = vpack.c.bf16 %v3966, %v3966
        %v3975 = vpack.c.bf16 %v3967, %v3967
        %v3976 = vpack.c.bf16 %v3968, %v3968
        %v3977 = vpack.c.bf16 %v3969, %v3969
        %v3978 = vpack.c.bf16 %v3970, %v3970
        %v3979 = vpack.c.bf16 %v3971, %v3971
        %3980 = vst [vmem:[%s367] sm:$0xf] %v3972
        %3981 = vst [vmem:[%s367 + $0x4] sm:$0xf] %v3973
        %3982 = vst [vmem:[%s367 + $0x8] sm:$0xf] %v3974
        %3983 = vst [vmem:[%s367 + $0xc] sm:$0xf] %v3975
        %3984 = vst [vmem:[%s367 + $0x10] sm:$0xf] %v3976
        %3985 = vst [vmem:[%s367 + $0x14] sm:$0xf] %v3977
        %3986 = vst [vmem:[%s367 + $0x18] sm:$0xf] %v3978
        %3987 = vst [vmem:[%s367 + $0x1c] sm:$0xf] %v3979
        %s3988 = sand.u32 %s248, 1
        %s3989 = scalar_lea.sflag [#allocation5], %s3988
        %s3990 = sand.u32 %s248, 1
        %s3991 = smul.addr %s3990, 32
        %s3992 = scalar_lea.vmem [#allocation6], %s3991
        // Predicated region
        $region65: #{tpu_custom_call.1} parent=59 // pred_check
          %p3993 = pneg %p258
        $region66: #{tpu_custom_call.1} parent=59 // pred_check_branch
          %3995 = sbr.rel (%p3993) target = $region68
        $region67: #{tpu_custom_call.1} parent=59 // pred_region
          %s3997 = ssub.s32 512, 512
          %3998 = vsyncadd %s3989, %s3997
          %s3999 = smul.addr %s25, 8
          %s4000 = smul.addr %s3999, 64
          %s4001 = scalar_lea.hbm %s10, %s4000
          %s4002 = sshll.u32 %s3992, 4
          %s4003 = int_to_ptr.vmem [resolvable:$true] %s4002
          %4008 = dma.vmem_to_hbm [thread:$0]  %s4003, 512, %s4001, %s3989, 64, 64, 4
        $region68: #{tpu_custom_call.1} parent=59 // pred_fallthru
          _
      $region60: #{tpu_custom_call.1} parent=5 // pred_fallthru
        _
      %p4009 = scmp.le.s32.totalorder 2, %s20
      // Predicated region
      $region69: #{tpu_custom_call.1} parent=5 // pred_check
        %p4010 = pneg %p4009
      $region70: #{tpu_custom_call.1} parent=5 // pred_check_branch
        %4012 = sbr.rel (%p4010) target = $region72
      $region71: #{tpu_custom_call.1} parent=5 // pred_region
        %s4013 = ssub.s32 %s20, 2
        // Predicated region
        $region73: #{tpu_custom_call.1} parent=71 // pred_check
          %p4014 = pneg %p264
        $region74: #{tpu_custom_call.1} parent=71 // pred_check_branch
          %4016 = sbr.rel (%p4014) target = $region76
        $region75: #{tpu_custom_call.1} parent=71 // pred_region
          %s4017 = sand.u32 %s249, 1
          %s4018 = scalar_lea.sflag [#allocation5], %s4017
          %s4019 = sand.u32 %s249, 1
          %s4020 = smul.addr %s4019, 32
          %s4021 = scalar_lea.vmem [#allocation6], %s4020
          %4022 = dma.done %s4018, 512
        $region76: #{tpu_custom_call.1} parent=71 // pred_fallthru
          _
      $region72: #{tpu_custom_call.1} parent=5 // pred_fallthru
        _
    $region6: #{tpu_custom_call.1} parent=1 // loop_footer
      %s24 = sadd.s32 1, %s20
    $region7: #{tpu_custom_call.1} parent=1 // loop_footer_branch
      %19 = sbr.rel target = $region3
    $region8: #{tpu_custom_call.1} parent=1 // loop_exit
      _
    %4023 = vsyncpa [#allocation4], 1
    %s4024 = scalar_lea.sflag [#allocation4], 1
    %4025 = vsyncpa %s4024, 1
    %4026 = vsyncpa [#allocation5], 1
    %s4027 = scalar_lea.sflag [#allocation5], 1
    %4028 = vsyncpa %s4027, 1

</llo_original>
